<compile_context>
chip_gen: v5e
topology: v5e:2x2
jax: 0.10.0
libtpu: 0.0.40
codegen_flags: <defaults>
</compile_context>

<pallas_src>
import functools

import jax
import jax.numpy as jnp
from jax.experimental import pallas as pl
from jax.experimental.pallas import tpu as pltpu

MAX_POS = 512  # lucidrains Attention max_pos_emb


# ----------------------------- fused conformer-block kernel -----------------------------

def _block_kernel(
    x_ref, rel_ref, ln_g_ref, ln_b_ref,
    ff1_w1_ref, ff1_b1_ref, ff1_w2_ref, ff1_b2_ref,
    wqkv_ref, wo_ref, bo_ref,
    pw1_wa_ref, pw1_ba_ref, pw1_wg_ref, pw1_bg_ref,
    dw_w_ref, dw_b_ref, bn_scale_ref, bn_shift_ref,
    pw2_w_ref, pw2_b_ref,
    ff2_w1_ref, ff2_b1_ref, ff2_w2_ref, ff2_b2_ref,
    o_ref, *, heads, dim_head, ksize, seq_len, batch_tile,
):
    N, BT, H, Dh = seq_len, batch_tile, heads, dim_head
    D = H * Dh
    R = 2 * N - 1
    scale = float(Dh) ** -0.5
    f32, bf16 = jnp.float32, jnp.bfloat16

    def mm(a, w):
        # (m, k) f32 activation x (k, n) bf16 weight -> f32 accumulation on the MXU.
        return jax.lax.dot_general(a.astype(bf16), w, (((1,), (0,)), ((), ())),
                                   preferred_element_type=f32)

    def mm_t(a, b):
        # contract trailing dims: (m, d) x (n, d) -> (m, n); operands already bf16.
        return jax.lax.dot_general(a, b, (((1,), (1,)), ((), ())),
                                   preferred_element_type=f32)

    def layer_norm(v, idx):
        g = ln_g_ref[idx:idx + 1, :].astype(f32)
        b = ln_b_ref[idx:idx + 1, :].astype(f32)
        mu = jnp.mean(v, axis=-1, keepdims=True)
        var = jnp.mean(jnp.square(v - mu), axis=-1, keepdims=True)
        return (v - mu) * jax.lax.rsqrt(var + 1e-5) * g + b

    def swish(v):
        return v * (1.0 / (1.0 + jnp.exp(-v)))

    # Flattened token slab: all token-wise ops run on (BT*N, D).
    x = x_ref[...].astype(f32).reshape(BT * N, D)

    # ---- FeedForward #1 (half-step residual) ----
    h = layer_norm(x, 0)
    h = mm(h, ff1_w1_ref[...]) + ff1_b1_ref[...].astype(f32)
    h = swish(h)
    h = mm(h, ff1_w2_ref[...]) + ff1_b2_ref[...].astype(f32)
    x = x + 0.5 * h

    # ---- Multi-head self-attention (PreNorm, Shaw relative positions) ----
    h = layer_norm(x, 1)
    rel = rel_ref[...]                                  # (R, Dh) bf16, rows distance-REVERSED
    qkv = mm(h, wqkv_ref[...])                          # fused QKV projection: (BT*N, 3D)

    # Hoisted, loop-invariant skew machinery: row i needs a cyclic LEFT shift by (N-1-i),
    # decomposed into log2(N) conditional power-of-two shifts.
    n_bits = max(1, (N - 1).bit_length())
    row_full = jax.lax.broadcasted_iota(jnp.int32, (N, R), 0)
    sh_full = (N - 1) - row_full
    bit_masks = [((sh_full >> b) & 1) == 1 for b in range(n_bits)]

    def skew(qe):
        # qe[i, c] = q_i . rel[(N-1) - c]  ->  pos[i, j] = qe[i, j + (N-1-i)] = q_i . rel[i-j]
        acc = qe
        if N > 1:
            for b in range(n_bits):
                step = 1 << b
                shifted = jnp.concatenate([acc[:, step:], acc[:, :step]], axis=1)
                acc = jnp.where(bit_masks[b], shifted, acc)
        return acc[:, :N]

    sample_outs = []
    for s in range(BT):
        qkv_s = qkv[s * N:(s + 1) * N, :]
        head_outs = []
        for hh in range(H):
            lo = hh * Dh
            qh = (qkv_s[:, lo:lo + Dh] * scale).astype(bf16)       # scale folded into q
            kh = qkv_s[:, D + lo:D + lo + Dh].astype(bf16)
            vh = qkv_s[:, 2 * D + lo:2 * D + lo + Dh].astype(bf16)
            logits = mm_t(qh, kh) + skew(mm_t(qh, rel))            # content + positional
            m = jnp.max(logits, axis=-1, keepdims=True)
            e = jnp.exp(logits - m)
            l = jnp.sum(e, axis=-1, keepdims=True)
            p = e * pl.reciprocal(l, approx=True)                  # EUP, off the VALU path
            head_outs.append(mm(p, vh))                            # (N, Dh)
        sample_outs.append(jnp.concatenate(head_outs, axis=1))     # (N, D), head-major
    attn = sample_outs[0] if BT == 1 else jnp.concatenate(sample_outs, axis=0)
    x = x + mm(attn, wo_ref[...]) + bo_ref[...].astype(f32)        # ONE fused output proj

    # ---- Convolution module ----
    h = layer_norm(x, 2)
    a = mm(h, pw1_wa_ref[...]) + pw1_ba_ref[...].astype(f32)       # GLU "value"
    g = mm(h, pw1_wg_ref[...]) + pw1_bg_ref[...].astype(f32)       # GLU "gate"
    u = a * (1.0 / (1.0 + jnp.exp(-g)))                            # (BT*N, IC)
    IC = u.shape[-1]
    pad_l = ksize // 2
    pad_r = ksize - 1 - pad_l                                      # torch calc_same_padding
    dw_w = dw_w_ref[...].astype(f32)                               # (K, IC)
    conv_rows = []
    for s in range(BT):
        us = u[s * N:(s + 1) * N, :]
        parts = []
        if pad_l:
            parts.append(jnp.zeros((pad_l, IC), f32))
        parts.append(us)
        if pad_r:
            parts.append(jnp.zeros((pad_r, IC), f32))
        upad = jnp.concatenate(parts, axis=0) if len(parts) > 1 else us   # (N+K-1, IC)
        cs = upad[0:N, :] * dw_w[0:1, :]
        for k in range(1, ksize):
            cs = cs + upad[k:k + N, :] * dw_w[k:k + 1, :]          # O(N*IC) per tap, no MXU
        conv_rows.append(cs)
    conv = conv_rows[0] if BT == 1 else jnp.concatenate(conv_rows, axis=0)
    conv = conv + dw_b_ref[...].astype(f32)
    z = conv * bn_scale_ref[...].astype(f32) + bn_shift_ref[...].astype(f32)   # BN (eval)
    z = swish(z)
    x = x + mm(z, pw2_w_ref[...]) + pw2_b_ref[...].astype(f32)

    # ---- FeedForward #2 (half-step residual) ----
    h = layer_norm(x, 3)
    h = mm(h, ff2_w1_ref[...]) + ff2_b1_ref[...].astype(f32)
    h = swish(h)
    h = mm(h, ff2_w2_ref[...]) + ff2_b2_ref[...].astype(f32)
    x = x + 0.5 * h

    # ---- post norm + store ----
    x = layer_norm(x, 4)
    o_ref[...] = x.reshape(BT, N, D).astype(o_ref.dtype)


def _rep(arr):
    nd = arr.ndim
    return pl.BlockSpec(arr.shape, lambda b, nd=nd: (0,) * nd)


def conformer_block_forward(x, p, *, heads, dim_head, ksize, batch_tile=1):
    B, N, D = x.shape
    assert B % batch_tile == 0
    R = 2 * N - 1
    # Small, distance-REVERSED relative-position table gathered once in XLA from the raw
    # (2*MAX_POS+1, Dh) embedding; row c <-> distance (N-1-c).  No (N, N, Dh) tensor built.
    rr = jnp.arange(R)
    rel_rev = p["attn_rel_emb"][jnp.clip((N - 1) - rr, -MAX_POS, MAX_POS) + MAX_POS]
    rel_rev = rel_rev.astype(jnp.bfloat16)

    kern = functools.partial(_block_kernel, heads=heads, dim_head=dim_head,
                             ksize=ksize, seq_len=N, batch_tile=batch_tile)

    weights = [
        rel_rev, p["ln_g"], p["ln_b"],
        p["ff1_w1"], p["ff1_b1"], p["ff1_w2"], p["ff1_b2"],
        p["attn_wqkv"], p["attn_wo"], p["attn_bo"],
        p["conv_pw1_wa"], p["conv_pw1_ba"], p["conv_pw1_wg"], p["conv_pw1_bg"],
        p["conv_dw_w"], p["conv_dw_b"], p["conv_bn_scale"], p["conv_bn_shift"],
        p["conv_pw2_w"], p["conv_pw2_b"],
        p["ff2_w1"], p["ff2_b1"], p["ff2_w2"], p["ff2_b2"],
    ]
    in_specs = [pl.BlockSpec((batch_tile, N, D), lambda b: (b, 0, 0))]
    in_specs += [_rep(w) for w in weights]    # full-array blocks: weights stay VMEM-resident

    out = pl.pallas_call(
        kern,
        out_shape=jax.ShapeDtypeStruct((B, N, D), x.dtype),
        grid=(B // batch_tile,),              # >= 2 steps so both v7x TensorCores are used
        in_specs=in_specs,
        out_specs=pl.BlockSpec((batch_tile, N, D), lambda b: (b, 0, 0)),
        compiler_params=pltpu.CompilerParams(
            dimension_semantics=("parallel",),
            vmem_limit_bytes=48 * 1024 * 1024,   # above 16/32 MiB scoped defaults, < v7x 64 MiB
        ),
    )(x, *weights)
    return out, None


# ----------------------------- model glue -----------------------------

def sinusoidal_embedding(n_channels, dim):
    p = jnp.arange(n_channels, dtype=jnp.float32)[:, None]
    i = jnp.arange(dim, dtype=jnp.float32)[None, :]
    angle = p / jnp.power(10000.0, 2.0 * jnp.floor(i / 2.0) / dim)
    even = (jnp.arange(dim) % 2 == 0)[None, :]
    return jnp.where(even, jnp.sin(angle), jnp.cos(angle))  # (n_channels, dim)


def my_conformer_forward(x, params, *, heads, dim_head, ksize, batch_tile=1):
    """x: (B, T, emb) -> ((B, 2), None).  Mirrors MyConformer.forward (eval mode)."""
    B, T, D = x.shape
    x = x + params["pos_emb"][:T][None, :, :]
    cls = jnp.broadcast_to(params["class_token"][None, :, :], (B, 1, D))
    x = jnp.concatenate([cls, x], axis=1)                  # prepend class token
    for p in params["blocks"]:
        x, _ = conformer_block_forward(x, p, heads=heads, dim_head=dim_head,
                                       ksize=ksize, batch_tile=batch_tile)
    embedding = x[:, 0, :]
    # Classifier head left to XLA: a 2-wide lane output makes a dedicated pallas_call pure
    # launch overhead with masked partial stores (perf-review recommendation).
    out = embedding @ params["fc5_w"] + params["fc5_b"]
    return out, None


# ----------------------------- deterministic init -----------------------------

def _init_block(key, dim, heads, dim_head, ff_mult, exp_fac, ksize):
    inner_conv = dim * exp_fac
    ffd = dim * ff_mult
    ks = jax.random.split(key, 26)
    bf16 = jnp.bfloat16

    def w(k, shape, s=0.05):
        return (s * jax.random.normal(k, shape)).astype(jnp.float32)

    # per-head attention projections (no bias), pre-fused & pre-cast to bf16
    wq = w(ks[4], (heads, dim, dim_head))
    wk = w(ks[5], (heads, dim, dim_head))
    wv = w(ks[24], (heads, dim, dim_head))
    wo = w(ks[6], (heads, dim_head, dim))
    wq_full = jnp.concatenate([wq[h] for h in range(heads)], axis=1)   # head-major columns
    wk_full = jnp.concatenate([wk[h] for h in range(heads)], axis=1)
    wv_full = jnp.concatenate([wv[h] for h in range(heads)], axis=1)
    wo_full = jnp.concatenate([wo[h] for h in range(heads)], axis=0)   # head-major rows
    wqkv = jnp.concatenate([wq_full, wk_full, wv_full], axis=1)        # (dim, 3*dim)

    # BatchNorm1d (eval) running stats + affine, folded into scale/shift
    bn_g = 0.5 + jax.random.uniform(ks[20], (1, inner_conv), dtype=jnp.float32)
    bn_b = w(ks[21], (1, inner_conv))
    bn_mean = w(ks[22], (1, inner_conv), 0.1)
    bn_var = 0.5 + jax.random.uniform(ks[23], (1, inner_conv), dtype=jnp.float32)
    bn_scale = bn_g / jnp.sqrt(bn_var + 1e-5)
    bn_shift = bn_b - bn_mean * bn_scale

    ones = jnp.ones((1, dim), jnp.float32)
    zeros = jnp.zeros((1, dim), jnp.float32)
    return dict(
        # LayerNorm gammas / betas stacked in order [ff1, attn, conv, ff2, post]
        ln_g=jnp.concatenate([ones] * 5, axis=0),
        ln_b=jnp.concatenate([zeros] * 5, axis=0),
        ff1_w1=w(ks[0], (dim, ffd)).astype(bf16), ff1_b1=w(ks[1], (1, ffd)),
        ff1_w2=w(ks[2], (ffd, dim)).astype(bf16), ff1_b2=w(ks[3], (1, dim)),
        attn_wqkv=wqkv.astype(bf16),
        attn_wo=wo_full.astype(bf16), attn_bo=w(ks[7], (1, dim)),
        attn_rel_emb=w(ks[8], (2 * MAX_POS + 1, dim_head)),
        # GLU pointwise conv split into value / gate weights (lane-aligned, no slicing)
        conv_pw1_wa=w(ks[9], (dim, inner_conv)).astype(bf16), conv_pw1_ba=w(ks[10], (1, inner_conv)),
        conv_pw1_wg=w(ks[25], (dim, inner_conv)).astype(bf16), conv_pw1_bg=w(ks[19], (1, inner_conv)),
        conv_dw_w=w(ks[11], (ksize, inner_conv)), conv_dw_b=w(ks[12], (1, inner_conv)),
        conv_bn_scale=bn_scale, conv_bn_shift=bn_shift,
        conv_pw2_w=w(ks[13], (inner_conv, dim)).astype(bf16), conv_pw2_b=w(ks[14], (1, dim)),
        ff2_w1=w(ks[15], (dim, ffd)).astype(bf16), ff2_b1=w(ks[16], (1, ffd)),
        ff2_w2=w(ks[17], (ffd, dim)).astype(bf16), ff2_b2=w(ks[18], (1, dim)),
    )


def init_params(key, dim, heads, dim_head, ff_mult, exp_fac, ksize, n_enc, max_seq=64):
    k_cls, k_fcw, k_fcb, k_blocks = jax.random.split(key, 4)
    blocks = [
        _init_block(k, dim, heads, dim_head, ff_mult, exp_fac, ksize)
        for k in jax.random.split(k_blocks, n_enc)
    ]
    return dict(
        # reference builds a 10000-row table; only the first T rows are read, so a smaller
        # (identical) table is built here.
        pos_emb=sinusoidal_embedding(max_seq, dim),
        class_token=jax.random.uniform(k_cls, (1, dim), dtype=jnp.float32),
        fc5_w=(0.05 * jax.random.normal(k_fcw, (dim, 2))).astype(jnp.float32),
        fc5_b=(0.05 * jax.random.normal(k_fcb, (1, 2))).astype(jnp.float32),
        blocks=blocks,
    )


# ----------------------------- main -----------------------------

if __name__ == "__main__":
    # Module defaults: emb_size=128 (lane-dense), heads=4, ff_mult=4, exp_fac=2, K=16.
    EMB, HEADS, FFMULT, EXP_FAC, KSIZE, N_ENC = 128, 4, 4, 2, 16, 1
    DIM_HEAD = EMB // HEADS
    B, T = 2, 8

    key = jax.random.PRNGKey(0)
    kx, kp = jax.random.split(key)
    x = jax.random.normal(kx, (B, T, EMB), dtype=jnp.float32)
    params = init_params(kp, EMB, HEADS, DIM_HEAD, FFMULT, EXP_FAC, KSIZE, N_ENC)

    fwd = jax.jit(functools.partial(my_conformer_forward, heads=HEADS, dim_head=DIM_HEAD,
                                    ksize=KSIZE, batch_tile=1))
    out, _ = fwd(x, params)
    out = jax.block_until_ready(out)

    assert out.shape == (B, 2), out.shape
    assert bool(jnp.all(jnp.isfinite(out)))
    print("KERNEL_OK")
</pallas_src>

<mosaic_0001>
module attributes {stable_mosaic.version = 11 : i64} {
  func.func @_block_kernel(%arg0: i32, %arg1: memref<1x9x128xf32, #tpu.memory_space<vmem>>, %arg2: memref<17x32xbf16, #tpu.memory_space<vmem>>, %arg3: memref<5x128xf32, #tpu.memory_space<vmem>>, %arg4: memref<5x128xf32, #tpu.memory_space<vmem>>, %arg5: memref<128x512xbf16, #tpu.memory_space<vmem>>, %arg6: memref<1x512xf32, #tpu.memory_space<vmem>>, %arg7: memref<512x128xbf16, #tpu.memory_space<vmem>>, %arg8: memref<1x128xf32, #tpu.memory_space<vmem>>, %arg9: memref<128x384xbf16, #tpu.memory_space<vmem>>, %arg10: memref<128x128xbf16, #tpu.memory_space<vmem>>, %arg11: memref<1x128xf32, #tpu.memory_space<vmem>>, %arg12: memref<128x256xbf16, #tpu.memory_space<vmem>>, %arg13: memref<1x256xf32, #tpu.memory_space<vmem>>, %arg14: memref<128x256xbf16, #tpu.memory_space<vmem>>, %arg15: memref<1x256xf32, #tpu.memory_space<vmem>>, %arg16: memref<16x256xf32, #tpu.memory_space<vmem>>, %arg17: memref<1x256xf32, #tpu.memory_space<vmem>>, %arg18: memref<1x256xf32, #tpu.memory_space<vmem>>, %arg19: memref<1x256xf32, #tpu.memory_space<vmem>>, %arg20: memref<256x128xbf16, #tpu.memory_space<vmem>>, %arg21: memref<1x128xf32, #tpu.memory_space<vmem>>, %arg22: memref<128x512xbf16, #tpu.memory_space<vmem>>, %arg23: memref<1x512xf32, #tpu.memory_space<vmem>>, %arg24: memref<512x128xbf16, #tpu.memory_space<vmem>>, %arg25: memref<1x128xf32, #tpu.memory_space<vmem>>, %arg26: memref<1x9x128xf32, #tpu.memory_space<vmem>>) attributes {dimension_semantics = [#tpu.dimension_semantics<parallel>], iteration_bounds = array<i64: 2>, scalar_prefetch = 0 : i64, scratch_operands = 0 : i64, tpu.core_type = #tpu.core_type<tc>, window_params = [{transform_indices = @transform_0, window_bounds = array<i64: 1, 9, 128>}, {pipeline_mode = #tpu.pipeline_mode<synchronous>, transform_indices = @transform_1, window_bounds = array<i64: 17, 32>}, {pipeline_mode = #tpu.pipeline_mode<synchronous>, transform_indices = @transform_2, window_bounds = array<i64: 5, 128>}, {pipeline_mode = #tpu.pipeline_mode<synchronous>, transform_indices = @transform_3, window_bounds = array<i64: 5, 128>}, {pipeline_mode = #tpu.pipeline_mode<synchronous>, transform_indices = @transform_4, window_bounds = array<i64: 128, 512>}, {pipeline_mode = #tpu.pipeline_mode<synchronous>, transform_indices = @transform_5, window_bounds = array<i64: 1, 512>}, {pipeline_mode = #tpu.pipeline_mode<synchronous>, transform_indices = @transform_6, window_bounds = array<i64: 512, 128>}, {pipeline_mode = #tpu.pipeline_mode<synchronous>, transform_indices = @transform_7, window_bounds = array<i64: 1, 128>}, {pipeline_mode = #tpu.pipeline_mode<synchronous>, transform_indices = @transform_8, window_bounds = array<i64: 128, 384>}, {pipeline_mode = #tpu.pipeline_mode<synchronous>, transform_indices = @transform_9, window_bounds = array<i64: 128, 128>}, {pipeline_mode = #tpu.pipeline_mode<synchronous>, transform_indices = @transform_10, window_bounds = array<i64: 1, 128>}, {pipeline_mode = #tpu.pipeline_mode<synchronous>, transform_indices = @transform_11, window_bounds = array<i64: 128, 256>}, {pipeline_mode = #tpu.pipeline_mode<synchronous>, transform_indices = @transform_12, window_bounds = array<i64: 1, 256>}, {pipeline_mode = #tpu.pipeline_mode<synchronous>, transform_indices = @transform_13, window_bounds = array<i64: 128, 256>}, {pipeline_mode = #tpu.pipeline_mode<synchronous>, transform_indices = @transform_14, window_bounds = array<i64: 1, 256>}, {pipeline_mode = #tpu.pipeline_mode<synchronous>, transform_indices = @transform_15, window_bounds = array<i64: 16, 256>}, {pipeline_mode = #tpu.pipeline_mode<synchronous>, transform_indices = @transform_16, window_bounds = array<i64: 1, 256>}, {pipeline_mode = #tpu.pipeline_mode<synchronous>, transform_indices = @transform_17, window_bounds = array<i64: 1, 256>}, {pipeline_mode = #tpu.pipeline_mode<synchronous>, transform_indices = @transform_18, window_bounds = array<i64: 1, 256>}, {pipeline_mode = #tpu.pipeline_mode<synchronous>, transform_indices = @transform_19, window_bounds = array<i64: 256, 128>}, {pipeline_mode = #tpu.pipeline_mode<synchronous>, transform_indices = @transform_20, window_bounds = array<i64: 1, 128>}, {pipeline_mode = #tpu.pipeline_mode<synchronous>, transform_indices = @transform_21, window_bounds = array<i64: 128, 512>}, {pipeline_mode = #tpu.pipeline_mode<synchronous>, transform_indices = @transform_22, window_bounds = array<i64: 1, 512>}, {pipeline_mode = #tpu.pipeline_mode<synchronous>, transform_indices = @transform_23, window_bounds = array<i64: 512, 128>}, {pipeline_mode = #tpu.pipeline_mode<synchronous>, transform_indices = @transform_24, window_bounds = array<i64: 1, 128>}, {transform_indices = @transform_25, window_bounds = array<i64: 1, 9, 128>}]} {
    %c0 = arith.constant 0 : index
    %c0_0 = arith.constant 0 : index
    %c0_1 = arith.constant 0 : index
    %0 = vector.load %arg1[%c0, %c0_0, %c0_1] : memref<1x9x128xf32, #tpu.memory_space<vmem>>, vector<1x9x128xf32>
    %1 = vector.shape_cast %0 : vector<1x9x128xf32> to vector<9x128xf32>
    %c0_2 = arith.constant 0 : index
    %c0_3 = arith.constant 0 : index
    %2 = vector.load %arg3[%c0_2, %c0_3] : memref<5x128xf32, #tpu.memory_space<vmem>>, vector<1x128xf32>
    %c0_4 = arith.constant 0 : index
    %c0_5 = arith.constant 0 : index
    %3 = vector.load %arg4[%c0_4, %c0_5] : memref<5x128xf32, #tpu.memory_space<vmem>>, vector<1x128xf32>
    %cst = arith.constant dense<0.000000e+00> : vector<9xf32>
    %4 = vector.multi_reduction <add>, %1, %cst [1] : vector<9x128xf32> to vector<9xf32>
    %5 = vector.shape_cast %4 : vector<9xf32> to vector<9x1xf32>
    %cst_6 = arith.constant 1.280000e+02 : f32
    %6 = vector.broadcast %cst_6 : f32 to vector<9x1xf32>
    %7 = arith.divf %5, %6 : vector<9x1xf32>
    %8 = vector.broadcast %7 : vector<9x1xf32> to vector<9x128xf32>
    %9 = arith.subf %1, %8 : vector<9x128xf32>
    %10 = arith.mulf %9, %9 : vector<9x128xf32>
    %cst_7 = arith.constant dense<0.000000e+00> : vector<9xf32>
    %11 = vector.multi_reduction <add>, %10, %cst_7 [1] : vector<9x128xf32> to vector<9xf32>
    %12 = vector.shape_cast %11 : vector<9xf32> to vector<9x1xf32>
    %cst_8 = arith.constant 1.280000e+02 : f32
    %13 = vector.broadcast %cst_8 : f32 to vector<9x1xf32>
    %14 = arith.divf %12, %13 : vector<9x1xf32>
    %15 = vector.broadcast %7 : vector<9x1xf32> to vector<9x128xf32>
    %16 = arith.subf %1, %15 : vector<9x128xf32>
    %cst_9 = arith.constant 9.99999974E-6 : f32
    %17 = vector.broadcast %cst_9 : f32 to vector<9x1xf32>
    %18 = arith.addf %14, %17 : vector<9x1xf32>
    %19 = math.rsqrt %18 : vector<9x1xf32>
    %20 = vector.broadcast %19 : vector<9x1xf32> to vector<9x128xf32>
    %21 = arith.mulf %16, %20 : vector<9x128xf32>
    %22 = vector.broadcast %2 : vector<1x128xf32> to vector<9x128xf32>
    %23 = arith.mulf %21, %22 : vector<9x128xf32>
    %24 = vector.broadcast %3 : vector<1x128xf32> to vector<9x128xf32>
    %25 = arith.addf %23, %24 : vector<9x128xf32>
    %c0_10 = arith.constant 0 : index
    %c0_11 = arith.constant 0 : index
    %26 = vector.load %arg5[%c0_10, %c0_11] : memref<128x512xbf16, #tpu.memory_space<vmem>>, vector<128x512xbf16>
    %27 = arith.truncf %25 : vector<9x128xf32> to vector<9x128xbf16>
    %cst_12 = arith.constant dense<0.000000e+00> : vector<9x512xf32>
    %28 = tpu.matmul %27, %26, %cst_12 {dimension_numbers = #tpu.dot_dimension_numbers<[1], [0], [0], [1], [0, 0, 1, 1], [], []>} : vector<9x128xbf16>, vector<128x512xbf16>, vector<9x512xf32> -> vector<9x512xf32>
    %c0_13 = arith.constant 0 : index
    %c0_14 = arith.constant 0 : index
    %29 = vector.load %arg6[%c0_13, %c0_14] : memref<1x512xf32, #tpu.memory_space<vmem>>, vector<1x512xf32>
    %30 = vector.broadcast %29 : vector<1x512xf32> to vector<9x512xf32>
    %31 = arith.addf %28, %30 : vector<9x512xf32>
    %cst_15 = arith.constant 0.000000e+00 : f32
    %32 = vector.broadcast %cst_15 : f32 to vector<9x512xf32>
    %33 = arith.subf %32, %31 : vector<9x512xf32>
    %34 = math.exp %33 : vector<9x512xf32>
    %cst_16 = arith.constant 1.000000e+00 : f32
    %35 = vector.broadcast %cst_16 : f32 to vector<9x512xf32>
    %36 = arith.addf %35, %34 : vector<9x512xf32>
    %cst_17 = arith.constant 1.000000e+00 : f32
    %37 = vector.broadcast %cst_17 : f32 to vector<9x512xf32>
    %38 = arith.divf %37, %36 : vector<9x512xf32>
    %39 = arith.mulf %31, %38 : vector<9x512xf32>
    %c0_18 = arith.constant 0 : index
    %c0_19 = arith.constant 0 : index
    %40 = vector.load %arg7[%c0_18, %c0_19] : memref<512x128xbf16, #tpu.memory_space<vmem>>, vector<512x128xbf16>
    %41 = arith.truncf %39 : vector<9x512xf32> to vector<9x512xbf16>
    %cst_20 = arith.constant dense<0.000000e+00> : vector<9x128xf32>
    %42 = tpu.matmul %41, %40, %cst_20 {dimension_numbers = #tpu.dot_dimension_numbers<[1], [0], [0], [1], [0, 0, 1, 1], [], []>} : vector<9x512xbf16>, vector<512x128xbf16>, vector<9x128xf32> -> vector<9x128xf32>
    %c0_21 = arith.constant 0 : index
    %c0_22 = arith.constant 0 : index
    %43 = vector.load %arg8[%c0_21, %c0_22] : memref<1x128xf32, #tpu.memory_space<vmem>>, vector<1x128xf32>
    %44 = vector.broadcast %43 : vector<1x128xf32> to vector<9x128xf32>
    %45 = arith.addf %42, %44 : vector<9x128xf32>
    %cst_23 = arith.constant 5.000000e-01 : f32
    %46 = vector.broadcast %cst_23 : f32 to vector<9x128xf32>
    %47 = arith.mulf %46, %45 : vector<9x128xf32>
    %48 = arith.addf %1, %47 : vector<9x128xf32>
    %c1 = arith.constant 1 : index
    %c0_24 = arith.constant 0 : index
    %49 = vector.load %arg3[%c1, %c0_24] : memref<5x128xf32, #tpu.memory_space<vmem>>, vector<1x128xf32>
    %c1_25 = arith.constant 1 : index
    %c0_26 = arith.constant 0 : index
    %50 = vector.load %arg4[%c1_25, %c0_26] : memref<5x128xf32, #tpu.memory_space<vmem>>, vector<1x128xf32>
    %cst_27 = arith.constant dense<0.000000e+00> : vector<9xf32>
    %51 = vector.multi_reduction <add>, %48, %cst_27 [1] : vector<9x128xf32> to vector<9xf32>
    %52 = vector.shape_cast %51 : vector<9xf32> to vector<9x1xf32>
    %cst_28 = arith.constant 1.280000e+02 : f32
    %53 = vector.broadcast %cst_28 : f32 to vector<9x1xf32>
    %54 = arith.divf %52, %53 : vector<9x1xf32>
    %55 = vector.broadcast %54 : vector<9x1xf32> to vector<9x128xf32>
    %56 = arith.subf %48, %55 : vector<9x128xf32>
    %57 = arith.mulf %56, %56 : vector<9x128xf32>
    %cst_29 = arith.constant dense<0.000000e+00> : vector<9xf32>
    %58 = vector.multi_reduction <add>, %57, %cst_29 [1] : vector<9x128xf32> to vector<9xf32>
    %59 = vector.shape_cast %58 : vector<9xf32> to vector<9x1xf32>
    %cst_30 = arith.constant 1.280000e+02 : f32
    %60 = vector.broadcast %cst_30 : f32 to vector<9x1xf32>
    %61 = arith.divf %59, %60 : vector<9x1xf32>
    %62 = vector.broadcast %54 : vector<9x1xf32> to vector<9x128xf32>
    %63 = arith.subf %48, %62 : vector<9x128xf32>
    %cst_31 = arith.constant 9.99999974E-6 : f32
    %64 = vector.broadcast %cst_31 : f32 to vector<9x1xf32>
    %65 = arith.addf %61, %64 : vector<9x1xf32>
    %66 = math.rsqrt %65 : vector<9x1xf32>
    %67 = vector.broadcast %66 : vector<9x1xf32> to vector<9x128xf32>
    %68 = arith.mulf %63, %67 : vector<9x128xf32>
    %69 = vector.broadcast %49 : vector<1x128xf32> to vector<9x128xf32>
    %70 = arith.mulf %68, %69 : vector<9x128xf32>
    %71 = vector.broadcast %50 : vector<1x128xf32> to vector<9x128xf32>
    %72 = arith.addf %70, %71 : vector<9x128xf32>
    %c0_32 = arith.constant 0 : index
    %c0_33 = arith.constant 0 : index
    %73 = vector.load %arg2[%c0_32, %c0_33] : memref<17x32xbf16, #tpu.memory_space<vmem>>, vector<17x32xbf16>
    %c0_34 = arith.constant 0 : index
    %c0_35 = arith.constant 0 : index
    %74 = vector.load %arg9[%c0_34, %c0_35] : memref<128x384xbf16, #tpu.memory_space<vmem>>, vector<128x384xbf16>
    %75 = arith.truncf %72 : vector<9x128xf32> to vector<9x128xbf16>
    %cst_36 = arith.constant dense<0.000000e+00> : vector<9x384xf32>
    %76 = tpu.matmul %75, %74, %cst_36 {dimension_numbers = #tpu.dot_dimension_numbers<[1], [0], [0], [1], [0, 0, 1, 1], [], []>} : vector<9x128xbf16>, vector<128x384xbf16>, vector<9x384xf32> -> vector<9x384xf32>
    %77 = tpu.iota {dimensions = array<i32: 0>} : vector<9x17xi32>
    %c8_i32 = arith.constant 8 : i32
    %78 = vector.broadcast %c8_i32 : i32 to vector<9x17xi32>
    %79 = arith.subi %78, %77 : vector<9x17xi32>
    %c0_i32 = arith.constant 0 : i32
    %80 = vector.broadcast %c0_i32 : i32 to vector<9x17xi32>
    %81 = arith.shrsi %79, %80 : vector<9x17xi32>
    %c1_i32 = arith.constant 1 : i32
    %82 = vector.broadcast %c1_i32 : i32 to vector<9x17xi32>
    %83 = arith.andi %81, %82 : vector<9x17xi32>
    %c1_i32_37 = arith.constant 1 : i32
    %84 = vector.broadcast %c1_i32_37 : i32 to vector<9x17xi32>
    %85 = arith.cmpi eq, %83, %84 : vector<9x17xi32>
    %c1_i32_38 = arith.constant 1 : i32
    %86 = vector.broadcast %c1_i32_38 : i32 to vector<9x17xi32>
    %87 = arith.shrsi %79, %86 : vector<9x17xi32>
    %c1_i32_39 = arith.constant 1 : i32
    %88 = vector.broadcast %c1_i32_39 : i32 to vector<9x17xi32>
    %89 = arith.andi %87, %88 : vector<9x17xi32>
    %c1_i32_40 = arith.constant 1 : i32
    %90 = vector.broadcast %c1_i32_40 : i32 to vector<9x17xi32>
    %91 = arith.cmpi eq, %89, %90 : vector<9x17xi32>
    %c2_i32 = arith.constant 2 : i32
    %92 = vector.broadcast %c2_i32 : i32 to vector<9x17xi32>
    %93 = arith.shrsi %79, %92 : vector<9x17xi32>
    %c1_i32_41 = arith.constant 1 : i32
    %94 = vector.broadcast %c1_i32_41 : i32 to vector<9x17xi32>
    %95 = arith.andi %93, %94 : vector<9x17xi32>
    %c1_i32_42 = arith.constant 1 : i32
    %96 = vector.broadcast %c1_i32_42 : i32 to vector<9x17xi32>
    %97 = arith.cmpi eq, %95, %96 : vector<9x17xi32>
    %c3_i32 = arith.constant 3 : i32
    %98 = vector.broadcast %c3_i32 : i32 to vector<9x17xi32>
    %99 = arith.shrsi %79, %98 : vector<9x17xi32>
    %c1_i32_43 = arith.constant 1 : i32
    %100 = vector.broadcast %c1_i32_43 : i32 to vector<9x17xi32>
    %101 = arith.andi %99, %100 : vector<9x17xi32>
    %c1_i32_44 = arith.constant 1 : i32
    %102 = vector.broadcast %c1_i32_44 : i32 to vector<9x17xi32>
    %103 = arith.cmpi eq, %101, %102 : vector<9x17xi32>
    %104 = vector.extract_strided_slice %76 {offsets = [0, 0], sizes = [9, 32], strides = [1, 1]} : vector<9x384xf32> to vector<9x32xf32>
    %cst_45 = arith.constant 0.176776692 : f32
    %105 = vector.broadcast %cst_45 : f32 to vector<9x32xf32>
    %106 = arith.mulf %104, %105 : vector<9x32xf32>
    %107 = arith.truncf %106 : vector<9x32xf32> to vector<9x32xbf16>
    %108 = vector.extract_strided_slice %76 {offsets = [0, 128], sizes = [9, 32], strides = [1, 1]} : vector<9x384xf32> to vector<9x32xf32>
    %109 = arith.truncf %108 : vector<9x32xf32> to vector<9x32xbf16>
    %110 = vector.extract_strided_slice %76 {offsets = [0, 256], sizes = [9, 32], strides = [1, 1]} : vector<9x384xf32> to vector<9x32xf32>
    %111 = arith.truncf %110 : vector<9x32xf32> to vector<9x32xbf16>
    %cst_46 = arith.constant dense<0.000000e+00> : vector<9x9xf32>
    %112 = tpu.matmul %107, %109, %cst_46 {dimension_numbers = #tpu.dot_dimension_numbers<[1], [1], [0], [0], [0, 0, 1, 0], [], []>} : vector<9x32xbf16>, vector<9x32xbf16>, vector<9x9xf32> -> vector<9x9xf32>
    %cst_47 = arith.constant dense<0.000000e+00> : vector<9x17xf32>
    %113 = tpu.matmul %107, %73, %cst_47 {dimension_numbers = #tpu.dot_dimension_numbers<[1], [1], [0], [0], [0, 0, 1, 0], [], []>} : vector<9x32xbf16>, vector<17x32xbf16>, vector<9x17xf32> -> vector<9x17xf32>
    %114 = vector.extract_strided_slice %113 {offsets = [0, 1], sizes = [9, 16], strides = [1, 1]} : vector<9x17xf32> to vector<9x16xf32>
    %115 = vector.extract_strided_slice %113 {offsets = [0, 0], sizes = [9, 1], strides = [1, 1]} : vector<9x17xf32> to vector<9x1xf32>
    %116 = tpu.concatenate %114, %115 in 1 : vector<9x16xf32>, vector<9x1xf32> -> vector<9x17xf32>
    %117 = arith.select %85, %116, %113 : vector<9x17xi1>, vector<9x17xf32>
    %118 = vector.extract_strided_slice %117 {offsets = [0, 2], sizes = [9, 15], strides = [1, 1]} : vector<9x17xf32> to vector<9x15xf32>
    %119 = vector.extract_strided_slice %117 {offsets = [0, 0], sizes = [9, 2], strides = [1, 1]} : vector<9x17xf32> to vector<9x2xf32>
    %120 = tpu.concatenate %118, %119 in 1 : vector<9x15xf32>, vector<9x2xf32> -> vector<9x17xf32>
    %121 = arith.select %91, %120, %117 : vector<9x17xi1>, vector<9x17xf32>
    %122 = vector.extract_strided_slice %121 {offsets = [0, 4], sizes = [9, 13], strides = [1, 1]} : vector<9x17xf32> to vector<9x13xf32>
    %123 = vector.extract_strided_slice %121 {offsets = [0, 0], sizes = [9, 4], strides = [1, 1]} : vector<9x17xf32> to vector<9x4xf32>
    %124 = tpu.concatenate %122, %123 in 1 : vector<9x13xf32>, vector<9x4xf32> -> vector<9x17xf32>
    %125 = arith.select %97, %124, %121 : vector<9x17xi1>, vector<9x17xf32>
    %126 = vector.extract_strided_slice %125 {offsets = [0, 8], sizes = [9, 9], strides = [1, 1]} : vector<9x17xf32> to vector<9x9xf32>
    %127 = vector.extract_strided_slice %125 {offsets = [0, 0], sizes = [9, 8], strides = [1, 1]} : vector<9x17xf32> to vector<9x8xf32>
    %128 = tpu.concatenate %126, %127 in 1 : vector<9x9xf32>, vector<9x8xf32> -> vector<9x17xf32>
    %129 = arith.select %103, %128, %125 : vector<9x17xi1>, vector<9x17xf32>
    %130 = vector.extract_strided_slice %129 {offsets = [0, 0], sizes = [9, 9], strides = [1, 1]} : vector<9x17xf32> to vector<9x9xf32>
    %131 = arith.addf %112, %130 : vector<9x9xf32>
    %cst_48 = arith.constant dense<0xFF800000> : vector<9xf32>
    %132 = vector.multi_reduction <maximumf>, %131, %cst_48 [1] : vector<9x9xf32> to vector<9xf32>
    %133 = vector.shape_cast %132 : vector<9xf32> to vector<9x1xf32>
    %134 = vector.broadcast %133 : vector<9x1xf32> to vector<9x9xf32>
    %135 = arith.subf %131, %134 : vector<9x9xf32>
    %136 = math.exp %135 : vector<9x9xf32>
    %cst_49 = arith.constant dense<0.000000e+00> : vector<9xf32>
    %137 = vector.multi_reduction <add>, %136, %cst_49 [1] : vector<9x9xf32> to vector<9xf32>
    %138 = vector.shape_cast %137 : vector<9xf32> to vector<9x1xf32>
    %139 = tpu.reciprocal %138 {approx = true} : vector<9x1xf32> -> vector<9x1xf32>
    %140 = vector.broadcast %139 : vector<9x1xf32> to vector<9x9xf32>
    %141 = arith.mulf %136, %140 : vector<9x9xf32>
    %142 = arith.truncf %141 : vector<9x9xf32> to vector<9x9xbf16>
    %cst_50 = arith.constant dense<0.000000e+00> : vector<9x32xf32>
    %143 = tpu.matmul %142, %111, %cst_50 {dimension_numbers = #tpu.dot_dimension_numbers<[1], [0], [0], [1], [0, 0, 1, 1], [], []>} : vector<9x9xbf16>, vector<9x32xbf16>, vector<9x32xf32> -> vector<9x32xf32>
    %144 = vector.extract_strided_slice %76 {offsets = [0, 32], sizes = [9, 32], strides = [1, 1]} : vector<9x384xf32> to vector<9x32xf32>
    %cst_51 = arith.constant 0.176776692 : f32
    %145 = vector.broadcast %cst_51 : f32 to vector<9x32xf32>
    %146 = arith.mulf %144, %145 : vector<9x32xf32>
    %147 = arith.truncf %146 : vector<9x32xf32> to vector<9x32xbf16>
    %148 = vector.extract_strided_slice %76 {offsets = [0, 160], sizes = [9, 32], strides = [1, 1]} : vector<9x384xf32> to vector<9x32xf32>
    %149 = arith.truncf %148 : vector<9x32xf32> to vector<9x32xbf16>
    %150 = vector.extract_strided_slice %76 {offsets = [0, 288], sizes = [9, 32], strides = [1, 1]} : vector<9x384xf32> to vector<9x32xf32>
    %151 = arith.truncf %150 : vector<9x32xf32> to vector<9x32xbf16>
    %cst_52 = arith.constant dense<0.000000e+00> : vector<9x9xf32>
    %152 = tpu.matmul %147, %149, %cst_52 {dimension_numbers = #tpu.dot_dimension_numbers<[1], [1], [0], [0], [0, 0, 1, 0], [], []>} : vector<9x32xbf16>, vector<9x32xbf16>, vector<9x9xf32> -> vector<9x9xf32>
    %cst_53 = arith.constant dense<0.000000e+00> : vector<9x17xf32>
    %153 = tpu.matmul %147, %73, %cst_53 {dimension_numbers = #tpu.dot_dimension_numbers<[1], [1], [0], [0], [0, 0, 1, 0], [], []>} : vector<9x32xbf16>, vector<17x32xbf16>, vector<9x17xf32> -> vector<9x17xf32>
    %154 = vector.extract_strided_slice %153 {offsets = [0, 1], sizes = [9, 16], strides = [1, 1]} : vector<9x17xf32> to vector<9x16xf32>
    %155 = vector.extract_strided_slice %153 {offsets = [0, 0], sizes = [9, 1], strides = [1, 1]} : vector<9x17xf32> to vector<9x1xf32>
    %156 = tpu.concatenate %154, %155 in 1 : vector<9x16xf32>, vector<9x1xf32> -> vector<9x17xf32>
    %157 = arith.select %85, %156, %153 : vector<9x17xi1>, vector<9x17xf32>
    %158 = vector.extract_strided_slice %157 {offsets = [0, 2], sizes = [9, 15], strides = [1, 1]} : vector<9x17xf32> to vector<9x15xf32>
    %159 = vector.extract_strided_slice %157 {offsets = [0, 0], sizes = [9, 2], strides = [1, 1]} : vector<9x17xf32> to vector<9x2xf32>
    %160 = tpu.concatenate %158, %159 in 1 : vector<9x15xf32>, vector<9x2xf32> -> vector<9x17xf32>
    %161 = arith.select %91, %160, %157 : vector<9x17xi1>, vector<9x17xf32>
    %162 = vector.extract_strided_slice %161 {offsets = [0, 4], sizes = [9, 13], strides = [1, 1]} : vector<9x17xf32> to vector<9x13xf32>
    %163 = vector.extract_strided_slice %161 {offsets = [0, 0], sizes = [9, 4], strides = [1, 1]} : vector<9x17xf32> to vector<9x4xf32>
    %164 = tpu.concatenate %162, %163 in 1 : vector<9x13xf32>, vector<9x4xf32> -> vector<9x17xf32>
    %165 = arith.select %97, %164, %161 : vector<9x17xi1>, vector<9x17xf32>
    %166 = vector.extract_strided_slice %165 {offsets = [0, 8], sizes = [9, 9], strides = [1, 1]} : vector<9x17xf32> to vector<9x9xf32>
    %167 = vector.extract_strided_slice %165 {offsets = [0, 0], sizes = [9, 8], strides = [1, 1]} : vector<9x17xf32> to vector<9x8xf32>
    %168 = tpu.concatenate %166, %167 in 1 : vector<9x9xf32>, vector<9x8xf32> -> vector<9x17xf32>
    %169 = arith.select %103, %168, %165 : vector<9x17xi1>, vector<9x17xf32>
    %170 = vector.extract_strided_slice %169 {offsets = [0, 0], sizes = [9, 9], strides = [1, 1]} : vector<9x17xf32> to vector<9x9xf32>
    %171 = arith.addf %152, %170 : vector<9x9xf32>
    %cst_54 = arith.constant dense<0xFF800000> : vector<9xf32>
    %172 = vector.multi_reduction <maximumf>, %171, %cst_54 [1] : vector<9x9xf32> to vector<9xf32>
    %173 = vector.shape_cast %172 : vector<9xf32> to vector<9x1xf32>
    %174 = vector.broadcast %173 : vector<9x1xf32> to vector<9x9xf32>
    %175 = arith.subf %171, %174 : vector<9x9xf32>
    %176 = math.exp %175 : vector<9x9xf32>
    %cst_55 = arith.constant dense<0.000000e+00> : vector<9xf32>
    %177 = vector.multi_reduction <add>, %176, %cst_55 [1] : vector<9x9xf32> to vector<9xf32>
    %178 = vector.shape_cast %177 : vector<9xf32> to vector<9x1xf32>
    %179 = tpu.reciprocal %178 {approx = true} : vector<9x1xf32> -> vector<9x1xf32>
    %180 = vector.broadcast %179 : vector<9x1xf32> to vector<9x9xf32>
    %181 = arith.mulf %176, %180 : vector<9x9xf32>
    %182 = arith.truncf %181 : vector<9x9xf32> to vector<9x9xbf16>
    %cst_56 = arith.constant dense<0.000000e+00> : vector<9x32xf32>
    %183 = tpu.matmul %182, %151, %cst_56 {dimension_numbers = #tpu.dot_dimension_numbers<[1], [0], [0], [1], [0, 0, 1, 1], [], []>} : vector<9x9xbf16>, vector<9x32xbf16>, vector<9x32xf32> -> vector<9x32xf32>
    %184 = vector.extract_strided_slice %76 {offsets = [0, 64], sizes = [9, 32], strides = [1, 1]} : vector<9x384xf32> to vector<9x32xf32>
    %cst_57 = arith.constant 0.176776692 : f32
    %185 = vector.broadcast %cst_57 : f32 to vector<9x32xf32>
    %186 = arith.mulf %184, %185 : vector<9x32xf32>
    %187 = arith.truncf %186 : vector<9x32xf32> to vector<9x32xbf16>
    %188 = vector.extract_strided_slice %76 {offsets = [0, 192], sizes = [9, 32], strides = [1, 1]} : vector<9x384xf32> to vector<9x32xf32>
    %189 = arith.truncf %188 : vector<9x32xf32> to vector<9x32xbf16>
    %190 = vector.extract_strided_slice %76 {offsets = [0, 320], sizes = [9, 32], strides = [1, 1]} : vector<9x384xf32> to vector<9x32xf32>
    %191 = arith.truncf %190 : vector<9x32xf32> to vector<9x32xbf16>
    %cst_58 = arith.constant dense<0.000000e+00> : vector<9x9xf32>
    %192 = tpu.matmul %187, %189, %cst_58 {dimension_numbers = #tpu.dot_dimension_numbers<[1], [1], [0], [0], [0, 0, 1, 0], [], []>} : vector<9x32xbf16>, vector<9x32xbf16>, vector<9x9xf32> -> vector<9x9xf32>
    %cst_59 = arith.constant dense<0.000000e+00> : vector<9x17xf32>
    %193 = tpu.matmul %187, %73, %cst_59 {dimension_numbers = #tpu.dot_dimension_numbers<[1], [1], [0], [0], [0, 0, 1, 0], [], []>} : vector<9x32xbf16>, vector<17x32xbf16>, vector<9x17xf32> -> vector<9x17xf32>
    %194 = vector.extract_strided_slice %193 {offsets = [0, 1], sizes = [9, 16], strides = [1, 1]} : vector<9x17xf32> to vector<9x16xf32>
    %195 = vector.extract_strided_slice %193 {offsets = [0, 0], sizes = [9, 1], strides = [1, 1]} : vector<9x17xf32> to vector<9x1xf32>
    %196 = tpu.concatenate %194, %195 in 1 : vector<9x16xf32>, vector<9x1xf32> -> vector<9x17xf32>
    %197 = arith.select %85, %196, %193 : vector<9x17xi1>, vector<9x17xf32>
    %198 = vector.extract_strided_slice %197 {offsets = [0, 2], sizes = [9, 15], strides = [1, 1]} : vector<9x17xf32> to vector<9x15xf32>
    %199 = vector.extract_strided_slice %197 {offsets = [0, 0], sizes = [9, 2], strides = [1, 1]} : vector<9x17xf32> to vector<9x2xf32>
    %200 = tpu.concatenate %198, %199 in 1 : vector<9x15xf32>, vector<9x2xf32> -> vector<9x17xf32>
    %201 = arith.select %91, %200, %197 : vector<9x17xi1>, vector<9x17xf32>
    %202 = vector.extract_strided_slice %201 {offsets = [0, 4], sizes = [9, 13], strides = [1, 1]} : vector<9x17xf32> to vector<9x13xf32>
    %203 = vector.extract_strided_slice %201 {offsets = [0, 0], sizes = [9, 4], strides = [1, 1]} : vector<9x17xf32> to vector<9x4xf32>
    %204 = tpu.concatenate %202, %203 in 1 : vector<9x13xf32>, vector<9x4xf32> -> vector<9x17xf32>
    %205 = arith.select %97, %204, %201 : vector<9x17xi1>, vector<9x17xf32>
    %206 = vector.extract_strided_slice %205 {offsets = [0, 8], sizes = [9, 9], strides = [1, 1]} : vector<9x17xf32> to vector<9x9xf32>
    %207 = vector.extract_strided_slice %205 {offsets = [0, 0], sizes = [9, 8], strides = [1, 1]} : vector<9x17xf32> to vector<9x8xf32>
    %208 = tpu.concatenate %206, %207 in 1 : vector<9x9xf32>, vector<9x8xf32> -> vector<9x17xf32>
    %209 = arith.select %103, %208, %205 : vector<9x17xi1>, vector<9x17xf32>
    %210 = vector.extract_strided_slice %209 {offsets = [0, 0], sizes = [9, 9], strides = [1, 1]} : vector<9x17xf32> to vector<9x9xf32>
    %211 = arith.addf %192, %210 : vector<9x9xf32>
    %cst_60 = arith.constant dense<0xFF800000> : vector<9xf32>
    %212 = vector.multi_reduction <maximumf>, %211, %cst_60 [1] : vector<9x9xf32> to vector<9xf32>
    %213 = vector.shape_cast %212 : vector<9xf32> to vector<9x1xf32>
    %214 = vector.broadcast %213 : vector<9x1xf32> to vector<9x9xf32>
    %215 = arith.subf %211, %214 : vector<9x9xf32>
    %216 = math.exp %215 : vector<9x9xf32>
    %cst_61 = arith.constant dense<0.000000e+00> : vector<9xf32>
    %217 = vector.multi_reduction <add>, %216, %cst_61 [1] : vector<9x9xf32> to vector<9xf32>
    %218 = vector.shape_cast %217 : vector<9xf32> to vector<9x1xf32>
    %219 = tpu.reciprocal %218 {approx = true} : vector<9x1xf32> -> vector<9x1xf32>
    %220 = vector.broadcast %219 : vector<9x1xf32> to vector<9x9xf32>
    %221 = arith.mulf %216, %220 : vector<9x9xf32>
    %222 = arith.truncf %221 : vector<9x9xf32> to vector<9x9xbf16>
    %cst_62 = arith.constant dense<0.000000e+00> : vector<9x32xf32>
    %223 = tpu.matmul %222, %191, %cst_62 {dimension_numbers = #tpu.dot_dimension_numbers<[1], [0], [0], [1], [0, 0, 1, 1], [], []>} : vector<9x9xbf16>, vector<9x32xbf16>, vector<9x32xf32> -> vector<9x32xf32>
    %224 = vector.extract_strided_slice %76 {offsets = [0, 96], sizes = [9, 32], strides = [1, 1]} : vector<9x384xf32> to vector<9x32xf32>
    %cst_63 = arith.constant 0.176776692 : f32
    %225 = vector.broadcast %cst_63 : f32 to vector<9x32xf32>
    %226 = arith.mulf %224, %225 : vector<9x32xf32>
    %227 = arith.truncf %226 : vector<9x32xf32> to vector<9x32xbf16>
    %228 = vector.extract_strided_slice %76 {offsets = [0, 224], sizes = [9, 32], strides = [1, 1]} : vector<9x384xf32> to vector<9x32xf32>
    %229 = arith.truncf %228 : vector<9x32xf32> to vector<9x32xbf16>
    %230 = vector.extract_strided_slice %76 {offsets = [0, 352], sizes = [9, 32], strides = [1, 1]} : vector<9x384xf32> to vector<9x32xf32>
    %231 = arith.truncf %230 : vector<9x32xf32> to vector<9x32xbf16>
    %cst_64 = arith.constant dense<0.000000e+00> : vector<9x9xf32>
    %232 = tpu.matmul %227, %229, %cst_64 {dimension_numbers = #tpu.dot_dimension_numbers<[1], [1], [0], [0], [0, 0, 1, 0], [], []>} : vector<9x32xbf16>, vector<9x32xbf16>, vector<9x9xf32> -> vector<9x9xf32>
    %cst_65 = arith.constant dense<0.000000e+00> : vector<9x17xf32>
    %233 = tpu.matmul %227, %73, %cst_65 {dimension_numbers = #tpu.dot_dimension_numbers<[1], [1], [0], [0], [0, 0, 1, 0], [], []>} : vector<9x32xbf16>, vector<17x32xbf16>, vector<9x17xf32> -> vector<9x17xf32>
    %234 = vector.extract_strided_slice %233 {offsets = [0, 1], sizes = [9, 16], strides = [1, 1]} : vector<9x17xf32> to vector<9x16xf32>
    %235 = vector.extract_strided_slice %233 {offsets = [0, 0], sizes = [9, 1], strides = [1, 1]} : vector<9x17xf32> to vector<9x1xf32>
    %236 = tpu.concatenate %234, %235 in 1 : vector<9x16xf32>, vector<9x1xf32> -> vector<9x17xf32>
    %237 = arith.select %85, %236, %233 : vector<9x17xi1>, vector<9x17xf32>
    %238 = vector.extract_strided_slice %237 {offsets = [0, 2], sizes = [9, 15], strides = [1, 1]} : vector<9x17xf32> to vector<9x15xf32>
    %239 = vector.extract_strided_slice %237 {offsets = [0, 0], sizes = [9, 2], strides = [1, 1]} : vector<9x17xf32> to vector<9x2xf32>
    %240 = tpu.concatenate %238, %239 in 1 : vector<9x15xf32>, vector<9x2xf32> -> vector<9x17xf32>
    %241 = arith.select %91, %240, %237 : vector<9x17xi1>, vector<9x17xf32>
    %242 = vector.extract_strided_slice %241 {offsets = [0, 4], sizes = [9, 13], strides = [1, 1]} : vector<9x17xf32> to vector<9x13xf32>
    %243 = vector.extract_strided_slice %241 {offsets = [0, 0], sizes = [9, 4], strides = [1, 1]} : vector<9x17xf32> to vector<9x4xf32>
    %244 = tpu.concatenate %242, %243 in 1 : vector<9x13xf32>, vector<9x4xf32> -> vector<9x17xf32>
    %245 = arith.select %97, %244, %241 : vector<9x17xi1>, vector<9x17xf32>
    %246 = vector.extract_strided_slice %245 {offsets = [0, 8], sizes = [9, 9], strides = [1, 1]} : vector<9x17xf32> to vector<9x9xf32>
    %247 = vector.extract_strided_slice %245 {offsets = [0, 0], sizes = [9, 8], strides = [1, 1]} : vector<9x17xf32> to vector<9x8xf32>
    %248 = tpu.concatenate %246, %247 in 1 : vector<9x9xf32>, vector<9x8xf32> -> vector<9x17xf32>
    %249 = arith.select %103, %248, %245 : vector<9x17xi1>, vector<9x17xf32>
    %250 = vector.extract_strided_slice %249 {offsets = [0, 0], sizes = [9, 9], strides = [1, 1]} : vector<9x17xf32> to vector<9x9xf32>
    %251 = arith.addf %232, %250 : vector<9x9xf32>
    %cst_66 = arith.constant dense<0xFF800000> : vector<9xf32>
    %252 = vector.multi_reduction <maximumf>, %251, %cst_66 [1] : vector<9x9xf32> to vector<9xf32>
    %253 = vector.shape_cast %252 : vector<9xf32> to vector<9x1xf32>
    %254 = vector.broadcast %253 : vector<9x1xf32> to vector<9x9xf32>
    %255 = arith.subf %251, %254 : vector<9x9xf32>
    %256 = math.exp %255 : vector<9x9xf32>
    %cst_67 = arith.constant dense<0.000000e+00> : vector<9xf32>
    %257 = vector.multi_reduction <add>, %256, %cst_67 [1] : vector<9x9xf32> to vector<9xf32>
    %258 = vector.shape_cast %257 : vector<9xf32> to vector<9x1xf32>
    %259 = tpu.reciprocal %258 {approx = true} : vector<9x1xf32> -> vector<9x1xf32>
    %260 = vector.broadcast %259 : vector<9x1xf32> to vector<9x9xf32>
    %261 = arith.mulf %256, %260 : vector<9x9xf32>
    %262 = arith.truncf %261 : vector<9x9xf32> to vector<9x9xbf16>
    %cst_68 = arith.constant dense<0.000000e+00> : vector<9x32xf32>
    %263 = tpu.matmul %262, %231, %cst_68 {dimension_numbers = #tpu.dot_dimension_numbers<[1], [0], [0], [1], [0, 0, 1, 1], [], []>} : vector<9x9xbf16>, vector<9x32xbf16>, vector<9x32xf32> -> vector<9x32xf32>
    %264 = tpu.concatenate %143, %183, %223, %263 in 1 : vector<9x32xf32>, vector<9x32xf32>, vector<9x32xf32>, vector<9x32xf32> -> vector<9x128xf32>
    %c0_69 = arith.constant 0 : index
    %c0_70 = arith.constant 0 : index
    %265 = vector.load %arg10[%c0_69, %c0_70] : memref<128x128xbf16, #tpu.memory_space<vmem>>, vector<128x128xbf16>
    %266 = arith.truncf %264 : vector<9x128xf32> to vector<9x128xbf16>
    %cst_71 = arith.constant dense<0.000000e+00> : vector<9x128xf32>
    %267 = tpu.matmul %266, %265, %cst_71 {dimension_numbers = #tpu.dot_dimension_numbers<[1], [0], [0], [1], [0, 0, 1, 1], [], []>} : vector<9x128xbf16>, vector<128x128xbf16>, vector<9x128xf32> -> vector<9x128xf32>
    %268 = arith.addf %48, %267 : vector<9x128xf32>
    %c0_72 = arith.constant 0 : index
    %c0_73 = arith.constant 0 : index
    %269 = vector.load %arg11[%c0_72, %c0_73] : memref<1x128xf32, #tpu.memory_space<vmem>>, vector<1x128xf32>
    %270 = vector.broadcast %269 : vector<1x128xf32> to vector<9x128xf32>
    %271 = arith.addf %268, %270 : vector<9x128xf32>
    %c2 = arith.constant 2 : index
    %c0_74 = arith.constant 0 : index
    %272 = vector.load %arg3[%c2, %c0_74] : memref<5x128xf32, #tpu.memory_space<vmem>>, vector<1x128xf32>
    %c2_75 = arith.constant 2 : index
    %c0_76 = arith.constant 0 : index
    %273 = vector.load %arg4[%c2_75, %c0_76] : memref<5x128xf32, #tpu.memory_space<vmem>>, vector<1x128xf32>
    %cst_77 = arith.constant dense<0.000000e+00> : vector<9xf32>
    %274 = vector.multi_reduction <add>, %271, %cst_77 [1] : vector<9x128xf32> to vector<9xf32>
    %275 = vector.shape_cast %274 : vector<9xf32> to vector<9x1xf32>
    %cst_78 = arith.constant 1.280000e+02 : f32
    %276 = vector.broadcast %cst_78 : f32 to vector<9x1xf32>
    %277 = arith.divf %275, %276 : vector<9x1xf32>
    %278 = vector.broadcast %277 : vector<9x1xf32> to vector<9x128xf32>
    %279 = arith.subf %271, %278 : vector<9x128xf32>
    %280 = arith.mulf %279, %279 : vector<9x128xf32>
    %cst_79 = arith.constant dense<0.000000e+00> : vector<9xf32>
    %281 = vector.multi_reduction <add>, %280, %cst_79 [1] : vector<9x128xf32> to vector<9xf32>
    %282 = vector.shape_cast %281 : vector<9xf32> to vector<9x1xf32>
    %cst_80 = arith.constant 1.280000e+02 : f32
    %283 = vector.broadcast %cst_80 : f32 to vector<9x1xf32>
    %284 = arith.divf %282, %283 : vector<9x1xf32>
    %285 = vector.broadcast %277 : vector<9x1xf32> to vector<9x128xf32>
    %286 = arith.subf %271, %285 : vector<9x128xf32>
    %cst_81 = arith.constant 9.99999974E-6 : f32
    %287 = vector.broadcast %cst_81 : f32 to vector<9x1xf32>
    %288 = arith.addf %284, %287 : vector<9x1xf32>
    %289 = math.rsqrt %288 : vector<9x1xf32>
    %290 = vector.broadcast %289 : vector<9x1xf32> to vector<9x128xf32>
    %291 = arith.mulf %286, %290 : vector<9x128xf32>
    %292 = vector.broadcast %272 : vector<1x128xf32> to vector<9x128xf32>
    %293 = arith.mulf %291, %292 : vector<9x128xf32>
    %294 = vector.broadcast %273 : vector<1x128xf32> to vector<9x128xf32>
    %295 = arith.addf %293, %294 : vector<9x128xf32>
    %c0_82 = arith.constant 0 : index
    %c0_83 = arith.constant 0 : index
    %296 = vector.load %arg12[%c0_82, %c0_83] : memref<128x256xbf16, #tpu.memory_space<vmem>>, vector<128x256xbf16>
    %297 = arith.truncf %295 : vector<9x128xf32> to vector<9x128xbf16>
    %cst_84 = arith.constant dense<0.000000e+00> : vector<9x256xf32>
    %298 = tpu.matmul %297, %296, %cst_84 {dimension_numbers = #tpu.dot_dimension_numbers<[1], [0], [0], [1], [0, 0, 1, 1], [], []>} : vector<9x128xbf16>, vector<128x256xbf16>, vector<9x256xf32> -> vector<9x256xf32>
    %c0_85 = arith.constant 0 : index
    %c0_86 = arith.constant 0 : index
    %299 = vector.load %arg13[%c0_85, %c0_86] : memref<1x256xf32, #tpu.memory_space<vmem>>, vector<1x256xf32>
    %300 = vector.broadcast %299 : vector<1x256xf32> to vector<9x256xf32>
    %301 = arith.addf %298, %300 : vector<9x256xf32>
    %c0_87 = arith.constant 0 : index
    %c0_88 = arith.constant 0 : index
    %302 = vector.load %arg14[%c0_87, %c0_88] : memref<128x256xbf16, #tpu.memory_space<vmem>>, vector<128x256xbf16>
    %303 = arith.truncf %295 : vector<9x128xf32> to vector<9x128xbf16>
    %cst_89 = arith.constant dense<0.000000e+00> : vector<9x256xf32>
    %304 = tpu.matmul %303, %302, %cst_89 {dimension_numbers = #tpu.dot_dimension_numbers<[1], [0], [0], [1], [0, 0, 1, 1], [], []>} : vector<9x128xbf16>, vector<128x256xbf16>, vector<9x256xf32> -> vector<9x256xf32>
    %c0_90 = arith.constant 0 : index
    %c0_91 = arith.constant 0 : index
    %305 = vector.load %arg15[%c0_90, %c0_91] : memref<1x256xf32, #tpu.memory_space<vmem>>, vector<1x256xf32>
    %306 = vector.broadcast %305 : vector<1x256xf32> to vector<9x256xf32>
    %307 = arith.addf %304, %306 : vector<9x256xf32>
    %cst_92 = arith.constant 0.000000e+00 : f32
    %308 = vector.broadcast %cst_92 : f32 to vector<9x256xf32>
    %309 = arith.subf %308, %307 : vector<9x256xf32>
    %310 = math.exp %309 : vector<9x256xf32>
    %cst_93 = arith.constant 1.000000e+00 : f32
    %311 = vector.broadcast %cst_93 : f32 to vector<9x256xf32>
    %312 = arith.addf %311, %310 : vector<9x256xf32>
    %cst_94 = arith.constant 1.000000e+00 : f32
    %313 = vector.broadcast %cst_94 : f32 to vector<9x256xf32>
    %314 = arith.divf %313, %312 : vector<9x256xf32>
    %315 = arith.mulf %301, %314 : vector<9x256xf32>
    %c0_95 = arith.constant 0 : index
    %c0_96 = arith.constant 0 : index
    %316 = vector.load %arg16[%c0_95, %c0_96] : memref<16x256xf32, #tpu.memory_space<vmem>>, vector<16x256xf32>
    %cst_97 = arith.constant 0.000000e+00 : f32
    %317 = vector.broadcast %cst_97 : f32 to vector<8x256xf32>
    %cst_98 = arith.constant 0.000000e+00 : f32
    %318 = vector.broadcast %cst_98 : f32 to vector<7x256xf32>
    %319 = tpu.concatenate %317, %315, %318 in 0 : vector<8x256xf32>, vector<9x256xf32>, vector<7x256xf32> -> vector<24x256xf32>
    %320 = vector.extract_strided_slice %319 {offsets = [0, 0], sizes = [9, 256], strides = [1, 1]} : vector<24x256xf32> to vector<9x256xf32>
    %321 = vector.extract_strided_slice %316 {offsets = [0, 0], sizes = [1, 256], strides = [1, 1]} : vector<16x256xf32> to vector<1x256xf32>
    %322 = vector.broadcast %321 : vector<1x256xf32> to vector<9x256xf32>
    %323 = arith.mulf %320, %322 : vector<9x256xf32>
    %324 = vector.extract_strided_slice %319 {offsets = [1, 0], sizes = [9, 256], strides = [1, 1]} : vector<24x256xf32> to vector<9x256xf32>
    %325 = vector.extract_strided_slice %316 {offsets = [1, 0], sizes = [1, 256], strides = [1, 1]} : vector<16x256xf32> to vector<1x256xf32>
    %326 = vector.broadcast %325 : vector<1x256xf32> to vector<9x256xf32>
    %327 = arith.mulf %324, %326 : vector<9x256xf32>
    %328 = arith.addf %323, %327 : vector<9x256xf32>
    %329 = vector.extract_strided_slice %319 {offsets = [2, 0], sizes = [9, 256], strides = [1, 1]} : vector<24x256xf32> to vector<9x256xf32>
    %330 = vector.extract_strided_slice %316 {offsets = [2, 0], sizes = [1, 256], strides = [1, 1]} : vector<16x256xf32> to vector<1x256xf32>
    %331 = vector.broadcast %330 : vector<1x256xf32> to vector<9x256xf32>
    %332 = arith.mulf %329, %331 : vector<9x256xf32>
    %333 = arith.addf %328, %332 : vector<9x256xf32>
    %334 = vector.extract_strided_slice %319 {offsets = [3, 0], sizes = [9, 256], strides = [1, 1]} : vector<24x256xf32> to vector<9x256xf32>
    %335 = vector.extract_strided_slice %316 {offsets = [3, 0], sizes = [1, 256], strides = [1, 1]} : vector<16x256xf32> to vector<1x256xf32>
    %336 = vector.broadcast %335 : vector<1x256xf32> to vector<9x256xf32>
    %337 = arith.mulf %334, %336 : vector<9x256xf32>
    %338 = arith.addf %333, %337 : vector<9x256xf32>
    %339 = vector.extract_strided_slice %319 {offsets = [4, 0], sizes = [9, 256], strides = [1, 1]} : vector<24x256xf32> to vector<9x256xf32>
    %340 = vector.extract_strided_slice %316 {offsets = [4, 0], sizes = [1, 256], strides = [1, 1]} : vector<16x256xf32> to vector<1x256xf32>
    %341 = vector.broadcast %340 : vector<1x256xf32> to vector<9x256xf32>
    %342 = arith.mulf %339, %341 : vector<9x256xf32>
    %343 = arith.addf %338, %342 : vector<9x256xf32>
    %344 = vector.extract_strided_slice %319 {offsets = [5, 0], sizes = [9, 256], strides = [1, 1]} : vector<24x256xf32> to vector<9x256xf32>
    %345 = vector.extract_strided_slice %316 {offsets = [5, 0], sizes = [1, 256], strides = [1, 1]} : vector<16x256xf32> to vector<1x256xf32>
    %346 = vector.broadcast %345 : vector<1x256xf32> to vector<9x256xf32>
    %347 = arith.mulf %344, %346 : vector<9x256xf32>
    %348 = arith.addf %343, %347 : vector<9x256xf32>
    %349 = vector.extract_strided_slice %319 {offsets = [6, 0], sizes = [9, 256], strides = [1, 1]} : vector<24x256xf32> to vector<9x256xf32>
    %350 = vector.extract_strided_slice %316 {offsets = [6, 0], sizes = [1, 256], strides = [1, 1]} : vector<16x256xf32> to vector<1x256xf32>
    %351 = vector.broadcast %350 : vector<1x256xf32> to vector<9x256xf32>
    %352 = arith.mulf %349, %351 : vector<9x256xf32>
    %353 = arith.addf %348, %352 : vector<9x256xf32>
    %354 = vector.extract_strided_slice %319 {offsets = [7, 0], sizes = [9, 256], strides = [1, 1]} : vector<24x256xf32> to vector<9x256xf32>
    %355 = vector.extract_strided_slice %316 {offsets = [7, 0], sizes = [1, 256], strides = [1, 1]} : vector<16x256xf32> to vector<1x256xf32>
    %356 = vector.broadcast %355 : vector<1x256xf32> to vector<9x256xf32>
    %357 = arith.mulf %354, %356 : vector<9x256xf32>
    %358 = arith.addf %353, %357 : vector<9x256xf32>
    %359 = vector.extract_strided_slice %319 {offsets = [8, 0], sizes = [9, 256], strides = [1, 1]} : vector<24x256xf32> to vector<9x256xf32>
    %360 = vector.extract_strided_slice %316 {offsets = [8, 0], sizes = [1, 256], strides = [1, 1]} : vector<16x256xf32> to vector<1x256xf32>
    %361 = vector.broadcast %360 : vector<1x256xf32> to vector<9x256xf32>
    %362 = arith.mulf %359, %361 : vector<9x256xf32>
    %363 = arith.addf %358, %362 : vector<9x256xf32>
    %364 = vector.extract_strided_slice %319 {offsets = [9, 0], sizes = [9, 256], strides = [1, 1]} : vector<24x256xf32> to vector<9x256xf32>
    %365 = vector.extract_strided_slice %316 {offsets = [9, 0], sizes = [1, 256], strides = [1, 1]} : vector<16x256xf32> to vector<1x256xf32>
    %366 = vector.broadcast %365 : vector<1x256xf32> to vector<9x256xf32>
    %367 = arith.mulf %364, %366 : vector<9x256xf32>
    %368 = arith.addf %363, %367 : vector<9x256xf32>
    %369 = vector.extract_strided_slice %319 {offsets = [10, 0], sizes = [9, 256], strides = [1, 1]} : vector<24x256xf32> to vector<9x256xf32>
    %370 = vector.extract_strided_slice %316 {offsets = [10, 0], sizes = [1, 256], strides = [1, 1]} : vector<16x256xf32> to vector<1x256xf32>
    %371 = vector.broadcast %370 : vector<1x256xf32> to vector<9x256xf32>
    %372 = arith.mulf %369, %371 : vector<9x256xf32>
    %373 = arith.addf %368, %372 : vector<9x256xf32>
    %374 = vector.extract_strided_slice %319 {offsets = [11, 0], sizes = [9, 256], strides = [1, 1]} : vector<24x256xf32> to vector<9x256xf32>
    %375 = vector.extract_strided_slice %316 {offsets = [11, 0], sizes = [1, 256], strides = [1, 1]} : vector<16x256xf32> to vector<1x256xf32>
    %376 = vector.broadcast %375 : vector<1x256xf32> to vector<9x256xf32>
    %377 = arith.mulf %374, %376 : vector<9x256xf32>
    %378 = arith.addf %373, %377 : vector<9x256xf32>
    %379 = vector.extract_strided_slice %319 {offsets = [12, 0], sizes = [9, 256], strides = [1, 1]} : vector<24x256xf32> to vector<9x256xf32>
    %380 = vector.extract_strided_slice %316 {offsets = [12, 0], sizes = [1, 256], strides = [1, 1]} : vector<16x256xf32> to vector<1x256xf32>
    %381 = vector.broadcast %380 : vector<1x256xf32> to vector<9x256xf32>
    %382 = arith.mulf %379, %381 : vector<9x256xf32>
    %383 = arith.addf %378, %382 : vector<9x256xf32>
    %384 = vector.extract_strided_slice %319 {offsets = [13, 0], sizes = [9, 256], strides = [1, 1]} : vector<24x256xf32> to vector<9x256xf32>
    %385 = vector.extract_strided_slice %316 {offsets = [13, 0], sizes = [1, 256], strides = [1, 1]} : vector<16x256xf32> to vector<1x256xf32>
    %386 = vector.broadcast %385 : vector<1x256xf32> to vector<9x256xf32>
    %387 = arith.mulf %384, %386 : vector<9x256xf32>
    %388 = arith.addf %383, %387 : vector<9x256xf32>
    %389 = vector.extract_strided_slice %319 {offsets = [14, 0], sizes = [9, 256], strides = [1, 1]} : vector<24x256xf32> to vector<9x256xf32>
    %390 = vector.extract_strided_slice %316 {offsets = [14, 0], sizes = [1, 256], strides = [1, 1]} : vector<16x256xf32> to vector<1x256xf32>
    %391 = vector.broadcast %390 : vector<1x256xf32> to vector<9x256xf32>
    %392 = arith.mulf %389, %391 : vector<9x256xf32>
    %393 = arith.addf %388, %392 : vector<9x256xf32>
    %394 = vector.extract_strided_slice %319 {offsets = [15, 0], sizes = [9, 256], strides = [1, 1]} : vector<24x256xf32> to vector<9x256xf32>
    %395 = vector.extract_strided_slice %316 {offsets = [15, 0], sizes = [1, 256], strides = [1, 1]} : vector<16x256xf32> to vector<1x256xf32>
    %396 = vector.broadcast %395 : vector<1x256xf32> to vector<9x256xf32>
    %397 = arith.mulf %394, %396 : vector<9x256xf32>
    %398 = arith.addf %393, %397 : vector<9x256xf32>
    %c0_99 = arith.constant 0 : index
    %c0_100 = arith.constant 0 : index
    %399 = vector.load %arg17[%c0_99, %c0_100] : memref<1x256xf32, #tpu.memory_space<vmem>>, vector<1x256xf32>
    %400 = vector.broadcast %399 : vector<1x256xf32> to vector<9x256xf32>
    %401 = arith.addf %398, %400 : vector<9x256xf32>
    %c0_101 = arith.constant 0 : index
    %c0_102 = arith.constant 0 : index
    %402 = vector.load %arg18[%c0_101, %c0_102] : memref<1x256xf32, #tpu.memory_space<vmem>>, vector<1x256xf32>
    %403 = vector.broadcast %402 : vector<1x256xf32> to vector<9x256xf32>
    %404 = arith.mulf %401, %403 : vector<9x256xf32>
    %c0_103 = arith.constant 0 : index
    %c0_104 = arith.constant 0 : index
    %405 = vector.load %arg19[%c0_103, %c0_104] : memref<1x256xf32, #tpu.memory_space<vmem>>, vector<1x256xf32>
    %406 = vector.broadcast %405 : vector<1x256xf32> to vector<9x256xf32>
    %407 = arith.addf %404, %406 : vector<9x256xf32>
    %cst_105 = arith.constant 0.000000e+00 : f32
    %408 = vector.broadcast %cst_105 : f32 to vector<9x256xf32>
    %409 = arith.subf %408, %407 : vector<9x256xf32>
    %410 = math.exp %409 : vector<9x256xf32>
    %cst_106 = arith.constant 1.000000e+00 : f32
    %411 = vector.broadcast %cst_106 : f32 to vector<9x256xf32>
    %412 = arith.addf %411, %410 : vector<9x256xf32>
    %cst_107 = arith.constant 1.000000e+00 : f32
    %413 = vector.broadcast %cst_107 : f32 to vector<9x256xf32>
    %414 = arith.divf %413, %412 : vector<9x256xf32>
    %415 = arith.mulf %407, %414 : vector<9x256xf32>
    %c0_108 = arith.constant 0 : index
    %c0_109 = arith.constant 0 : index
    %416 = vector.load %arg20[%c0_108, %c0_109] : memref<256x128xbf16, #tpu.memory_space<vmem>>, vector<256x128xbf16>
    %417 = arith.truncf %415 : vector<9x256xf32> to vector<9x256xbf16>
    %cst_110 = arith.constant dense<0.000000e+00> : vector<9x128xf32>
    %418 = tpu.matmul %417, %416, %cst_110 {dimension_numbers = #tpu.dot_dimension_numbers<[1], [0], [0], [1], [0, 0, 1, 1], [], []>} : vector<9x256xbf16>, vector<256x128xbf16>, vector<9x128xf32> -> vector<9x128xf32>
    %419 = arith.addf %271, %418 : vector<9x128xf32>
    %c0_111 = arith.constant 0 : index
    %c0_112 = arith.constant 0 : index
    %420 = vector.load %arg21[%c0_111, %c0_112] : memref<1x128xf32, #tpu.memory_space<vmem>>, vector<1x128xf32>
    %421 = vector.broadcast %420 : vector<1x128xf32> to vector<9x128xf32>
    %422 = arith.addf %419, %421 : vector<9x128xf32>
    %c3 = arith.constant 3 : index
    %c0_113 = arith.constant 0 : index
    %423 = vector.load %arg3[%c3, %c0_113] : memref<5x128xf32, #tpu.memory_space<vmem>>, vector<1x128xf32>
    %c3_114 = arith.constant 3 : index
    %c0_115 = arith.constant 0 : index
    %424 = vector.load %arg4[%c3_114, %c0_115] : memref<5x128xf32, #tpu.memory_space<vmem>>, vector<1x128xf32>
    %cst_116 = arith.constant dense<0.000000e+00> : vector<9xf32>
    %425 = vector.multi_reduction <add>, %422, %cst_116 [1] : vector<9x128xf32> to vector<9xf32>
    %426 = vector.shape_cast %425 : vector<9xf32> to vector<9x1xf32>
    %cst_117 = arith.constant 1.280000e+02 : f32
    %427 = vector.broadcast %cst_117 : f32 to vector<9x1xf32>
    %428 = arith.divf %426, %427 : vector<9x1xf32>
    %429 = vector.broadcast %428 : vector<9x1xf32> to vector<9x128xf32>
    %430 = arith.subf %422, %429 : vector<9x128xf32>
    %431 = arith.mulf %430, %430 : vector<9x128xf32>
    %cst_118 = arith.constant dense<0.000000e+00> : vector<9xf32>
    %432 = vector.multi_reduction <add>, %431, %cst_118 [1] : vector<9x128xf32> to vector<9xf32>
    %433 = vector.shape_cast %432 : vector<9xf32> to vector<9x1xf32>
    %cst_119 = arith.constant 1.280000e+02 : f32
    %434 = vector.broadcast %cst_119 : f32 to vector<9x1xf32>
    %435 = arith.divf %433, %434 : vector<9x1xf32>
    %436 = vector.broadcast %428 : vector<9x1xf32> to vector<9x128xf32>
    %437 = arith.subf %422, %436 : vector<9x128xf32>
    %cst_120 = arith.constant 9.99999974E-6 : f32
    %438 = vector.broadcast %cst_120 : f32 to vector<9x1xf32>
    %439 = arith.addf %435, %438 : vector<9x1xf32>
    %440 = math.rsqrt %439 : vector<9x1xf32>
    %441 = vector.broadcast %440 : vector<9x1xf32> to vector<9x128xf32>
    %442 = arith.mulf %437, %441 : vector<9x128xf32>
    %443 = vector.broadcast %423 : vector<1x128xf32> to vector<9x128xf32>
    %444 = arith.mulf %442, %443 : vector<9x128xf32>
    %445 = vector.broadcast %424 : vector<1x128xf32> to vector<9x128xf32>
    %446 = arith.addf %444, %445 : vector<9x128xf32>
    %c0_121 = arith.constant 0 : index
    %c0_122 = arith.constant 0 : index
    %447 = vector.load %arg22[%c0_121, %c0_122] : memref<128x512xbf16, #tpu.memory_space<vmem>>, vector<128x512xbf16>
    %448 = arith.truncf %446 : vector<9x128xf32> to vector<9x128xbf16>
    %cst_123 = arith.constant dense<0.000000e+00> : vector<9x512xf32>
    %449 = tpu.matmul %448, %447, %cst_123 {dimension_numbers = #tpu.dot_dimension_numbers<[1], [0], [0], [1], [0, 0, 1, 1], [], []>} : vector<9x128xbf16>, vector<128x512xbf16>, vector<9x512xf32> -> vector<9x512xf32>
    %c0_124 = arith.constant 0 : index
    %c0_125 = arith.constant 0 : index
    %450 = vector.load %arg23[%c0_124, %c0_125] : memref<1x512xf32, #tpu.memory_space<vmem>>, vector<1x512xf32>
    %451 = vector.broadcast %450 : vector<1x512xf32> to vector<9x512xf32>
    %452 = arith.addf %449, %451 : vector<9x512xf32>
    %cst_126 = arith.constant 0.000000e+00 : f32
    %453 = vector.broadcast %cst_126 : f32 to vector<9x512xf32>
    %454 = arith.subf %453, %452 : vector<9x512xf32>
    %455 = math.exp %454 : vector<9x512xf32>
    %cst_127 = arith.constant 1.000000e+00 : f32
    %456 = vector.broadcast %cst_127 : f32 to vector<9x512xf32>
    %457 = arith.addf %456, %455 : vector<9x512xf32>
    %cst_128 = arith.constant 1.000000e+00 : f32
    %458 = vector.broadcast %cst_128 : f32 to vector<9x512xf32>
    %459 = arith.divf %458, %457 : vector<9x512xf32>
    %460 = arith.mulf %452, %459 : vector<9x512xf32>
    %c0_129 = arith.constant 0 : index
    %c0_130 = arith.constant 0 : index
    %461 = vector.load %arg24[%c0_129, %c0_130] : memref<512x128xbf16, #tpu.memory_space<vmem>>, vector<512x128xbf16>
    %462 = arith.truncf %460 : vector<9x512xf32> to vector<9x512xbf16>
    %cst_131 = arith.constant dense<0.000000e+00> : vector<9x128xf32>
    %463 = tpu.matmul %462, %461, %cst_131 {dimension_numbers = #tpu.dot_dimension_numbers<[1], [0], [0], [1], [0, 0, 1, 1], [], []>} : vector<9x512xbf16>, vector<512x128xbf16>, vector<9x128xf32> -> vector<9x128xf32>
    %c0_132 = arith.constant 0 : index
    %c0_133 = arith.constant 0 : index
    %464 = vector.load %arg25[%c0_132, %c0_133] : memref<1x128xf32, #tpu.memory_space<vmem>>, vector<1x128xf32>
    %465 = vector.broadcast %464 : vector<1x128xf32> to vector<9x128xf32>
    %466 = arith.addf %463, %465 : vector<9x128xf32>
    %cst_134 = arith.constant 5.000000e-01 : f32
    %467 = vector.broadcast %cst_134 : f32 to vector<9x128xf32>
    %468 = arith.mulf %467, %466 : vector<9x128xf32>
    %469 = arith.addf %422, %468 : vector<9x128xf32>
    %c4 = arith.constant 4 : index
    %c0_135 = arith.constant 0 : index
    %470 = vector.load %arg3[%c4, %c0_135] : memref<5x128xf32, #tpu.memory_space<vmem>>, vector<1x128xf32>
    %c4_136 = arith.constant 4 : index
    %c0_137 = arith.constant 0 : index
    %471 = vector.load %arg4[%c4_136, %c0_137] : memref<5x128xf32, #tpu.memory_space<vmem>>, vector<1x128xf32>
    %cst_138 = arith.constant dense<0.000000e+00> : vector<9xf32>
    %472 = vector.multi_reduction <add>, %469, %cst_138 [1] : vector<9x128xf32> to vector<9xf32>
    %473 = vector.shape_cast %472 : vector<9xf32> to vector<9x1xf32>
    %cst_139 = arith.constant 1.280000e+02 : f32
    %474 = vector.broadcast %cst_139 : f32 to vector<9x1xf32>
    %475 = arith.divf %473, %474 : vector<9x1xf32>
    %476 = vector.broadcast %475 : vector<9x1xf32> to vector<9x128xf32>
    %477 = arith.subf %469, %476 : vector<9x128xf32>
    %478 = arith.mulf %477, %477 : vector<9x128xf32>
    %cst_140 = arith.constant dense<0.000000e+00> : vector<9xf32>
    %479 = vector.multi_reduction <add>, %478, %cst_140 [1] : vector<9x128xf32> to vector<9xf32>
    %480 = vector.shape_cast %479 : vector<9xf32> to vector<9x1xf32>
    %cst_141 = arith.constant 1.280000e+02 : f32
    %481 = vector.broadcast %cst_141 : f32 to vector<9x1xf32>
    %482 = arith.divf %480, %481 : vector<9x1xf32>
    %483 = vector.broadcast %475 : vector<9x1xf32> to vector<9x128xf32>
    %484 = arith.subf %469, %483 : vector<9x128xf32>
    %cst_142 = arith.constant 9.99999974E-6 : f32
    %485 = vector.broadcast %cst_142 : f32 to vector<9x1xf32>
    %486 = arith.addf %482, %485 : vector<9x1xf32>
    %487 = math.rsqrt %486 : vector<9x1xf32>
    %488 = vector.broadcast %487 : vector<9x1xf32> to vector<9x128xf32>
    %489 = arith.mulf %484, %488 : vector<9x128xf32>
    %490 = vector.broadcast %470 : vector<1x128xf32> to vector<9x128xf32>
    %491 = arith.mulf %489, %490 : vector<9x128xf32>
    %492 = vector.broadcast %471 : vector<1x128xf32> to vector<9x128xf32>
    %493 = arith.addf %491, %492 : vector<9x128xf32>
    %494 = vector.shape_cast %493 : vector<9x128xf32> to vector<1x9x128xf32>
    %c0_143 = arith.constant 0 : index
    %c0_144 = arith.constant 0 : index
    %c0_145 = arith.constant 0 : index
    %495 = vector.load %arg26[%c0_143, %c0_144, %c0_145] : memref<1x9x128xf32, #tpu.memory_space<vmem>>, vector<1x9x128xf32>
    tpu.vector_store %arg26[%c0_143, %c0_144, %c0_145], %494 {strides = array<i32>} : memref<1x9x128xf32, #tpu.memory_space<vmem>>, vector<1x9x128xf32>,
    return
  }
  func.func @transform_0(%arg0: i32) -> (i32, i32, i32) {
    %c0_i32 = arith.constant 0 : i32
    %c0_i32_0 = arith.constant 0 : i32
    %c0_i32_1 = arith.constant 0 : i32
    return %arg0, %c0_i32, %c0_i32_0 : i32, i32, i32
  }
  func.func @transform_1(%arg0: i32) -> (i32, i32) {
    %c0_i32 = arith.constant 0 : i32
    %c0_i32_0 = arith.constant 0 : i32
    %c0_i32_1 = arith.constant 0 : i32
    return %c0_i32, %c0_i32_0 : i32, i32
  }
  func.func @transform_2(%arg0: i32) -> (i32, i32) {
    %c0_i32 = arith.constant 0 : i32
    %c0_i32_0 = arith.constant 0 : i32
    %c0_i32_1 = arith.constant 0 : i32
    return %c0_i32, %c0_i32_0 : i32, i32
  }
  func.func @transform_3(%arg0: i32) -> (i32, i32) {
    %c0_i32 = arith.constant 0 : i32
    %c0_i32_0 = arith.constant 0 : i32
    %c0_i32_1 = arith.constant 0 : i32
    return %c0_i32, %c0_i32_0 : i32, i32
  }
  func.func @transform_4(%arg0: i32) -> (i32, i32) {
    %c0_i32 = arith.constant 0 : i32
    %c0_i32_0 = arith.constant 0 : i32
    %c0_i32_1 = arith.constant 0 : i32
    return %c0_i32, %c0_i32_0 : i32, i32
  }
  func.func @transform_5(%arg0: i32) -> (i32, i32) {
    %c0_i32 = arith.constant 0 : i32
    %c0_i32_0 = arith.constant 0 : i32
    %c0_i32_1 = arith.constant 0 : i32
    return %c0_i32, %c0_i32_0 : i32, i32
  }
  func.func @transform_6(%arg0: i32) -> (i32, i32) {
    %c0_i32 = arith.constant 0 : i32
    %c0_i32_0 = arith.constant 0 : i32
    %c0_i32_1 = arith.constant 0 : i32
    return %c0_i32, %c0_i32_0 : i32, i32
  }
  func.func @transform_7(%arg0: i32) -> (i32, i32) {
    %c0_i32 = arith.constant 0 : i32
    %c0_i32_0 = arith.constant 0 : i32
    %c0_i32_1 = arith.constant 0 : i32
    return %c0_i32, %c0_i32_0 : i32, i32
  }
  func.func @transform_8(%arg0: i32) -> (i32, i32) {
    %c0_i32 = arith.constant 0 : i32
    %c0_i32_0 = arith.constant 0 : i32
    %c0_i32_1 = arith.constant 0 : i32
    return %c0_i32, %c0_i32_0 : i32, i32
  }
  func.func @transform_9(%arg0: i32) -> (i32, i32) {
    %c0_i32 = arith.constant 0 : i32
    %c0_i32_0 = arith.constant 0 : i32
    %c0_i32_1 = arith.constant 0 : i32
    return %c0_i32, %c0_i32_0 : i32, i32
  }
  func.func @transform_10(%arg0: i32) -> (i32, i32) {
    %c0_i32 = arith.constant 0 : i32
    %c0_i32_0 = arith.constant 0 : i32
    %c0_i32_1 = arith.constant 0 : i32
    return %c0_i32, %c0_i32_0 : i32, i32
  }
  func.func @transform_11(%arg0: i32) -> (i32, i32) {
    %c0_i32 = arith.constant 0 : i32
    %c0_i32_0 = arith.constant 0 : i32
    %c0_i32_1 = arith.constant 0 : i32
    return %c0_i32, %c0_i32_0 : i32, i32
  }
  func.func @transform_12(%arg0: i32) -> (i32, i32) {
    %c0_i32 = arith.constant 0 : i32
    %c0_i32_0 = arith.constant 0 : i32
    %c0_i32_1 = arith.constant 0 : i32
    return %c0_i32, %c0_i32_0 : i32, i32
  }
  func.func @transform_13(%arg0: i32) -> (i32, i32) {
    %c0_i32 = arith.constant 0 : i32
    %c0_i32_0 = arith.constant 0 : i32
    %c0_i32_1 = arith.constant 0 : i32
    return %c0_i32, %c0_i32_0 : i32, i32
  }
  func.func @transform_14(%arg0: i32) -> (i32, i32) {
    %c0_i32 = arith.constant 0 : i32
    %c0_i32_0 = arith.constant 0 : i32
    %c0_i32_1 = arith.constant 0 : i32
    return %c0_i32, %c0_i32_0 : i32, i32
  }
  func.func @transform_15(%arg0: i32) -> (i32, i32) {
    %c0_i32 = arith.constant 0 : i32
    %c0_i32_0 = arith.constant 0 : i32
    %c0_i32_1 = arith.constant 0 : i32
    return %c0_i32, %c0_i32_0 : i32, i32
  }
  func.func @transform_16(%arg0: i32) -> (i32, i32) {
    %c0_i32 = arith.constant 0 : i32
    %c0_i32_0 = arith.constant 0 : i32
    %c0_i32_1 = arith.constant 0 : i32
    return %c0_i32, %c0_i32_0 : i32, i32
  }
  func.func @transform_17(%arg0: i32) -> (i32, i32) {
    %c0_i32 = arith.constant 0 : i32
    %c0_i32_0 = arith.constant 0 : i32
    %c0_i32_1 = arith.constant 0 : i32
    return %c0_i32, %c0_i32_0 : i32, i32
  }
  func.func @transform_18(%arg0: i32) -> (i32, i32) {
    %c0_i32 = arith.constant 0 : i32
    %c0_i32_0 = arith.constant 0 : i32
    %c0_i32_1 = arith.constant 0 : i32
    return %c0_i32, %c0_i32_0 : i32, i32
  }
  func.func @transform_19(%arg0: i32) -> (i32, i32) {
    %c0_i32 = arith.constant 0 : i32
    %c0_i32_0 = arith.constant 0 : i32
    %c0_i32_1 = arith.constant 0 : i32
    return %c0_i32, %c0_i32_0 : i32, i32
  }
  func.func @transform_20(%arg0: i32) -> (i32, i32) {
    %c0_i32 = arith.constant 0 : i32
    %c0_i32_0 = arith.constant 0 : i32
    %c0_i32_1 = arith.constant 0 : i32
    return %c0_i32, %c0_i32_0 : i32, i32
  }
  func.func @transform_21(%arg0: i32) -> (i32, i32) {
    %c0_i32 = arith.constant 0 : i32
    %c0_i32_0 = arith.constant 0 : i32
    %c0_i32_1 = arith.constant 0 : i32
    return %c0_i32, %c0_i32_0 : i32, i32
  }
  func.func @transform_22(%arg0: i32) -> (i32, i32) {
    %c0_i32 = arith.constant 0 : i32
    %c0_i32_0 = arith.constant 0 : i32
    %c0_i32_1 = arith.constant 0 : i32
    return %c0_i32, %c0_i32_0 : i32, i32
  }
  func.func @transform_23(%arg0: i32) -> (i32, i32) {
    %c0_i32 = arith.constant 0 : i32
    %c0_i32_0 = arith.constant 0 : i32
    %c0_i32_1 = arith.constant 0 : i32
    return %c0_i32, %c0_i32_0 : i32, i32
  }
  func.func @transform_24(%arg0: i32) -> (i32, i32) {
    %c0_i32 = arith.constant 0 : i32
    %c0_i32_0 = arith.constant 0 : i32
    %c0_i32_1 = arith.constant 0 : i32
    return %c0_i32, %c0_i32_0 : i32, i32
  }
  func.func @transform_25(%arg0: i32) -> (i32, i32, i32) {
    %c0_i32 = arith.constant 0 : i32
    %c0_i32_0 = arith.constant 0 : i32
    %c0_i32_1 = arith.constant 0 : i32
    return %arg0, %c0_i32, %c0_i32_0 : i32, i32, i32
  }
}

</mosaic_0001>

<llo_original>
// kernel: my_conformer_forward.1
$region0: #{my_conformer_forward.1}
  #allocation0 [shape = 'u32[]', space=smem, size = 0x4, offset = 0x4, fixed_abs, tag = 'smem constant byte address 0x4 - core index']
  #allocation1 [shape = 'u32[72,128]{1,0:T(1,128)}', space=vmem, size = 0x9000, scoped, tag = 'internal scratch']
  %s0 = inlined_call_operand.vmem [shape: f32[2,9,128], index: 0, kind: input, shape index: {}]
  %s1 = inlined_call_operand.vmem [shape: bf16[17,32], index: 1, kind: input, shape index: {}]
  %s2 = inlined_call_operand.vmem [shape: f32[5,128], index: 2, kind: input, shape index: {}]
  %s3 = inlined_call_operand.hbm [shape: f32[5,128], index: 3, kind: input, shape index: {}]
  %s4 = inlined_call_operand.vmem [shape: bf16[128,512], index: 4, kind: input, shape index: {}]
  %s5 = inlined_call_operand.vmem [shape: f32[1,512], index: 5, kind: input, shape index: {}]
  %s6 = inlined_call_operand.vmem [shape: bf16[512,128], index: 6, kind: input, shape index: {}]
  %s7 = inlined_call_operand.vmem [shape: f32[1,128], index: 7, kind: input, shape index: {}]
  %s8 = inlined_call_operand.hbm [shape: bf16[128,384], index: 8, kind: input, shape index: {}]
  %s9 = inlined_call_operand.vmem [shape: bf16[128,128], index: 9, kind: input, shape index: {}]
  %s10 = inlined_call_operand.vmem [shape: f32[1,128], index: 10, kind: input, shape index: {}]
  %s11 = inlined_call_operand.vmem [shape: bf16[128,256], index: 11, kind: input, shape index: {}]
  %s12 = inlined_call_operand.vmem [shape: f32[1,256], index: 12, kind: input, shape index: {}]
  %s13 = inlined_call_operand.hbm [shape: bf16[128,256], index: 13, kind: input, shape index: {}]
  %s14 = inlined_call_operand.vmem [shape: f32[1,256], index: 14, kind: input, shape index: {}]
  %s15 = inlined_call_operand.vmem [shape: f32[16,256], index: 15, kind: input, shape index: {}]
  %s16 = inlined_call_operand.vmem [shape: f32[1,256], index: 16, kind: input, shape index: {}]
  %s17 = inlined_call_operand.vmem [shape: f32[1,256], index: 17, kind: input, shape index: {}]
  %s18 = inlined_call_operand.vmem [shape: f32[1,256], index: 18, kind: input, shape index: {}]
  %s19 = inlined_call_operand.hbm [shape: bf16[256,128], index: 19, kind: input, shape index: {}]
  %s20 = inlined_call_operand.vmem [shape: f32[1,128], index: 20, kind: input, shape index: {}]
  %s21 = inlined_call_operand.vmem [shape: bf16[128,512], index: 21, kind: input, shape index: {}]
  %s22 = inlined_call_operand.hbm [shape: f32[1,512], index: 22, kind: input, shape index: {}]
  %s23 = inlined_call_operand.hbm [shape: bf16[512,128], index: 23, kind: input, shape index: {}]
  %s24 = inlined_call_operand.hbm [shape: f32[1,128], index: 24, kind: input, shape index: {}]
  %s25 = inlined_call_operand.vmem [shape: f32[2,9,128], index: 25, kind: output, shape index: {}]
  %s26 = sld [smem:[#allocation0]]
  $region161: #{my_conformer_forward.1} parent=0
    _
  %s28 = ssub.s32 1, %s26
  %s29 = scalar_select 0, %s28, %s26
  $region1: #{my_conformer_forward.1} parent=0
    #allocation2 [shape = 'u8[4096]{0}', space=vmem, size = 0x1000, scoped, tag = 'input window, operand 3, single buffered']
    #allocation3 [shape = 's32[2]{0}', space=sflag, size = 0x8, scoped, tag = 'scoped memory for my_conformer_forward.1']
    #allocation4 [shape = 'u8[98304]{0}', space=vmem, size = 0x18000, scoped, tag = 'input window, operand 8, single buffered']
    #allocation5 [shape = 's32[1]{0}', space=sflag, size = 0x4, scoped, tag = 'scoped memory for my_conformer_forward.1']
    #allocation6 [shape = 'u8[65536]{0}', space=vmem, size = 0x10000, scoped, tag = 'input window, operand 13, single buffered']
    #allocation7 [shape = 'u8[65536]{0}', space=vmem, size = 0x10000, scoped, tag = 'input window, operand 19, single buffered']
    #allocation8 [shape = 's32[1]{0}', space=sflag, size = 0x4, scoped, tag = 'scoped memory for my_conformer_forward.1']
    #allocation9 [shape = 'u8[2048]{0}', space=vmem, size = 0x800, scoped, tag = 'input window, operand 22, single buffered']
    #allocation10 [shape = 'u8[131072]{0}', space=vmem, size = 0x20000, scoped, tag = 'input window, operand 23, single buffered']
    #allocation11 [shape = 's32[1]{0}', space=sflag, size = 0x4, scoped, tag = 'scoped memory for my_conformer_forward.1']
    #allocation12 [shape = 'u8[512]{0}', space=vmem, size = 0x400, scoped, tag = 'input window, operand 24, single buffered']
    %30 = vsyncpa [#allocation3], 0
    %31 = vsyncpa [#allocation5], 0
    %32 = vsyncpa [#allocation8], 0
    %33 = vsyncpa [#allocation11], 0
    loop: start=0, step=1, limit=4
    $region2: #{my_conformer_forward.1} parent=1 // loop_pre_header
      _
    $region3: #{my_conformer_forward.1} parent=1 // loop_header
      %s35 = sphi 0, %s39
      %p36 = scmp.ge.s32.totalorder %s35, 4
      %s45 = sphi 0, %s47
      %s48 = sphi 0, %s45
      %s49 = sphi 0, %s48
      %s65 = sphi 0, %s49
      %s69 = sphi 0, %s69
      %s71 = sphi 0, %s69
      %s72 = sphi 0, %s71
      %s86 = sphi 0, %s72
      %s90 = sphi 0, %s90
      %s92 = sphi 0, %s90
      %s93 = sphi 0, %s92
      %s107 = sphi 0, %s93
      %s111 = sphi 0, %s111
      %s113 = sphi 0, %s111
      %s114 = sphi 0, %s113
      %s128 = sphi 0, %s114
      %s132 = sphi 0, %s132
      %s134 = sphi 0, %s132
      %s135 = sphi 0, %s134
      %s149 = sphi 0, %s135
      %s153 = sphi 0, %s153
      %s155 = sphi 0, %s153
      %s156 = sphi 0, %s155
      %s170 = sphi 0, %s156
      %s174 = sphi 0, %s174
      %s176 = sphi 0, %s174
      %s177 = sphi 0, %s176
      %s191 = sphi 0, %s177
      %s195 = sphi 0, %s195
      %s197 = sphi 0, %s195
      %s198 = sphi 0, %s197
      %s212 = sphi 0, %s198
      %s216 = sphi 0, %s216
      %s218 = sphi 0, %s216
      %s219 = sphi 0, %s218
      %s233 = sphi 0, %s219
      %s237 = sphi 0, %s237
      %s239 = sphi 0, %s237
      %s240 = sphi 0, %s239
      %s254 = sphi 0, %s240
      %s258 = sphi 0, %s258
      %s260 = sphi 0, %s258
      %s261 = sphi 0, %s260
      %s275 = sphi 0, %s261
      %s279 = sphi 0, %s279
      %s281 = sphi 0, %s279
      %s282 = sphi 0, %s281
      %s296 = sphi 0, %s282
      %s300 = sphi 0, %s300
      %s302 = sphi 0, %s300
      %s303 = sphi 0, %s302
      %s317 = sphi 0, %s303
      %s321 = sphi 0, %s321
      %s323 = sphi 0, %s321
      %s324 = sphi 0, %s323
      %s338 = sphi 0, %s324
      %s342 = sphi 0, %s342
      %s344 = sphi 0, %s342
      %s345 = sphi 0, %s344
      %s359 = sphi 0, %s345
      %s363 = sphi 0, %s363
      %s365 = sphi 0, %s363
      %s366 = sphi 0, %s365
      %s380 = sphi 0, %s366
      %s384 = sphi 0, %s384
      %s386 = sphi 0, %s384
      %s387 = sphi 0, %s386
      %s401 = sphi 0, %s387
      %s405 = sphi 0, %s405
      %s407 = sphi 0, %s405
      %s408 = sphi 0, %s407
      %s422 = sphi 0, %s408
      %s426 = sphi 0, %s426
      %s428 = sphi 0, %s426
      %s429 = sphi 0, %s428
      %s443 = sphi 0, %s429
      %s447 = sphi 0, %s447
      %s449 = sphi 0, %s447
      %s450 = sphi 0, %s449
      %s464 = sphi 0, %s450
      %s468 = sphi 0, %s468
      %s470 = sphi 0, %s468
      %s471 = sphi 0, %s470
      %s485 = sphi 0, %s471
      %s489 = sphi 0, %s489
      %s491 = sphi 0, %s489
      %s492 = sphi 0, %s491
      %s506 = sphi 0, %s492
      %s510 = sphi 0, %s510
      %s512 = sphi 0, %s510
      %s513 = sphi 0, %s512
      %s527 = sphi 0, %s513
      %s531 = sphi 0, %s531
      %s533 = sphi 0, %s531
      %s534 = sphi 0, %s533
      %s548 = sphi 0, %s534
      %s552 = sphi 0, %s552
      %s554 = sphi 0, %s552
      %s555 = sphi 0, %s554
      %s569 = sphi 0, %s555
      %s575 = sphi 0, %s577
      %s578 = sphi 0, %s575
      %s579 = sphi 0, %s578
      %s595 = sphi 0, %s579
    $region4: #{my_conformer_forward.1} parent=1 // loop_header_branch
      %38 = sbr.rel (%p36) target = $region8
    $region5: #{my_conformer_forward.1} parent=1 // loop_body
      %s40 = ssub.s32 %s35, 1
      %s41 = ssub.s32 %s35, 2
      %s42 = sadd.s32 %s35, 1
      %s43 = ssub.s32 %s35, %s42
      %p44 = scmp.eq.s32.totalorder %s43, 0
      %s46 = sadd.s32 %s45, 1
      %s47 = scalar_select %p44, %s45, %s46
      %p50 = pneg %p44
      %p51 = scmp.eq.s32.totalorder %s35, 1
      %p52 = por %p50, %p51
      %p53 = scmp.ne.s32.totalorder %s45, %s48
      %p54 = scmp.eq.s32.totalorder %s35, 0
      %p55 = por %p53, %p54
      %p56 = scmp.ne.s32.totalorder %s45, %s48
      %p57 = scmp.eq.s32.totalorder %s40, 1
      %p58 = por %p56, %p57
      %p59 = scmp.ne.s32.totalorder %s48, %s49
      %p60 = scmp.eq.s32.totalorder %s40, 0
      %p61 = por %p59, %p60
      %p62 = scmp.ne.s32.totalorder %s48, %s49
      %p63 = scmp.eq.s32.totalorder %s41, 1
      %p64 = por %p62, %p63
      %p66 = scmp.ne.s32.totalorder %s49, %s65
      %p67 = scmp.eq.s32.totalorder %s41, 0
      %p68 = por %p66, %p67
      %s70 = sadd.s32 %s69, 1
      %p73 = scmp.eq.s32.totalorder %s35, 1
      %p74 = scmp.ne.s32.totalorder %s69, %s71
      %p75 = scmp.eq.s32.totalorder %s35, 0
      %p76 = por %p74, %p75
      %p77 = scmp.ne.s32.totalorder %s69, %s71
      %p78 = scmp.eq.s32.totalorder %s40, 1
      %p79 = por %p77, %p78
      %p80 = scmp.ne.s32.totalorder %s71, %s72
      %p81 = scmp.eq.s32.totalorder %s40, 0
      %p82 = por %p80, %p81
      %p83 = scmp.ne.s32.totalorder %s71, %s72
      %p84 = scmp.eq.s32.totalorder %s41, 1
      %p85 = por %p83, %p84
      %p87 = scmp.ne.s32.totalorder %s72, %s86
      %p88 = scmp.eq.s32.totalorder %s41, 0
      %p89 = por %p87, %p88
      %s91 = sadd.s32 %s90, 1
      %p94 = scmp.eq.s32.totalorder %s35, 1
      %p95 = scmp.ne.s32.totalorder %s90, %s92
      %p96 = scmp.eq.s32.totalorder %s35, 0
      %p97 = por %p95, %p96
      %p98 = scmp.ne.s32.totalorder %s90, %s92
      %p99 = scmp.eq.s32.totalorder %s40, 1
      %p100 = por %p98, %p99
      %p101 = scmp.ne.s32.totalorder %s92, %s93
      %p102 = scmp.eq.s32.totalorder %s40, 0
      %p103 = por %p101, %p102
      %p104 = scmp.ne.s32.totalorder %s92, %s93
      %p105 = scmp.eq.s32.totalorder %s41, 1
      %p106 = por %p104, %p105
      %p108 = scmp.ne.s32.totalorder %s93, %s107
      %p109 = scmp.eq.s32.totalorder %s41, 0
      %p110 = por %p108, %p109
      %s112 = sadd.s32 %s111, 1
      %p115 = scmp.eq.s32.totalorder %s35, 1
      %p116 = scmp.ne.s32.totalorder %s111, %s113
      %p117 = scmp.eq.s32.totalorder %s35, 0
      %p118 = por %p116, %p117
      %p119 = scmp.ne.s32.totalorder %s111, %s113
      %p120 = scmp.eq.s32.totalorder %s40, 1
      %p121 = por %p119, %p120
      %p122 = scmp.ne.s32.totalorder %s113, %s114
      %p123 = scmp.eq.s32.totalorder %s40, 0
      %p124 = por %p122, %p123
      %p125 = scmp.ne.s32.totalorder %s113, %s114
      %p126 = scmp.eq.s32.totalorder %s41, 1
      %p127 = por %p125, %p126
      %p129 = scmp.ne.s32.totalorder %s114, %s128
      %p130 = scmp.eq.s32.totalorder %s41, 0
      %p131 = por %p129, %p130
      %s133 = sadd.s32 %s132, 1
      %p136 = scmp.eq.s32.totalorder %s35, 1
      %p137 = scmp.ne.s32.totalorder %s132, %s134
      %p138 = scmp.eq.s32.totalorder %s35, 0
      %p139 = por %p137, %p138
      %p140 = scmp.ne.s32.totalorder %s132, %s134
      %p141 = scmp.eq.s32.totalorder %s40, 1
      %p142 = por %p140, %p141
      %p143 = scmp.ne.s32.totalorder %s134, %s135
      %p144 = scmp.eq.s32.totalorder %s40, 0
      %p145 = por %p143, %p144
      %p146 = scmp.ne.s32.totalorder %s134, %s135
      %p147 = scmp.eq.s32.totalorder %s41, 1
      %p148 = por %p146, %p147
      %p150 = scmp.ne.s32.totalorder %s135, %s149
      %p151 = scmp.eq.s32.totalorder %s41, 0
      %p152 = por %p150, %p151
      %s154 = sadd.s32 %s153, 1
      %p157 = scmp.eq.s32.totalorder %s35, 1
      %p158 = scmp.ne.s32.totalorder %s153, %s155
      %p159 = scmp.eq.s32.totalorder %s35, 0
      %p160 = por %p158, %p159
      %p161 = scmp.ne.s32.totalorder %s153, %s155
      %p162 = scmp.eq.s32.totalorder %s40, 1
      %p163 = por %p161, %p162
      %p164 = scmp.ne.s32.totalorder %s155, %s156
      %p165 = scmp.eq.s32.totalorder %s40, 0
      %p166 = por %p164, %p165
      %p167 = scmp.ne.s32.totalorder %s155, %s156
      %p168 = scmp.eq.s32.totalorder %s41, 1
      %p169 = por %p167, %p168
      %p171 = scmp.ne.s32.totalorder %s156, %s170
      %p172 = scmp.eq.s32.totalorder %s41, 0
      %p173 = por %p171, %p172
      %s175 = sadd.s32 %s174, 1
      %p178 = scmp.eq.s32.totalorder %s35, 1
      %p179 = scmp.ne.s32.totalorder %s174, %s176
      %p180 = scmp.eq.s32.totalorder %s35, 0
      %p181 = por %p179, %p180
      %p182 = scmp.ne.s32.totalorder %s174, %s176
      %p183 = scmp.eq.s32.totalorder %s40, 1
      %p184 = por %p182, %p183
      %p185 = scmp.ne.s32.totalorder %s176, %s177
      %p186 = scmp.eq.s32.totalorder %s40, 0
      %p187 = por %p185, %p186
      %p188 = scmp.ne.s32.totalorder %s176, %s177
      %p189 = scmp.eq.s32.totalorder %s41, 1
      %p190 = por %p188, %p189
      %p192 = scmp.ne.s32.totalorder %s177, %s191
      %p193 = scmp.eq.s32.totalorder %s41, 0
      %p194 = por %p192, %p193
      %s196 = sadd.s32 %s195, 1
      %p199 = scmp.eq.s32.totalorder %s35, 1
      %p200 = scmp.ne.s32.totalorder %s195, %s197
      %p201 = scmp.eq.s32.totalorder %s35, 0
      %p202 = por %p200, %p201
      %p203 = scmp.ne.s32.totalorder %s195, %s197
      %p204 = scmp.eq.s32.totalorder %s40, 1
      %p205 = por %p203, %p204
      %p206 = scmp.ne.s32.totalorder %s197, %s198
      %p207 = scmp.eq.s32.totalorder %s40, 0
      %p208 = por %p206, %p207
      %p209 = scmp.ne.s32.totalorder %s197, %s198
      %p210 = scmp.eq.s32.totalorder %s41, 1
      %p211 = por %p209, %p210
      %p213 = scmp.ne.s32.totalorder %s198, %s212
      %p214 = scmp.eq.s32.totalorder %s41, 0
      %p215 = por %p213, %p214
      %s217 = sadd.s32 %s216, 1
      %p220 = scmp.eq.s32.totalorder %s35, 1
      %p221 = scmp.ne.s32.totalorder %s216, %s218
      %p222 = scmp.eq.s32.totalorder %s35, 0
      %p223 = por %p221, %p222
      %p224 = scmp.ne.s32.totalorder %s216, %s218
      %p225 = scmp.eq.s32.totalorder %s40, 1
      %p226 = por %p224, %p225
      %p227 = scmp.ne.s32.totalorder %s218, %s219
      %p228 = scmp.eq.s32.totalorder %s40, 0
      %p229 = por %p227, %p228
      %p230 = scmp.ne.s32.totalorder %s218, %s219
      %p231 = scmp.eq.s32.totalorder %s41, 1
      %p232 = por %p230, %p231
      %p234 = scmp.ne.s32.totalorder %s219, %s233
      %p235 = scmp.eq.s32.totalorder %s41, 0
      %p236 = por %p234, %p235
      %s238 = sadd.s32 %s237, 1
      %p241 = scmp.eq.s32.totalorder %s35, 1
      %p242 = scmp.ne.s32.totalorder %s237, %s239
      %p243 = scmp.eq.s32.totalorder %s35, 0
      %p244 = por %p242, %p243
      %p245 = scmp.ne.s32.totalorder %s237, %s239
      %p246 = scmp.eq.s32.totalorder %s40, 1
      %p247 = por %p245, %p246
      %p248 = scmp.ne.s32.totalorder %s239, %s240
      %p249 = scmp.eq.s32.totalorder %s40, 0
      %p250 = por %p248, %p249
      %p251 = scmp.ne.s32.totalorder %s239, %s240
      %p252 = scmp.eq.s32.totalorder %s41, 1
      %p253 = por %p251, %p252
      %p255 = scmp.ne.s32.totalorder %s240, %s254
      %p256 = scmp.eq.s32.totalorder %s41, 0
      %p257 = por %p255, %p256
      %s259 = sadd.s32 %s258, 1
      %p262 = scmp.eq.s32.totalorder %s35, 1
      %p263 = scmp.ne.s32.totalorder %s258, %s260
      %p264 = scmp.eq.s32.totalorder %s35, 0
      %p265 = por %p263, %p264
      %p266 = scmp.ne.s32.totalorder %s258, %s260
      %p267 = scmp.eq.s32.totalorder %s40, 1
      %p268 = por %p266, %p267
      %p269 = scmp.ne.s32.totalorder %s260, %s261
      %p270 = scmp.eq.s32.totalorder %s40, 0
      %p271 = por %p269, %p270
      %p272 = scmp.ne.s32.totalorder %s260, %s261
      %p273 = scmp.eq.s32.totalorder %s41, 1
      %p274 = por %p272, %p273
      %p276 = scmp.ne.s32.totalorder %s261, %s275
      %p277 = scmp.eq.s32.totalorder %s41, 0
      %p278 = por %p276, %p277
      %s280 = sadd.s32 %s279, 1
      %p283 = scmp.eq.s32.totalorder %s35, 1
      %p284 = scmp.ne.s32.totalorder %s279, %s281
      %p285 = scmp.eq.s32.totalorder %s35, 0
      %p286 = por %p284, %p285
      %p287 = scmp.ne.s32.totalorder %s279, %s281
      %p288 = scmp.eq.s32.totalorder %s40, 1
      %p289 = por %p287, %p288
      %p290 = scmp.ne.s32.totalorder %s281, %s282
      %p291 = scmp.eq.s32.totalorder %s40, 0
      %p292 = por %p290, %p291
      %p293 = scmp.ne.s32.totalorder %s281, %s282
      %p294 = scmp.eq.s32.totalorder %s41, 1
      %p295 = por %p293, %p294
      %p297 = scmp.ne.s32.totalorder %s282, %s296
      %p298 = scmp.eq.s32.totalorder %s41, 0
      %p299 = por %p297, %p298
      %s301 = sadd.s32 %s300, 1
      %p304 = scmp.eq.s32.totalorder %s35, 1
      %p305 = scmp.ne.s32.totalorder %s300, %s302
      %p306 = scmp.eq.s32.totalorder %s35, 0
      %p307 = por %p305, %p306
      %p308 = scmp.ne.s32.totalorder %s300, %s302
      %p309 = scmp.eq.s32.totalorder %s40, 1
      %p310 = por %p308, %p309
      %p311 = scmp.ne.s32.totalorder %s302, %s303
      %p312 = scmp.eq.s32.totalorder %s40, 0
      %p313 = por %p311, %p312
      %p314 = scmp.ne.s32.totalorder %s302, %s303
      %p315 = scmp.eq.s32.totalorder %s41, 1
      %p316 = por %p314, %p315
      %p318 = scmp.ne.s32.totalorder %s303, %s317
      %p319 = scmp.eq.s32.totalorder %s41, 0
      %p320 = por %p318, %p319
      %s322 = sadd.s32 %s321, 1
      %p325 = scmp.eq.s32.totalorder %s35, 1
      %p326 = scmp.ne.s32.totalorder %s321, %s323
      %p327 = scmp.eq.s32.totalorder %s35, 0
      %p328 = por %p326, %p327
      %p329 = scmp.ne.s32.totalorder %s321, %s323
      %p330 = scmp.eq.s32.totalorder %s40, 1
      %p331 = por %p329, %p330
      %p332 = scmp.ne.s32.totalorder %s323, %s324
      %p333 = scmp.eq.s32.totalorder %s40, 0
      %p334 = por %p332, %p333
      %p335 = scmp.ne.s32.totalorder %s323, %s324
      %p336 = scmp.eq.s32.totalorder %s41, 1
      %p337 = por %p335, %p336
      %p339 = scmp.ne.s32.totalorder %s324, %s338
      %p340 = scmp.eq.s32.totalorder %s41, 0
      %p341 = por %p339, %p340
      %s343 = sadd.s32 %s342, 1
      %p346 = scmp.eq.s32.totalorder %s35, 1
      %p347 = scmp.ne.s32.totalorder %s342, %s344
      %p348 = scmp.eq.s32.totalorder %s35, 0
      %p349 = por %p347, %p348
      %p350 = scmp.ne.s32.totalorder %s342, %s344
      %p351 = scmp.eq.s32.totalorder %s40, 1
      %p352 = por %p350, %p351
      %p353 = scmp.ne.s32.totalorder %s344, %s345
      %p354 = scmp.eq.s32.totalorder %s40, 0
      %p355 = por %p353, %p354
      %p356 = scmp.ne.s32.totalorder %s344, %s345
      %p357 = scmp.eq.s32.totalorder %s41, 1
      %p358 = por %p356, %p357
      %p360 = scmp.ne.s32.totalorder %s345, %s359
      %p361 = scmp.eq.s32.totalorder %s41, 0
      %p362 = por %p360, %p361
      %s364 = sadd.s32 %s363, 1
      %p367 = scmp.eq.s32.totalorder %s35, 1
      %p368 = scmp.ne.s32.totalorder %s363, %s365
      %p369 = scmp.eq.s32.totalorder %s35, 0
      %p370 = por %p368, %p369
      %p371 = scmp.ne.s32.totalorder %s363, %s365
      %p372 = scmp.eq.s32.totalorder %s40, 1
      %p373 = por %p371, %p372
      %p374 = scmp.ne.s32.totalorder %s365, %s366
      %p375 = scmp.eq.s32.totalorder %s40, 0
      %p376 = por %p374, %p375
      %p377 = scmp.ne.s32.totalorder %s365, %s366
      %p378 = scmp.eq.s32.totalorder %s41, 1
      %p379 = por %p377, %p378
      %p381 = scmp.ne.s32.totalorder %s366, %s380
      %p382 = scmp.eq.s32.totalorder %s41, 0
      %p383 = por %p381, %p382
      %s385 = sadd.s32 %s384, 1
      %p388 = scmp.eq.s32.totalorder %s35, 1
      %p389 = scmp.ne.s32.totalorder %s384, %s386
      %p390 = scmp.eq.s32.totalorder %s35, 0
      %p391 = por %p389, %p390
      %p392 = scmp.ne.s32.totalorder %s384, %s386
      %p393 = scmp.eq.s32.totalorder %s40, 1
      %p394 = por %p392, %p393
      %p395 = scmp.ne.s32.totalorder %s386, %s387
      %p396 = scmp.eq.s32.totalorder %s40, 0
      %p397 = por %p395, %p396
      %p398 = scmp.ne.s32.totalorder %s386, %s387
      %p399 = scmp.eq.s32.totalorder %s41, 1
      %p400 = por %p398, %p399
      %p402 = scmp.ne.s32.totalorder %s387, %s401
      %p403 = scmp.eq.s32.totalorder %s41, 0
      %p404 = por %p402, %p403
      %s406 = sadd.s32 %s405, 1
      %p409 = scmp.eq.s32.totalorder %s35, 1
      %p410 = scmp.ne.s32.totalorder %s405, %s407
      %p411 = scmp.eq.s32.totalorder %s35, 0
      %p412 = por %p410, %p411
      %p413 = scmp.ne.s32.totalorder %s405, %s407
      %p414 = scmp.eq.s32.totalorder %s40, 1
      %p415 = por %p413, %p414
      %p416 = scmp.ne.s32.totalorder %s407, %s408
      %p417 = scmp.eq.s32.totalorder %s40, 0
      %p418 = por %p416, %p417
      %p419 = scmp.ne.s32.totalorder %s407, %s408
      %p420 = scmp.eq.s32.totalorder %s41, 1
      %p421 = por %p419, %p420
      %p423 = scmp.ne.s32.totalorder %s408, %s422
      %p424 = scmp.eq.s32.totalorder %s41, 0
      %p425 = por %p423, %p424
      %s427 = sadd.s32 %s426, 1
      %p430 = scmp.eq.s32.totalorder %s35, 1
      %p431 = scmp.ne.s32.totalorder %s426, %s428
      %p432 = scmp.eq.s32.totalorder %s35, 0
      %p433 = por %p431, %p432
      %p434 = scmp.ne.s32.totalorder %s426, %s428
      %p435 = scmp.eq.s32.totalorder %s40, 1
      %p436 = por %p434, %p435
      %p437 = scmp.ne.s32.totalorder %s428, %s429
      %p438 = scmp.eq.s32.totalorder %s40, 0
      %p439 = por %p437, %p438
      %p440 = scmp.ne.s32.totalorder %s428, %s429
      %p441 = scmp.eq.s32.totalorder %s41, 1
      %p442 = por %p440, %p441
      %p444 = scmp.ne.s32.totalorder %s429, %s443
      %p445 = scmp.eq.s32.totalorder %s41, 0
      %p446 = por %p444, %p445
      %s448 = sadd.s32 %s447, 1
      %p451 = scmp.eq.s32.totalorder %s35, 1
      %p452 = scmp.ne.s32.totalorder %s447, %s449
      %p453 = scmp.eq.s32.totalorder %s35, 0
      %p454 = por %p452, %p453
      %p455 = scmp.ne.s32.totalorder %s447, %s449
      %p456 = scmp.eq.s32.totalorder %s40, 1
      %p457 = por %p455, %p456
      %p458 = scmp.ne.s32.totalorder %s449, %s450
      %p459 = scmp.eq.s32.totalorder %s40, 0
      %p460 = por %p458, %p459
      %p461 = scmp.ne.s32.totalorder %s449, %s450
      %p462 = scmp.eq.s32.totalorder %s41, 1
      %p463 = por %p461, %p462
      %p465 = scmp.ne.s32.totalorder %s450, %s464
      %p466 = scmp.eq.s32.totalorder %s41, 0
      %p467 = por %p465, %p466
      %s469 = sadd.s32 %s468, 1
      %p472 = scmp.eq.s32.totalorder %s35, 1
      %p473 = scmp.ne.s32.totalorder %s468, %s470
      %p474 = scmp.eq.s32.totalorder %s35, 0
      %p475 = por %p473, %p474
      %p476 = scmp.ne.s32.totalorder %s468, %s470
      %p477 = scmp.eq.s32.totalorder %s40, 1
      %p478 = por %p476, %p477
      %p479 = scmp.ne.s32.totalorder %s470, %s471
      %p480 = scmp.eq.s32.totalorder %s40, 0
      %p481 = por %p479, %p480
      %p482 = scmp.ne.s32.totalorder %s470, %s471
      %p483 = scmp.eq.s32.totalorder %s41, 1
      %p484 = por %p482, %p483
      %p486 = scmp.ne.s32.totalorder %s471, %s485
      %p487 = scmp.eq.s32.totalorder %s41, 0
      %p488 = por %p486, %p487
      %s490 = sadd.s32 %s489, 1
      %p493 = scmp.eq.s32.totalorder %s35, 1
      %p494 = scmp.ne.s32.totalorder %s489, %s491
      %p495 = scmp.eq.s32.totalorder %s35, 0
      %p496 = por %p494, %p495
      %p497 = scmp.ne.s32.totalorder %s489, %s491
      %p498 = scmp.eq.s32.totalorder %s40, 1
      %p499 = por %p497, %p498
      %p500 = scmp.ne.s32.totalorder %s491, %s492
      %p501 = scmp.eq.s32.totalorder %s40, 0
      %p502 = por %p500, %p501
      %p503 = scmp.ne.s32.totalorder %s491, %s492
      %p504 = scmp.eq.s32.totalorder %s41, 1
      %p505 = por %p503, %p504
      %p507 = scmp.ne.s32.totalorder %s492, %s506
      %p508 = scmp.eq.s32.totalorder %s41, 0
      %p509 = por %p507, %p508
      %s511 = sadd.s32 %s510, 1
      %p514 = scmp.eq.s32.totalorder %s35, 1
      %p515 = scmp.ne.s32.totalorder %s510, %s512
      %p516 = scmp.eq.s32.totalorder %s35, 0
      %p517 = por %p515, %p516
      %p518 = scmp.ne.s32.totalorder %s510, %s512
      %p519 = scmp.eq.s32.totalorder %s40, 1
      %p520 = por %p518, %p519
      %p521 = scmp.ne.s32.totalorder %s512, %s513
      %p522 = scmp.eq.s32.totalorder %s40, 0
      %p523 = por %p521, %p522
      %p524 = scmp.ne.s32.totalorder %s512, %s513
      %p525 = scmp.eq.s32.totalorder %s41, 1
      %p526 = por %p524, %p525
      %p528 = scmp.ne.s32.totalorder %s513, %s527
      %p529 = scmp.eq.s32.totalorder %s41, 0
      %p530 = por %p528, %p529
      %s532 = sadd.s32 %s531, 1
      %p535 = scmp.eq.s32.totalorder %s35, 1
      %p536 = scmp.ne.s32.totalorder %s531, %s533
      %p537 = scmp.eq.s32.totalorder %s35, 0
      %p538 = por %p536, %p537
      %p539 = scmp.ne.s32.totalorder %s531, %s533
      %p540 = scmp.eq.s32.totalorder %s40, 1
      %p541 = por %p539, %p540
      %p542 = scmp.ne.s32.totalorder %s533, %s534
      %p543 = scmp.eq.s32.totalorder %s40, 0
      %p544 = por %p542, %p543
      %p545 = scmp.ne.s32.totalorder %s533, %s534
      %p546 = scmp.eq.s32.totalorder %s41, 1
      %p547 = por %p545, %p546
      %p549 = scmp.ne.s32.totalorder %s534, %s548
      %p550 = scmp.eq.s32.totalorder %s41, 0
      %p551 = por %p549, %p550
      %s553 = sadd.s32 %s552, 1
      %p556 = scmp.eq.s32.totalorder %s35, 1
      %p557 = scmp.ne.s32.totalorder %s552, %s554
      %p558 = scmp.eq.s32.totalorder %s35, 0
      %p559 = por %p557, %p558
      %p560 = scmp.ne.s32.totalorder %s552, %s554
      %p561 = scmp.eq.s32.totalorder %s40, 1
      %p562 = por %p560, %p561
      %p563 = scmp.ne.s32.totalorder %s554, %s555
      %p564 = scmp.eq.s32.totalorder %s40, 0
      %p565 = por %p563, %p564
      %p566 = scmp.ne.s32.totalorder %s554, %s555
      %p567 = scmp.eq.s32.totalorder %s41, 1
      %p568 = por %p566, %p567
      %p570 = scmp.ne.s32.totalorder %s555, %s569
      %p571 = scmp.eq.s32.totalorder %s41, 0
      %p572 = por %p570, %p571
      %s573 = ssub.s32 %s35, %s42
      %p574 = scmp.eq.s32.totalorder %s573, 0
      %s576 = sadd.s32 %s575, 1
      %s577 = scalar_select %p574, %s575, %s576
      %p580 = pneg %p574
      %p581 = scmp.eq.s32.totalorder %s35, 1
      %p582 = por %p580, %p581
      %p583 = scmp.ne.s32.totalorder %s575, %s578
      %p584 = scmp.eq.s32.totalorder %s35, 0
      %p585 = por %p583, %p584
      %p586 = scmp.ne.s32.totalorder %s575, %s578
      %p587 = scmp.eq.s32.totalorder %s40, 1
      %p588 = por %p586, %p587
      %p589 = scmp.ne.s32.totalorder %s578, %s579
      %p590 = scmp.eq.s32.totalorder %s40, 0
      %p591 = por %p589, %p590
      %p592 = scmp.ne.s32.totalorder %s578, %s579
      %p593 = scmp.eq.s32.totalorder %s41, 1
      %p594 = por %p592, %p593
      %p596 = scmp.ne.s32.totalorder %s579, %s595
      %p597 = scmp.eq.s32.totalorder %s41, 0
      %p598 = por %p596, %p597
      %p599 = scmp.le.s32.totalorder 1, %s35
      %p600 = scmp.lt.s32.totalorder %s35, 3
      %p601 = pnand %p599, %p600
      %p602 = pneg %p601
      // Predicated region
      $region9: #{my_conformer_forward.1} parent=5 // pred_check
        _
      $region10: #{my_conformer_forward.1} parent=5 // pred_check_branch
        %604 = sbr.rel (%p601) target = $region12
      $region11: #{my_conformer_forward.1} parent=5 // pred_region
        %s605 = ssub.s32 %s35, 1
        // Predicated region
        $region13: #{my_conformer_forward.1} parent=11 // pred_check
          %p606 = pneg %p82
        $region14: #{my_conformer_forward.1} parent=11 // pred_check_branch
          %608 = sbr.rel (%p606) target = $region16
        $region15: #{my_conformer_forward.1} parent=11 // pred_region
          _
        $region16: #{my_conformer_forward.1} parent=11 // pred_fallthru
          _
        // Predicated region
        $region17: #{my_conformer_forward.1} parent=11 // pred_check
          %p609 = pneg %p103
        $region18: #{my_conformer_forward.1} parent=11 // pred_check_branch
          %611 = sbr.rel (%p609) target = $region20
        $region19: #{my_conformer_forward.1} parent=11 // pred_region
          _
        $region20: #{my_conformer_forward.1} parent=11 // pred_fallthru
          _
        // Predicated region
        $region21: #{my_conformer_forward.1} parent=11 // pred_check
          %p612 = pneg %p124
        $region22: #{my_conformer_forward.1} parent=11 // pred_check_branch
          %614 = sbr.rel (%p612) target = $region24
        $region23: #{my_conformer_forward.1} parent=11 // pred_region
          %616 = vsyncadd [#allocation3], 0
          %s618 = sshll.u32 %s3, 4
          %s619 = int_to_ptr.hbm [resolvable:$true] %s618
          %s620 = sshll.u32 [#allocation2], 4
          %s621 = int_to_ptr.vmem [resolvable:$true] %s620
          %623 = dma.hbm_to_vmem [thread:$0]  %s619, 128, %s621, [#allocation3]
        $region24: #{my_conformer_forward.1} parent=11 // pred_fallthru
          _
        // Predicated region
        $region25: #{my_conformer_forward.1} parent=11 // pred_check
          %p624 = pneg %p145
        $region26: #{my_conformer_forward.1} parent=11 // pred_check_branch
          %626 = sbr.rel (%p624) target = $region28
        $region27: #{my_conformer_forward.1} parent=11 // pred_region
          _
        $region28: #{my_conformer_forward.1} parent=11 // pred_fallthru
          _
        // Predicated region
        $region29: #{my_conformer_forward.1} parent=11 // pred_check
          %p627 = pneg %p166
        $region30: #{my_conformer_forward.1} parent=11 // pred_check_branch
          %629 = sbr.rel (%p627) target = $region32
        $region31: #{my_conformer_forward.1} parent=11 // pred_region
          _
        $region32: #{my_conformer_forward.1} parent=11 // pred_fallthru
          _
        // Predicated region
        $region33: #{my_conformer_forward.1} parent=11 // pred_check
          %p630 = pneg %p187
        $region34: #{my_conformer_forward.1} parent=11 // pred_check_branch
          %632 = sbr.rel (%p630) target = $region36
        $region35: #{my_conformer_forward.1} parent=11 // pred_region
          _
        $region36: #{my_conformer_forward.1} parent=11 // pred_fallthru
          _
        // Predicated region
        $region37: #{my_conformer_forward.1} parent=11 // pred_check
          %p633 = pneg %p208
        $region38: #{my_conformer_forward.1} parent=11 // pred_check_branch
          %635 = sbr.rel (%p633) target = $region40
        $region39: #{my_conformer_forward.1} parent=11 // pred_region
          _
        $region40: #{my_conformer_forward.1} parent=11 // pred_fallthru
          _
        // Predicated region
        $region41: #{my_conformer_forward.1} parent=11 // pred_check
          %p636 = pneg %p229
        $region42: #{my_conformer_forward.1} parent=11 // pred_check_branch
          %638 = sbr.rel (%p636) target = $region44
        $region43: #{my_conformer_forward.1} parent=11 // pred_region
          %640 = vsyncadd [#allocation5], 0
          %s641 = sshll.u32 %s8, 4
          %s642 = int_to_ptr.hbm [resolvable:$true] %s641
          %s643 = sshll.u32 [#allocation4], 4
          %s644 = int_to_ptr.vmem [resolvable:$true] %s643
          %649 = dma.hbm_to_vmem [thread:$0]  %s642, 3072, %s644, [#allocation5], 192, 192, 12
        $region44: #{my_conformer_forward.1} parent=11 // pred_fallthru
          _
        // Predicated region
        $region45: #{my_conformer_forward.1} parent=11 // pred_check
          %p650 = pneg %p250
        $region46: #{my_conformer_forward.1} parent=11 // pred_check_branch
          %652 = sbr.rel (%p650) target = $region48
        $region47: #{my_conformer_forward.1} parent=11 // pred_region
          _
        $region48: #{my_conformer_forward.1} parent=11 // pred_fallthru
          _
        // Predicated region
        $region49: #{my_conformer_forward.1} parent=11 // pred_check
          %p653 = pneg %p271
        $region50: #{my_conformer_forward.1} parent=11 // pred_check_branch
          %655 = sbr.rel (%p653) target = $region52
        $region51: #{my_conformer_forward.1} parent=11 // pred_region
          _
        $region52: #{my_conformer_forward.1} parent=11 // pred_fallthru
          _
        // Predicated region
        $region53: #{my_conformer_forward.1} parent=11 // pred_check
          %p656 = pneg %p292
        $region54: #{my_conformer_forward.1} parent=11 // pred_check_branch
          %658 = sbr.rel (%p656) target = $region56
        $region55: #{my_conformer_forward.1} parent=11 // pred_region
          _
        $region56: #{my_conformer_forward.1} parent=11 // pred_fallthru
          _
        // Predicated region
        $region57: #{my_conformer_forward.1} parent=11 // pred_check
          %p659 = pneg %p313
        $region58: #{my_conformer_forward.1} parent=11 // pred_check_branch
          %661 = sbr.rel (%p659) target = $region60
        $region59: #{my_conformer_forward.1} parent=11 // pred_region
          _
        $region60: #{my_conformer_forward.1} parent=11 // pred_fallthru
          _
        // Predicated region
        $region61: #{my_conformer_forward.1} parent=11 // pred_check
          %p662 = pneg %p334
        $region62: #{my_conformer_forward.1} parent=11 // pred_check_branch
          %664 = sbr.rel (%p662) target = $region64
        $region63: #{my_conformer_forward.1} parent=11 // pred_region
          %666 = vsyncadd [#allocation5], 0
          %s667 = sshll.u32 %s13, 4
          %s668 = int_to_ptr.hbm [resolvable:$true] %s667
          %s669 = sshll.u32 [#allocation6], 4
          %s670 = int_to_ptr.vmem [resolvable:$true] %s669
          %675 = dma.hbm_to_vmem [thread:$0]  %s668, 2048, %s670, [#allocation5], 128, 128, 8
        $region64: #{my_conformer_forward.1} parent=11 // pred_fallthru
          _
        // Predicated region
        $region65: #{my_conformer_forward.1} parent=11 // pred_check
          %p676 = pneg %p355
        $region66: #{my_conformer_forward.1} parent=11 // pred_check_branch
          %678 = sbr.rel (%p676) target = $region68
        $region67: #{my_conformer_forward.1} parent=11 // pred_region
          _
        $region68: #{my_conformer_forward.1} parent=11 // pred_fallthru
          _
        // Predicated region
        $region69: #{my_conformer_forward.1} parent=11 // pred_check
          %p679 = pneg %p376
        $region70: #{my_conformer_forward.1} parent=11 // pred_check_branch
          %681 = sbr.rel (%p679) target = $region72
        $region71: #{my_conformer_forward.1} parent=11 // pred_region
          _
        $region72: #{my_conformer_forward.1} parent=11 // pred_fallthru
          _
        // Predicated region
        $region73: #{my_conformer_forward.1} parent=11 // pred_check
          %p682 = pneg %p397
        $region74: #{my_conformer_forward.1} parent=11 // pred_check_branch
          %684 = sbr.rel (%p682) target = $region76
        $region75: #{my_conformer_forward.1} parent=11 // pred_region
          _
        $region76: #{my_conformer_forward.1} parent=11 // pred_fallthru
          _
        // Predicated region
        $region77: #{my_conformer_forward.1} parent=11 // pred_check
          %p685 = pneg %p418
        $region78: #{my_conformer_forward.1} parent=11 // pred_check_branch
          %687 = sbr.rel (%p685) target = $region80
        $region79: #{my_conformer_forward.1} parent=11 // pred_region
          _
        $region80: #{my_conformer_forward.1} parent=11 // pred_fallthru
          _
        // Predicated region
        $region81: #{my_conformer_forward.1} parent=11 // pred_check
          %p688 = pneg %p439
        $region82: #{my_conformer_forward.1} parent=11 // pred_check_branch
          %690 = sbr.rel (%p688) target = $region84
        $region83: #{my_conformer_forward.1} parent=11 // pred_region
          _
        $region84: #{my_conformer_forward.1} parent=11 // pred_fallthru
          _
        // Predicated region
        $region85: #{my_conformer_forward.1} parent=11 // pred_check
          %p691 = pneg %p460
        $region86: #{my_conformer_forward.1} parent=11 // pred_check_branch
          %693 = sbr.rel (%p691) target = $region88
        $region87: #{my_conformer_forward.1} parent=11 // pred_region
          %695 = vsyncadd [#allocation8], 0
          %s696 = sshll.u32 %s19, 4
          %s697 = int_to_ptr.hbm [resolvable:$true] %s696
          %s698 = sshll.u32 [#allocation7], 4
          %s699 = int_to_ptr.vmem [resolvable:$true] %s698
          %704 = dma.hbm_to_vmem [thread:$0]  %s697, 2048, %s699, [#allocation8], 64, 64, 4
        $region88: #{my_conformer_forward.1} parent=11 // pred_fallthru
          _
        // Predicated region
        $region89: #{my_conformer_forward.1} parent=11 // pred_check
          %p705 = pneg %p481
        $region90: #{my_conformer_forward.1} parent=11 // pred_check_branch
          %707 = sbr.rel (%p705) target = $region92
        $region91: #{my_conformer_forward.1} parent=11 // pred_region
          _
        $region92: #{my_conformer_forward.1} parent=11 // pred_fallthru
          _
        // Predicated region
        $region93: #{my_conformer_forward.1} parent=11 // pred_check
          %p708 = pneg %p502
        $region94: #{my_conformer_forward.1} parent=11 // pred_check_branch
          %710 = sbr.rel (%p708) target = $region96
        $region95: #{my_conformer_forward.1} parent=11 // pred_region
          _
        $region96: #{my_conformer_forward.1} parent=11 // pred_fallthru
          _
        // Predicated region
        $region97: #{my_conformer_forward.1} parent=11 // pred_check
          %p711 = pneg %p523
        $region98: #{my_conformer_forward.1} parent=11 // pred_check_branch
          %713 = sbr.rel (%p711) target = $region100
        $region99: #{my_conformer_forward.1} parent=11 // pred_region
          %715 = vsyncadd [#allocation8], 0
          %s717 = sshll.u32 %s22, 4
          %s718 = int_to_ptr.hbm [resolvable:$true] %s717
          %s719 = sshll.u32 [#allocation9], 4
          %s720 = int_to_ptr.vmem [resolvable:$true] %s719
          %722 = dma.hbm_to_vmem [thread:$0]  %s718, 64, %s720, [#allocation8]
        $region100: #{my_conformer_forward.1} parent=11 // pred_fallthru
          _
        // Predicated region
        $region101: #{my_conformer_forward.1} parent=11 // pred_check
          %p723 = pneg %p544
        $region102: #{my_conformer_forward.1} parent=11 // pred_check_branch
          %725 = sbr.rel (%p723) target = $region104
        $region103: #{my_conformer_forward.1} parent=11 // pred_region
          %727 = vsyncadd [#allocation11], 0
          %s728 = sshll.u32 %s23, 4
          %s729 = int_to_ptr.hbm [resolvable:$true] %s728
          %s730 = sshll.u32 [#allocation10], 4
          %s731 = int_to_ptr.vmem [resolvable:$true] %s730
          %736 = dma.hbm_to_vmem [thread:$0]  %s729, 4096, %s731, [#allocation11], 64, 64, 4
        $region104: #{my_conformer_forward.1} parent=11 // pred_fallthru
          _
        // Predicated region
        $region105: #{my_conformer_forward.1} parent=11 // pred_check
          %p737 = pneg %p565
        $region106: #{my_conformer_forward.1} parent=11 // pred_check_branch
          %739 = sbr.rel (%p737) target = $region108
        $region107: #{my_conformer_forward.1} parent=11 // pred_region
          %741 = vsyncadd [#allocation11], 0
          %s743 = sshll.u32 %s24, 4
          %s744 = int_to_ptr.hbm [resolvable:$true] %s743
          %s745 = sshll.u32 [#allocation12], 4
          %s746 = int_to_ptr.vmem [resolvable:$true] %s745
          %748 = dma.hbm_to_vmem [thread:$0]  %s744, 16, %s746, [#allocation11]
        $region108: #{my_conformer_forward.1} parent=11 // pred_fallthru
          _
      $region12: #{my_conformer_forward.1} parent=5 // pred_fallthru
        _
      %p749 = scmp.lt.s32.totalorder %s35, 2
      // Predicated region
      $region109: #{my_conformer_forward.1} parent=5 // pred_check
        %p750 = pneg %p749
      $region110: #{my_conformer_forward.1} parent=5 // pred_check_branch
        %752 = sbr.rel (%p750) target = $region112
      $region111: #{my_conformer_forward.1} parent=5 // pred_region
        // Predicated region
        $region113: #{my_conformer_forward.1} parent=111 // pred_check
          %p753 = pneg %p55
        $region114: #{my_conformer_forward.1} parent=111 // pred_check_branch
          %755 = sbr.rel (%p753) target = $region116
        $region115: #{my_conformer_forward.1} parent=111 // pred_region
          %p756 = scmp.lt.s32.totalorder %s35, 1
          %s757 = scalar_select %p756, %s35, 1
          %s758 = smul.addr %s757, 2
          %s759 = smul.addr %s758, 8
          %s760 = scalar_lea.vmem %s0, %s759
        $region116: #{my_conformer_forward.1} parent=111 // pred_fallthru
          _
      $region112: #{my_conformer_forward.1} parent=5 // pred_fallthru
        _
      %p761 = scmp.le.s32.totalorder 1, %s35
      %p762 = scmp.lt.s32.totalorder %s35, 3
      %p763 = pnand %p761, %p762
      %p764 = pneg %p763
      // Predicated region
      $region117: #{my_conformer_forward.1} parent=5 // pred_check
        _
      $region118: #{my_conformer_forward.1} parent=5 // pred_check_branch
        %766 = sbr.rel (%p763) target = $region120
      $region119: #{my_conformer_forward.1} parent=5 // pred_region
        %s767 = ssub.s32 %s35, 1
        // Predicated region
        $region121: #{my_conformer_forward.1} parent=119 // pred_check
          %p768 = pneg %p124
        $region122: #{my_conformer_forward.1} parent=119 // pred_check_branch
          %770 = sbr.rel (%p768) target = $region124
        $region123: #{my_conformer_forward.1} parent=119 // pred_region
          %772 = dma.done [#allocation3], 128
        $region124: #{my_conformer_forward.1} parent=119 // pred_fallthru
          _
        // Predicated region
        $region125: #{my_conformer_forward.1} parent=119 // pred_check
          %p773 = pneg %p229
        $region126: #{my_conformer_forward.1} parent=119 // pred_check_branch
          %775 = sbr.rel (%p773) target = $region128
        $region127: #{my_conformer_forward.1} parent=119 // pred_region
          %777 = dma.done [#allocation5], 3072
        $region128: #{my_conformer_forward.1} parent=119 // pred_fallthru
          _
        // Predicated region
        $region129: #{my_conformer_forward.1} parent=119 // pred_check
          %p778 = pneg %p334
        $region130: #{my_conformer_forward.1} parent=119 // pred_check_branch
          %780 = sbr.rel (%p778) target = $region132
        $region131: #{my_conformer_forward.1} parent=119 // pred_region
          %782 = dma.done [#allocation5], 2048
        $region132: #{my_conformer_forward.1} parent=119 // pred_fallthru
          _
        // Predicated region
        $region133: #{my_conformer_forward.1} parent=119 // pred_check
          %p783 = pneg %p460
        $region134: #{my_conformer_forward.1} parent=119 // pred_check_branch
          %785 = sbr.rel (%p783) target = $region136
        $region135: #{my_conformer_forward.1} parent=119 // pred_region
          %787 = dma.done [#allocation8], 2048
        $region136: #{my_conformer_forward.1} parent=119 // pred_fallthru
          _
        // Predicated region
        $region137: #{my_conformer_forward.1} parent=119 // pred_check
          %p788 = pneg %p523
        $region138: #{my_conformer_forward.1} parent=119 // pred_check_branch
          %790 = sbr.rel (%p788) target = $region140
        $region139: #{my_conformer_forward.1} parent=119 // pred_region
          %792 = dma.done [#allocation8], 64
        $region140: #{my_conformer_forward.1} parent=119 // pred_fallthru
          _
        // Predicated region
        $region141: #{my_conformer_forward.1} parent=119 // pred_check
          %p793 = pneg %p544
        $region142: #{my_conformer_forward.1} parent=119 // pred_check_branch
          %795 = sbr.rel (%p793) target = $region144
        $region143: #{my_conformer_forward.1} parent=119 // pred_region
          %797 = dma.done [#allocation11], 4096
        $region144: #{my_conformer_forward.1} parent=119 // pred_fallthru
          _
        // Predicated region
        $region145: #{my_conformer_forward.1} parent=119 // pred_check
          %p798 = pneg %p565
        $region146: #{my_conformer_forward.1} parent=119 // pred_check_branch
          %800 = sbr.rel (%p798) target = $region148
        $region147: #{my_conformer_forward.1} parent=119 // pred_region
          %802 = dma.done [#allocation11], 16
        $region148: #{my_conformer_forward.1} parent=119 // pred_fallthru
          _
        %p803 = scmp.lt.s32.totalorder %s40, 1
        %s804 = scalar_select %p803, %s40, 1
        %s805 = smul.addr %s804, 2
        %s806 = smul.addr %s805, 8
        %s807 = scalar_lea.vmem %s0, %s806
        %p808 = pneg %p61
        %p809 = pneg %p58
        %p810 = pneg %p82
        %p811 = pneg %p79
        %p812 = pneg %p103
        %p813 = pneg %p100
        %p814 = pneg %p124
        %p815 = pneg %p121
        %p816 = pneg %p145
        %p817 = pneg %p142
        %p818 = pneg %p166
        %p819 = pneg %p163
        %p820 = pneg %p187
        %p821 = pneg %p184
        %p822 = pneg %p208
        %p823 = pneg %p205
        %p824 = pneg %p229
        %p825 = pneg %p226
        %p826 = pneg %p250
        %p827 = pneg %p247
        %p828 = pneg %p271
        %p829 = pneg %p268
        %p830 = pneg %p292
        %p831 = pneg %p289
        %p832 = pneg %p313
        %p833 = pneg %p310
        %p834 = pneg %p334
        %p835 = pneg %p331
        %p836 = pneg %p355
        %p837 = pneg %p352
        %p838 = pneg %p376
        %p839 = pneg %p373
        %p840 = pneg %p397
        %p841 = pneg %p394
        %p842 = pneg %p418
        %p843 = pneg %p415
        %p844 = pneg %p439
        %p845 = pneg %p436
        %p846 = pneg %p460
        %p847 = pneg %p457
        %p848 = pneg %p481
        %p849 = pneg %p478
        %p850 = pneg %p502
        %p851 = pneg %p499
        %p852 = pneg %p523
        %p853 = pneg %p520
        %p854 = pneg %p544
        %p855 = pneg %p541
        %p856 = pneg %p565
        %p857 = pneg %p562
        %p858 = pneg %p591
        %p859 = pneg %p588
        %p860 = scmp.lt.s32.totalorder %s40, 1
        %s861 = scalar_select %p860, %s40, 1
        %s862 = smul.addr %s861, 2
        %s863 = smul.addr %s862, 8
        %s864 = scalar_lea.vmem %s25, %s863
        %p865 = scmp.lt.s32.totalorder %s40, 1
        %s866 = scalar_select %p865, %s40, 1
        %s867 = smul.addr %s866, 2
        %s868 = smul.addr %s867, 8
        %s869 = scalar_lea.vmem %s0, %s868
        %p870 = scmp.lt.s32.totalorder %s40, 1
        %s871 = scalar_select %p870, %s40, 1
        %s872 = smul.addr %s871, 2
        %s873 = smul.addr %s872, 8
        %s874 = scalar_lea.vmem %s25, %s873
        %v876 = vld [vmem:[%s869] sm:$0xff]
        %v877 = vld [vmem:[%s869 + $0x8] sm:$0x1]
        %v878 = vld [vmem:[%s2] sm:$0x1]
        %v879 = vld [vmem:[#allocation2] sm:$0x1]
        %880 = vadd.xlane.f32.xlu0 %v876
        %v881 = vpop.xlane.xlu0 %880
        %vm882 = vcmask 1040384
        %v883 = vsel %vm882, %v877, 0.0
        %884 = vadd.xlane.f32.xlu0 %v883
        %v885 = vpop.xlane.xlu0 %884
        %v886 = vrcp.pop 128.0
        %v887 = vmul.f32 128.0, %v886
        %v888 = vsub.f32 1.0, %v887
        %v889 = vmul.f32 %v886, %v888
        %v890 = vadd.f32 %v886, %v889
        %vm891 = vweird.f32 %v886
        %v892 = vsel %vm891, %v886, %v890
        %v893 = vmul.f32 %v881, %v892
        %v894 = vmul.f32 %v885, %v892
        %v895 = vsub.f32 %v876, %v893
        %v896 = vsub.f32 %v877, %v894
        %v897 = vmul.f32 %v895, %v895
        %v898 = vmul.f32 %v896, %v896
        %899 = vadd.xlane.f32.xlu0 %v897
        %v900 = vpop.xlane.xlu0 %899
        %v901 = vsel %vm882, %v898, 0.0
        %902 = vadd.xlane.f32.xlu0 %v901
        %v903 = vpop.xlane.xlu0 %902
        %v904 = vmul.f32 %v900, %v892
        %v905 = vmul.f32 %v903, %v892
        %v906 = vadd.f32 %v904, 1e-05
        %v907 = vadd.f32 %v905, 1e-05
        %v908 = vrsqrt.pop %v906
        %v909 = vmul.f32 %v908, %v906
        %v910 = vmul.f32 %v909, %v908
        %v911 = vmul.f32 0.5, %v910
        %v912 = vsub.f32 1.5, %v911
        %v913 = vmul.f32 %v908, %v912
        %vm914 = vweird.f32 %v906
        %vm915 = vweird.f32 %v908
        %vm916 = vmor %vm914, %vm915
        %v917 = vsel %vm916, %v908, %v913
        %v918 = vrsqrt.pop %v907
        %v919 = vmul.f32 %v918, %v907
        %v920 = vmul.f32 %v919, %v918
        %v921 = vmul.f32 0.5, %v920
        %v922 = vsub.f32 1.5, %v921
        %v923 = vmul.f32 %v918, %v922
        %vm924 = vweird.f32 %v907
        %vm925 = vweird.f32 %v918
        %vm926 = vmor %vm924, %vm925
        %v927 = vsel %vm926, %v918, %v923
        %v928 = vmul.f32 %v895, %v917
        %v929 = vmul.f32 %v896, %v927
        %v930 = vperm.slane %v878, 0
        %v931 = vmul.f32 %v928, %v930
        %v932 = vmul.f32 %v929, %v930
        %v933 = vperm.slane %v879, 0
        %v934 = vadd.f32 %v931, %v933
        %v935 = vadd.f32 %v932, %v933
        %v936 = vld [vmem:[%s4] sm:$0xff]
        %v937 = vld [vmem:[%s4 + $0x8] sm:$0xff]
        %v938 = vld [vmem:[%s4 + $0x10] sm:$0xff]
        %v939 = vld [vmem:[%s4 + $0x18] sm:$0xff]
        %v940 = vld [vmem:[%s4 + $0x20] sm:$0xff]
        %v941 = vld [vmem:[%s4 + $0x28] sm:$0xff]
        %v942 = vld [vmem:[%s4 + $0x30] sm:$0xff]
        %v943 = vld [vmem:[%s4 + $0x38] sm:$0xff]
        %v944 = vld [vmem:[%s4 + $0x40] sm:$0xff]
        %v945 = vld [vmem:[%s4 + $0x48] sm:$0xff]
        %v946 = vld [vmem:[%s4 + $0x50] sm:$0xff]
        %v947 = vld [vmem:[%s4 + $0x58] sm:$0xff]
        %v948 = vld [vmem:[%s4 + $0x60] sm:$0xff]
        %v949 = vld [vmem:[%s4 + $0x68] sm:$0xff]
        %v950 = vld [vmem:[%s4 + $0x70] sm:$0xff]
        %v951 = vld [vmem:[%s4 + $0x78] sm:$0xff]
        %v952 = vld [vmem:[%s4 + $0x80] sm:$0xff]
        %v953 = vld [vmem:[%s4 + $0x88] sm:$0xff]
        %v954 = vld [vmem:[%s4 + $0x90] sm:$0xff]
        %v955 = vld [vmem:[%s4 + $0x98] sm:$0xff]
        %v956 = vld [vmem:[%s4 + $0xa0] sm:$0xff]
        %v957 = vld [vmem:[%s4 + $0xa8] sm:$0xff]
        %v958 = vld [vmem:[%s4 + $0xb0] sm:$0xff]
        %v959 = vld [vmem:[%s4 + $0xb8] sm:$0xff]
        %v960 = vld [vmem:[%s4 + $0xc0] sm:$0xff]
        %v961 = vld [vmem:[%s4 + $0xc8] sm:$0xff]
        %v962 = vld [vmem:[%s4 + $0xd0] sm:$0xff]
        %v963 = vld [vmem:[%s4 + $0xd8] sm:$0xff]
        %v964 = vld [vmem:[%s4 + $0xe0] sm:$0xff]
        %v965 = vld [vmem:[%s4 + $0xe8] sm:$0xff]
        %v966 = vld [vmem:[%s4 + $0xf0] sm:$0xff]
        %v967 = vld [vmem:[%s4 + $0xf8] sm:$0xff]
        %v968 = vpack.c.bf16 %v935, %v934
        %v969 = vld [vmem:[%s5] sm:$0xf]
        %v971 = vperm.slane %v969, 0
        %v972 = vperm.slane %v969, 1
        %v973 = vperm.slane %v969, 2
        %v974 = vperm.slane %v969, 3
        %v1011 = vunpack.c.l.b16 %v936
        %v1012 = vunpack.c.h.b16 %v936
        %v1013 = vunpack.c.l.b16 %v937
        %v1014 = vunpack.c.h.b16 %v937
        %v1015 = vunpack.c.l.b16 %v938
        %v1016 = vunpack.c.h.b16 %v938
        %v1017 = vunpack.c.l.b16 %v939
        %v1018 = vunpack.c.h.b16 %v939
        %v1019 = vunpack.c.l.b16 %v940
        %v1020 = vunpack.c.h.b16 %v940
        %v1021 = vunpack.c.l.b16 %v941
        %v1022 = vunpack.c.h.b16 %v941
        %v1023 = vunpack.c.l.b16 %v942
        %v1024 = vunpack.c.h.b16 %v942
        %v1025 = vunpack.c.l.b16 %v943
        %v1026 = vunpack.c.h.b16 %v943
        %v1027 = vunpack.c.l.b16 %v944
        %v1028 = vunpack.c.h.b16 %v944
        %v1029 = vunpack.c.l.b16 %v945
        %v1030 = vunpack.c.h.b16 %v945
        %v1031 = vunpack.c.l.b16 %v946
        %v1032 = vunpack.c.h.b16 %v946
        %v1033 = vunpack.c.l.b16 %v947
        %v1034 = vunpack.c.h.b16 %v947
        %v1035 = vunpack.c.l.b16 %v948
        %v1036 = vunpack.c.h.b16 %v948
        %v1037 = vunpack.c.l.b16 %v949
        %v1038 = vunpack.c.h.b16 %v949
        %v1039 = vunpack.c.l.b16 %v950
        %v1040 = vunpack.c.h.b16 %v950
        %v1041 = vunpack.c.l.b16 %v951
        %v1042 = vunpack.c.h.b16 %v951
        %v1043 = vunpack.c.l.b16 %v952
        %v1044 = vunpack.c.h.b16 %v952
        %v1045 = vunpack.c.l.b16 %v953
        %v1046 = vunpack.c.h.b16 %v953
        %v1047 = vunpack.c.l.b16 %v954
        %v1048 = vunpack.c.h.b16 %v954
        %v1049 = vunpack.c.l.b16 %v955
        %v1050 = vunpack.c.h.b16 %v955
        %v1051 = vunpack.c.l.b16 %v956
        %v1052 = vunpack.c.h.b16 %v956
        %v1053 = vunpack.c.l.b16 %v957
        %v1054 = vunpack.c.h.b16 %v957
        %v1055 = vunpack.c.l.b16 %v958
        %v1056 = vunpack.c.h.b16 %v958
        %v1057 = vunpack.c.l.b16 %v959
        %v1058 = vunpack.c.h.b16 %v959
        %v1059 = vunpack.c.l.b16 %v960
        %v1060 = vunpack.c.h.b16 %v960
        %v1061 = vunpack.c.l.b16 %v961
        %v1062 = vunpack.c.h.b16 %v961
        %v1063 = vunpack.c.l.b16 %v962
        %v1064 = vunpack.c.h.b16 %v962
        %v1065 = vunpack.c.l.b16 %v963
        %v1066 = vunpack.c.h.b16 %v963
        %v1067 = vunpack.c.l.b16 %v964
        %v1068 = vunpack.c.h.b16 %v964
        %v1069 = vunpack.c.l.b16 %v965
        %v1070 = vunpack.c.h.b16 %v965
        %v1071 = vunpack.c.l.b16 %v966
        %v1072 = vunpack.c.h.b16 %v966
        %v1073 = vunpack.c.l.b16 %v967
        %v1074 = vunpack.c.h.b16 %v967
        %v1075 = vpack.c.b16 %v1015, %v1011
        %v1076 = vpack.c.b16 %v1016, %v1012
        %v1077 = vpack.c.b16 %v1017, %v1013
        %v1078 = vpack.c.b16 %v1018, %v1014
        %v1079 = vpack.c.b16 %v1023, %v1019
        %v1080 = vpack.c.b16 %v1024, %v1020
        %v1081 = vpack.c.b16 %v1025, %v1021
        %v1082 = vpack.c.b16 %v1026, %v1022
        %v1083 = vpack.c.b16 %v1031, %v1027
        %v1084 = vpack.c.b16 %v1032, %v1028
        %v1085 = vpack.c.b16 %v1033, %v1029
        %v1086 = vpack.c.b16 %v1034, %v1030
        %v1087 = vpack.c.b16 %v1039, %v1035
        %v1088 = vpack.c.b16 %v1040, %v1036
        %v1089 = vpack.c.b16 %v1041, %v1037
        %v1090 = vpack.c.b16 %v1042, %v1038
        %v1091 = vpack.c.b16 %v1047, %v1043
        %v1092 = vpack.c.b16 %v1048, %v1044
        %v1093 = vpack.c.b16 %v1049, %v1045
        %v1094 = vpack.c.b16 %v1050, %v1046
        %v1095 = vpack.c.b16 %v1055, %v1051
        %v1096 = vpack.c.b16 %v1056, %v1052
        %v1097 = vpack.c.b16 %v1057, %v1053
        %v1098 = vpack.c.b16 %v1058, %v1054
        %v1099 = vpack.c.b16 %v1063, %v1059
        %v1100 = vpack.c.b16 %v1064, %v1060
        %v1101 = vpack.c.b16 %v1065, %v1061
        %v1102 = vpack.c.b16 %v1066, %v1062
        %v1103 = vpack.c.b16 %v1071, %v1067
        %v1104 = vpack.c.b16 %v1072, %v1068
        %v1105 = vpack.c.b16 %v1073, %v1069
        %v1106 = vpack.c.b16 %v1074, %v1070
        %1139 = vmatpush.bf16.msra.mxu0 %v1103
        %1140 = vmatpush.bf16.msra.mxu0 %v1099
        %1141 = vmatpush.bf16.msra.mxu0 %v1095
        %1142 = vmatpush.bf16.msra.mxu0 %v1091
        %1143 = vmatpush.bf16.msra.mxu0 %v1087
        %1144 = vmatpush.bf16.msra.mxu0 %v1083
        %1145 = vmatpush.bf16.msra.mxu0 %v1079
        %1146 = vmatpush.bf16.msra.mxu0 %v1075
        %1147 = vmatmul.bf16.gmra.mxu0 %v968
        %v1148 = vpop.f32.mrf.mxu0
        %v1149 = vadd.f32 %v971, %v1148
        %v1150 = vpop.f32.mrf.mxu0
        %v1151 = vadd.f32 %v971, %v1150
        %1152 = vdwg.mxu0
        %1153 = vmatpush.bf16.msra.mxu0 %v1104
        %1154 = vmatpush.bf16.msra.mxu0 %v1100
        %1155 = vmatpush.bf16.msra.mxu0 %v1096
        %1156 = vmatpush.bf16.msra.mxu0 %v1092
        %1157 = vmatpush.bf16.msra.mxu0 %v1088
        %1158 = vmatpush.bf16.msra.mxu0 %v1084
        %1159 = vmatpush.bf16.msra.mxu0 %v1080
        %1160 = vmatpush.bf16.msra.mxu0 %v1076
        %1161 = vmatmul.bf16.gmra.mxu0 %v968
        %v1162 = vpop.f32.mrf.mxu0
        %v1163 = vadd.f32 %v972, %v1162
        %v1164 = vpop.f32.mrf.mxu0
        %v1165 = vadd.f32 %v972, %v1164
        %1166 = vdwg.mxu0
        %1167 = vmatpush.bf16.msra.mxu0 %v1105
        %1168 = vmatpush.bf16.msra.mxu0 %v1101
        %1169 = vmatpush.bf16.msra.mxu0 %v1097
        %1170 = vmatpush.bf16.msra.mxu0 %v1093
        %1171 = vmatpush.bf16.msra.mxu0 %v1089
        %1172 = vmatpush.bf16.msra.mxu0 %v1085
        %1173 = vmatpush.bf16.msra.mxu0 %v1081
        %1174 = vmatpush.bf16.msra.mxu0 %v1077
        %1175 = vmatmul.bf16.gmra.mxu0 %v968
        %v1176 = vpop.f32.mrf.mxu0
        %v1177 = vadd.f32 %v973, %v1176
        %v1178 = vpop.f32.mrf.mxu0
        %v1179 = vadd.f32 %v973, %v1178
        %1180 = vdwg.mxu0
        %1181 = vmatpush.bf16.msra.mxu0 %v1106
        %1182 = vmatpush.bf16.msra.mxu0 %v1102
        %1183 = vmatpush.bf16.msra.mxu0 %v1098
        %1184 = vmatpush.bf16.msra.mxu0 %v1094
        %1185 = vmatpush.bf16.msra.mxu0 %v1090
        %1186 = vmatpush.bf16.msra.mxu0 %v1086
        %1187 = vmatpush.bf16.msra.mxu0 %v1082
        %1188 = vmatpush.bf16.msra.mxu0 %v1078
        %1189 = vmatmul.bf16.gmra.mxu0 %v968
        %v1190 = vpop.f32.mrf.mxu0
        %v1191 = vadd.f32 %v974, %v1190
        %v1192 = vpop.f32.mrf.mxu0
        %v1193 = vadd.f32 %v974, %v1192
        %1194 = vdwg.mxu0
        %v1195 = vsub.f32 0.0, %v1149
        %v1196 = vsub.f32 0.0, %v1163
        %v1197 = vsub.f32 0.0, %v1177
        %v1198 = vsub.f32 0.0, %v1191
        %v1199 = vsub.f32 0.0, %v1151
        %v1200 = vsub.f32 0.0, %v1165
        %v1201 = vsub.f32 0.0, %v1179
        %v1202 = vsub.f32 0.0, %v1193
        %v1203 = vmul.f32 %v1195, 1.442695
        %v1204 = vpow.pop %v1203
        %v1205 = vmul.f32 %v1196, 1.442695
        %v1206 = vpow.pop %v1205
        %v1207 = vmul.f32 %v1197, 1.442695
        %v1208 = vpow.pop %v1207
        %v1209 = vmul.f32 %v1198, 1.442695
        %v1210 = vpow.pop %v1209
        %v1211 = vmul.f32 %v1199, 1.442695
        %v1212 = vpow.pop %v1211
        %v1213 = vmul.f32 %v1200, 1.442695
        %v1214 = vpow.pop %v1213
        %v1215 = vmul.f32 %v1201, 1.442695
        %v1216 = vpow.pop %v1215
        %v1217 = vmul.f32 %v1202, 1.442695
        %v1218 = vpow.pop %v1217
        %v1219 = vadd.f32 %v1204, 1.0
        %v1220 = vadd.f32 %v1206, 1.0
        %v1221 = vadd.f32 %v1208, 1.0
        %v1222 = vadd.f32 %v1210, 1.0
        %v1223 = vadd.f32 %v1212, 1.0
        %v1224 = vadd.f32 %v1214, 1.0
        %v1225 = vadd.f32 %v1216, 1.0
        %v1226 = vadd.f32 %v1218, 1.0
        %v1227 = vrcp.pop %v1219
        %v1228 = vmul.f32 %v1219, %v1227
        %v1229 = vsub.f32 1.0, %v1228
        %v1230 = vmul.f32 %v1227, %v1229
        %v1231 = vadd.f32 %v1227, %v1230
        %vm1232 = vweird.f32 %v1219
        %vm1233 = vweird.f32 %v1227
        %vm1234 = vmor %vm1232, %vm1233
        %v1235 = vsel %vm1234, %v1227, %v1231
        %v1236 = vand.u32 2147483647, %v1219
        %vm1237 = vcmp.eq.f32.partialorder %v1236, 8.507059e+37
        %v1238 = vand.u32 %v1219, 2147483648
        %v1239 = vor.u32 1.1754944e-38, %v1238
        %v1240 = vsel %vm1237, %v1239, %v1235
        %v1241 = vmul.f32 1.0, %v1240
        %v1242 = vrcp.pop %v1220
        %v1243 = vmul.f32 %v1220, %v1242
        %v1244 = vsub.f32 1.0, %v1243
        %v1245 = vmul.f32 %v1242, %v1244
        %v1246 = vadd.f32 %v1242, %v1245
        %vm1247 = vweird.f32 %v1220
        %vm1248 = vweird.f32 %v1242
        %vm1249 = vmor %vm1247, %vm1248
        %v1250 = vsel %vm1249, %v1242, %v1246
        %v1251 = vand.u32 2147483647, %v1220
        %vm1252 = vcmp.eq.f32.partialorder %v1251, 8.507059e+37
        %v1253 = vand.u32 %v1220, 2147483648
        %v1254 = vor.u32 1.1754944e-38, %v1253
        %v1255 = vsel %vm1252, %v1254, %v1250
        %v1256 = vmul.f32 1.0, %v1255
        %v1257 = vrcp.pop %v1221
        %v1258 = vmul.f32 %v1221, %v1257
        %v1259 = vsub.f32 1.0, %v1258
        %v1260 = vmul.f32 %v1257, %v1259
        %v1261 = vadd.f32 %v1257, %v1260
        %vm1262 = vweird.f32 %v1221
        %vm1263 = vweird.f32 %v1257
        %vm1264 = vmor %vm1262, %vm1263
        %v1265 = vsel %vm1264, %v1257, %v1261
        %v1266 = vand.u32 2147483647, %v1221
        %vm1267 = vcmp.eq.f32.partialorder %v1266, 8.507059e+37
        %v1268 = vand.u32 %v1221, 2147483648
        %v1269 = vor.u32 1.1754944e-38, %v1268
        %v1270 = vsel %vm1267, %v1269, %v1265
        %v1271 = vmul.f32 1.0, %v1270
        %v1272 = vrcp.pop %v1222
        %v1273 = vmul.f32 %v1222, %v1272
        %v1274 = vsub.f32 1.0, %v1273
        %v1275 = vmul.f32 %v1272, %v1274
        %v1276 = vadd.f32 %v1272, %v1275
        %vm1277 = vweird.f32 %v1222
        %vm1278 = vweird.f32 %v1272
        %vm1279 = vmor %vm1277, %vm1278
        %v1280 = vsel %vm1279, %v1272, %v1276
        %v1281 = vand.u32 2147483647, %v1222
        %vm1282 = vcmp.eq.f32.partialorder %v1281, 8.507059e+37
        %v1283 = vand.u32 %v1222, 2147483648
        %v1284 = vor.u32 1.1754944e-38, %v1283
        %v1285 = vsel %vm1282, %v1284, %v1280
        %v1286 = vmul.f32 1.0, %v1285
        %v1287 = vrcp.pop %v1223
        %v1288 = vmul.f32 %v1223, %v1287
        %v1289 = vsub.f32 1.0, %v1288
        %v1290 = vmul.f32 %v1287, %v1289
        %v1291 = vadd.f32 %v1287, %v1290
        %vm1292 = vweird.f32 %v1223
        %vm1293 = vweird.f32 %v1287
        %vm1294 = vmor %vm1292, %vm1293
        %v1295 = vsel %vm1294, %v1287, %v1291
        %v1296 = vand.u32 2147483647, %v1223
        %vm1297 = vcmp.eq.f32.partialorder %v1296, 8.507059e+37
        %v1298 = vand.u32 %v1223, 2147483648
        %v1299 = vor.u32 1.1754944e-38, %v1298
        %v1300 = vsel %vm1297, %v1299, %v1295
        %v1301 = vmul.f32 1.0, %v1300
        %v1302 = vrcp.pop %v1224
        %v1303 = vmul.f32 %v1224, %v1302
        %v1304 = vsub.f32 1.0, %v1303
        %v1305 = vmul.f32 %v1302, %v1304
        %v1306 = vadd.f32 %v1302, %v1305
        %vm1307 = vweird.f32 %v1224
        %vm1308 = vweird.f32 %v1302
        %vm1309 = vmor %vm1307, %vm1308
        %v1310 = vsel %vm1309, %v1302, %v1306
        %v1311 = vand.u32 2147483647, %v1224
        %vm1312 = vcmp.eq.f32.partialorder %v1311, 8.507059e+37
        %v1313 = vand.u32 %v1224, 2147483648
        %v1314 = vor.u32 1.1754944e-38, %v1313
        %v1315 = vsel %vm1312, %v1314, %v1310
        %v1316 = vmul.f32 1.0, %v1315
        %v1317 = vrcp.pop %v1225
        %v1318 = vmul.f32 %v1225, %v1317
        %v1319 = vsub.f32 1.0, %v1318
        %v1320 = vmul.f32 %v1317, %v1319
        %v1321 = vadd.f32 %v1317, %v1320
        %vm1322 = vweird.f32 %v1225
        %vm1323 = vweird.f32 %v1317
        %vm1324 = vmor %vm1322, %vm1323
        %v1325 = vsel %vm1324, %v1317, %v1321
        %v1326 = vand.u32 2147483647, %v1225
        %vm1327 = vcmp.eq.f32.partialorder %v1326, 8.507059e+37
        %v1328 = vand.u32 %v1225, 2147483648
        %v1329 = vor.u32 1.1754944e-38, %v1328
        %v1330 = vsel %vm1327, %v1329, %v1325
        %v1331 = vmul.f32 1.0, %v1330
        %v1332 = vrcp.pop %v1226
        %v1333 = vmul.f32 %v1226, %v1332
        %v1334 = vsub.f32 1.0, %v1333
        %v1335 = vmul.f32 %v1332, %v1334
        %v1336 = vadd.f32 %v1332, %v1335
        %vm1337 = vweird.f32 %v1226
        %vm1338 = vweird.f32 %v1332
        %vm1339 = vmor %vm1337, %vm1338
        %v1340 = vsel %vm1339, %v1332, %v1336
        %v1341 = vand.u32 2147483647, %v1226
        %vm1342 = vcmp.eq.f32.partialorder %v1341, 8.507059e+37
        %v1343 = vand.u32 %v1226, 2147483648
        %v1344 = vor.u32 1.1754944e-38, %v1343
        %v1345 = vsel %vm1342, %v1344, %v1340
        %v1346 = vmul.f32 1.0, %v1345
        %v1347 = vmul.f32 %v1149, %v1241
        %v1348 = vmul.f32 %v1163, %v1256
        %v1349 = vmul.f32 %v1177, %v1271
        %v1350 = vmul.f32 %v1191, %v1286
        %v1351 = vmul.f32 %v1151, %v1301
        %v1352 = vmul.f32 %v1165, %v1316
        %v1353 = vmul.f32 %v1179, %v1331
        %v1354 = vmul.f32 %v1193, %v1346
        %v1355 = vld [vmem:[%s6] sm:$0xf]
        %v1356 = vld [vmem:[%s6 + $0x4] sm:$0xf]
        %v1357 = vld [vmem:[%s6 + $0x8] sm:$0xf]
        %v1358 = vld [vmem:[%s6 + $0xc] sm:$0xf]
        %v1359 = vld [vmem:[%s6 + $0x10] sm:$0xf]
        %v1360 = vld [vmem:[%s6 + $0x14] sm:$0xf]
        %v1361 = vld [vmem:[%s6 + $0x18] sm:$0xf]
        %v1362 = vld [vmem:[%s6 + $0x1c] sm:$0xf]
        %v1363 = vld [vmem:[%s6 + $0x20] sm:$0xf]
        %v1364 = vld [vmem:[%s6 + $0x24] sm:$0xf]
        %v1365 = vld [vmem:[%s6 + $0x28] sm:$0xf]
        %v1366 = vld [vmem:[%s6 + $0x2c] sm:$0xf]
        %v1367 = vld [vmem:[%s6 + $0x30] sm:$0xf]
        %v1368 = vld [vmem:[%s6 + $0x34] sm:$0xf]
        %v1369 = vld [vmem:[%s6 + $0x38] sm:$0xf]
        %v1370 = vld [vmem:[%s6 + $0x3c] sm:$0xf]
        %v1371 = vld [vmem:[%s6 + $0x40] sm:$0xf]
        %v1372 = vld [vmem:[%s6 + $0x44] sm:$0xf]
        %v1373 = vld [vmem:[%s6 + $0x48] sm:$0xf]
        %v1374 = vld [vmem:[%s6 + $0x4c] sm:$0xf]
        %v1375 = vld [vmem:[%s6 + $0x50] sm:$0xf]
        %v1376 = vld [vmem:[%s6 + $0x54] sm:$0xf]
        %v1377 = vld [vmem:[%s6 + $0x58] sm:$0xf]
        %v1378 = vld [vmem:[%s6 + $0x5c] sm:$0xf]
        %v1379 = vld [vmem:[%s6 + $0x60] sm:$0xf]
        %v1380 = vld [vmem:[%s6 + $0x64] sm:$0xf]
        %v1381 = vld [vmem:[%s6 + $0x68] sm:$0xf]
        %v1382 = vld [vmem:[%s6 + $0x6c] sm:$0xf]
        %v1383 = vld [vmem:[%s6 + $0x70] sm:$0xf]
        %v1384 = vld [vmem:[%s6 + $0x74] sm:$0xf]
        %v1385 = vld [vmem:[%s6 + $0x78] sm:$0xf]
        %v1386 = vld [vmem:[%s6 + $0x7c] sm:$0xf]
        %v1387 = vld [vmem:[%s6 + $0x80] sm:$0xf]
        %v1388 = vld [vmem:[%s6 + $0x84] sm:$0xf]
        %v1389 = vld [vmem:[%s6 + $0x88] sm:$0xf]
        %v1390 = vld [vmem:[%s6 + $0x8c] sm:$0xf]
        %v1391 = vld [vmem:[%s6 + $0x90] sm:$0xf]
        %v1392 = vld [vmem:[%s6 + $0x94] sm:$0xf]
        %v1393 = vld [vmem:[%s6 + $0x98] sm:$0xf]
        %v1394 = vld [vmem:[%s6 + $0x9c] sm:$0xf]
        %v1395 = vld [vmem:[%s6 + $0xa0] sm:$0xf]
        %v1396 = vld [vmem:[%s6 + $0xa4] sm:$0xf]
        %v1397 = vld [vmem:[%s6 + $0xa8] sm:$0xf]
        %v1398 = vld [vmem:[%s6 + $0xac] sm:$0xf]
        %v1399 = vld [vmem:[%s6 + $0xb0] sm:$0xf]
        %v1400 = vld [vmem:[%s6 + $0xb4] sm:$0xf]
        %v1401 = vld [vmem:[%s6 + $0xb8] sm:$0xf]
        %v1402 = vld [vmem:[%s6 + $0xbc] sm:$0xf]
        %v1403 = vld [vmem:[%s6 + $0xc0] sm:$0xf]
        %v1404 = vld [vmem:[%s6 + $0xc4] sm:$0xf]
        %v1405 = vld [vmem:[%s6 + $0xc8] sm:$0xf]
        %v1406 = vld [vmem:[%s6 + $0xcc] sm:$0xf]
        %v1407 = vld [vmem:[%s6 + $0xd0] sm:$0xf]
        %v1408 = vld [vmem:[%s6 + $0xd4] sm:$0xf]
        %v1409 = vld [vmem:[%s6 + $0xd8] sm:$0xf]
        %v1410 = vld [vmem:[%s6 + $0xdc] sm:$0xf]
        %v1411 = vld [vmem:[%s6 + $0xe0] sm:$0xf]
        %v1412 = vld [vmem:[%s6 + $0xe4] sm:$0xf]
        %v1413 = vld [vmem:[%s6 + $0xe8] sm:$0xf]
        %v1414 = vld [vmem:[%s6 + $0xec] sm:$0xf]
        %v1415 = vld [vmem:[%s6 + $0xf0] sm:$0xf]
        %v1416 = vld [vmem:[%s6 + $0xf4] sm:$0xf]
        %v1417 = vld [vmem:[%s6 + $0xf8] sm:$0xf]
        %v1418 = vld [vmem:[%s6 + $0xfc] sm:$0xf]
        %v1419 = vpack.c.bf16 %v1351, %v1347
        %v1420 = vpack.c.bf16 %v1352, %v1348
        %v1421 = vpack.c.bf16 %v1353, %v1349
        %v1422 = vpack.c.bf16 %v1354, %v1350
        %v1423 = vld [vmem:[%s7] sm:$0x1]
        %v1425 = vperm.slane %v1423, 0
        %v1491 = vunpack.c.l.b16 %v1355
        %v1492 = vunpack.c.l.b16 %v1356
        %v1493 = vunpack.c.l.b16 %v1357
        %v1494 = vunpack.c.l.b16 %v1358
        %v1495 = vunpack.c.l.b16 %v1359
        %v1496 = vunpack.c.l.b16 %v1360
        %v1497 = vunpack.c.l.b16 %v1361
        %v1498 = vunpack.c.l.b16 %v1362
        %v1499 = vunpack.c.l.b16 %v1363
        %v1500 = vunpack.c.l.b16 %v1364
        %v1501 = vunpack.c.l.b16 %v1365
        %v1502 = vunpack.c.l.b16 %v1366
        %v1503 = vunpack.c.l.b16 %v1367
        %v1504 = vunpack.c.l.b16 %v1368
        %v1505 = vunpack.c.l.b16 %v1369
        %v1506 = vunpack.c.l.b16 %v1370
        %v1507 = vunpack.c.l.b16 %v1371
        %v1508 = vunpack.c.l.b16 %v1372
        %v1509 = vunpack.c.l.b16 %v1373
        %v1510 = vunpack.c.l.b16 %v1374
        %v1511 = vunpack.c.l.b16 %v1375
        %v1512 = vunpack.c.l.b16 %v1376
        %v1513 = vunpack.c.l.b16 %v1377
        %v1514 = vunpack.c.l.b16 %v1378
        %v1515 = vunpack.c.l.b16 %v1379
        %v1516 = vunpack.c.l.b16 %v1380
        %v1517 = vunpack.c.l.b16 %v1381
        %v1518 = vunpack.c.l.b16 %v1382
        %v1519 = vunpack.c.l.b16 %v1383
        %v1520 = vunpack.c.l.b16 %v1384
        %v1521 = vunpack.c.l.b16 %v1385
        %v1522 = vunpack.c.l.b16 %v1386
        %v1523 = vunpack.c.l.b16 %v1387
        %v1524 = vunpack.c.l.b16 %v1388
        %v1525 = vunpack.c.l.b16 %v1389
        %v1526 = vunpack.c.l.b16 %v1390
        %v1527 = vunpack.c.l.b16 %v1391
        %v1528 = vunpack.c.l.b16 %v1392
        %v1529 = vunpack.c.l.b16 %v1393
        %v1530 = vunpack.c.l.b16 %v1394
        %v1531 = vunpack.c.l.b16 %v1395
        %v1532 = vunpack.c.l.b16 %v1396
        %v1533 = vunpack.c.l.b16 %v1397
        %v1534 = vunpack.c.l.b16 %v1398
        %v1535 = vunpack.c.l.b16 %v1399
        %v1536 = vunpack.c.l.b16 %v1400
        %v1537 = vunpack.c.l.b16 %v1401
        %v1538 = vunpack.c.l.b16 %v1402
        %v1539 = vunpack.c.l.b16 %v1403
        %v1540 = vunpack.c.l.b16 %v1404
        %v1541 = vunpack.c.l.b16 %v1405
        %v1542 = vunpack.c.l.b16 %v1406
        %v1543 = vunpack.c.l.b16 %v1407
        %v1544 = vunpack.c.l.b16 %v1408
        %v1545 = vunpack.c.l.b16 %v1409
        %v1546 = vunpack.c.l.b16 %v1410
        %v1547 = vunpack.c.l.b16 %v1411
        %v1548 = vunpack.c.l.b16 %v1412
        %v1549 = vunpack.c.l.b16 %v1413
        %v1550 = vunpack.c.l.b16 %v1414
        %v1551 = vunpack.c.l.b16 %v1415
        %v1552 = vunpack.c.l.b16 %v1416
        %v1553 = vunpack.c.l.b16 %v1417
        %v1554 = vunpack.c.l.b16 %v1418
        %v1555 = vpack.c.b16 %v1492, %v1491
        %v1556 = vpack.c.b16 %v1494, %v1493
        %v1557 = vpack.c.b16 %v1496, %v1495
        %v1558 = vpack.c.b16 %v1498, %v1497
        %v1559 = vpack.c.b16 %v1500, %v1499
        %v1560 = vpack.c.b16 %v1502, %v1501
        %v1561 = vpack.c.b16 %v1504, %v1503
        %v1562 = vpack.c.b16 %v1506, %v1505
        %v1563 = vpack.c.b16 %v1508, %v1507
        %v1564 = vpack.c.b16 %v1510, %v1509
        %v1565 = vpack.c.b16 %v1512, %v1511
        %v1566 = vpack.c.b16 %v1514, %v1513
        %v1567 = vpack.c.b16 %v1516, %v1515
        %v1568 = vpack.c.b16 %v1518, %v1517
        %v1569 = vpack.c.b16 %v1520, %v1519
        %v1570 = vpack.c.b16 %v1522, %v1521
        %v1571 = vpack.c.b16 %v1524, %v1523
        %v1572 = vpack.c.b16 %v1526, %v1525
        %v1573 = vpack.c.b16 %v1528, %v1527
        %v1574 = vpack.c.b16 %v1530, %v1529
        %v1575 = vpack.c.b16 %v1532, %v1531
        %v1576 = vpack.c.b16 %v1534, %v1533
        %v1577 = vpack.c.b16 %v1536, %v1535
        %v1578 = vpack.c.b16 %v1538, %v1537
        %v1579 = vpack.c.b16 %v1540, %v1539
        %v1580 = vpack.c.b16 %v1542, %v1541
        %v1581 = vpack.c.b16 %v1544, %v1543
        %v1582 = vpack.c.b16 %v1546, %v1545
        %v1583 = vpack.c.b16 %v1548, %v1547
        %v1584 = vpack.c.b16 %v1550, %v1549
        %v1585 = vpack.c.b16 %v1552, %v1551
        %v1586 = vpack.c.b16 %v1554, %v1553
        %1619 = vmatpush.bf16.msra.mxu0 %v1562
        %1620 = vmatpush.bf16.msra.mxu0 %v1561
        %1621 = vmatpush.bf16.msra.mxu0 %v1560
        %1622 = vmatpush.bf16.msra.mxu0 %v1559
        %1623 = vmatpush.bf16.msra.mxu0 %v1558
        %1624 = vmatpush.bf16.msra.mxu0 %v1557
        %1625 = vmatpush.bf16.msra.mxu0 %v1556
        %1626 = vmatpush.bf16.msra.mxu0 %v1555
        %1627 = vmatmul.bf16.gmra.mxu0 %v1419
        %v1628 = vpop.f32.mrf.mxu0
        %v1629 = vadd.f32 %v1425, %v1628
        %v1630 = vpop.f32.mrf.mxu0
        %v1631 = vadd.f32 %v1425, %v1630
        %1632 = vdwg.mxu0
        %1633 = vmatpush.bf16.msra.mxu0 %v1570
        %1634 = vmatpush.bf16.msra.mxu0 %v1569
        %1635 = vmatpush.bf16.msra.mxu0 %v1568
        %1636 = vmatpush.bf16.msra.mxu0 %v1567
        %1637 = vmatpush.bf16.msra.mxu0 %v1566
        %1638 = vmatpush.bf16.msra.mxu0 %v1565
        %1639 = vmatpush.bf16.msra.mxu0 %v1564
        %1640 = vmatpush.bf16.msra.mxu0 %v1563
        %1641 = vmatmul.bf16.gmra.mxu0 %v1420
        %v1642 = vpop.f32.mrf.mxu0
        %v1643 = vadd.f32 %v1629, %v1642
        %v1644 = vpop.f32.mrf.mxu0
        %v1645 = vadd.f32 %v1631, %v1644
        %1646 = vdwg.mxu0
        %1647 = vmatpush.bf16.msra.mxu0 %v1578
        %1648 = vmatpush.bf16.msra.mxu0 %v1577
        %1649 = vmatpush.bf16.msra.mxu0 %v1576
        %1650 = vmatpush.bf16.msra.mxu0 %v1575
        %1651 = vmatpush.bf16.msra.mxu0 %v1574
        %1652 = vmatpush.bf16.msra.mxu0 %v1573
        %1653 = vmatpush.bf16.msra.mxu0 %v1572
        %1654 = vmatpush.bf16.msra.mxu0 %v1571
        %1655 = vmatmul.bf16.gmra.mxu0 %v1421
        %v1656 = vpop.f32.mrf.mxu0
        %v1657 = vadd.f32 %v1643, %v1656
        %v1658 = vpop.f32.mrf.mxu0
        %v1659 = vadd.f32 %v1645, %v1658
        %1660 = vdwg.mxu0
        %1661 = vmatpush.bf16.msra.mxu0 %v1586
        %1662 = vmatpush.bf16.msra.mxu0 %v1585
        %1663 = vmatpush.bf16.msra.mxu0 %v1584
        %1664 = vmatpush.bf16.msra.mxu0 %v1583
        %1665 = vmatpush.bf16.msra.mxu0 %v1582
        %1666 = vmatpush.bf16.msra.mxu0 %v1581
        %1667 = vmatpush.bf16.msra.mxu0 %v1580
        %1668 = vmatpush.bf16.msra.mxu0 %v1579
        %1669 = vmatmul.bf16.gmra.mxu0 %v1422
        %v1670 = vpop.f32.mrf.mxu0
        %v1671 = vadd.f32 %v1657, %v1670
        %v1672 = vpop.f32.mrf.mxu0
        %v1673 = vadd.f32 %v1659, %v1672
        %1674 = vdwg.mxu0
        %v1675 = vmul.f32 %v1671, 0.5
        %v1676 = vmul.f32 %v1673, 0.5
        %v1677 = vadd.f32 %v876, %v1675
        %v1678 = vadd.f32 %v877, %v1676
        %v1679 = vld [vmem:[%s2 + $0x1] sm:$0x1]
        %v1680 = vld [vmem:[#allocation2 + $0x1] sm:$0x1]
        %1681 = vadd.xlane.f32.xlu0 %v1677
        %v1682 = vpop.xlane.xlu0 %1681
        %v1683 = vsel %vm882, %v1678, 0.0
        %1684 = vadd.xlane.f32.xlu0 %v1683
        %v1685 = vpop.xlane.xlu0 %1684
        %v1686 = vmul.f32 %v1682, %v892
        %v1687 = vmul.f32 %v1685, %v892
        %v1688 = vsub.f32 %v1677, %v1686
        %v1689 = vsub.f32 %v1678, %v1687
        %v1690 = vmul.f32 %v1688, %v1688
        %v1691 = vmul.f32 %v1689, %v1689
        %1692 = vadd.xlane.f32.xlu0 %v1690
        %v1693 = vpop.xlane.xlu0 %1692
        %v1694 = vsel %vm882, %v1691, 0.0
        %1695 = vadd.xlane.f32.xlu0 %v1694
        %v1696 = vpop.xlane.xlu0 %1695
        %v1697 = vmul.f32 %v1693, %v892
        %v1698 = vmul.f32 %v1696, %v892
        %v1699 = vadd.f32 %v1697, 1e-05
        %v1700 = vadd.f32 %v1698, 1e-05
        %v1701 = vrsqrt.pop %v1699
        %v1702 = vmul.f32 %v1701, %v1699
        %v1703 = vmul.f32 %v1702, %v1701
        %v1704 = vmul.f32 0.5, %v1703
        %v1705 = vsub.f32 1.5, %v1704
        %v1706 = vmul.f32 %v1701, %v1705
        %vm1707 = vweird.f32 %v1699
        %vm1708 = vweird.f32 %v1701
        %vm1709 = vmor %vm1707, %vm1708
        %v1710 = vsel %vm1709, %v1701, %v1706
        %v1711 = vrsqrt.pop %v1700
        %v1712 = vmul.f32 %v1711, %v1700
        %v1713 = vmul.f32 %v1712, %v1711
        %v1714 = vmul.f32 0.5, %v1713
        %v1715 = vsub.f32 1.5, %v1714
        %v1716 = vmul.f32 %v1711, %v1715
        %vm1717 = vweird.f32 %v1700
        %vm1718 = vweird.f32 %v1711
        %vm1719 = vmor %vm1717, %vm1718
        %v1720 = vsel %vm1719, %v1711, %v1716
        %v1721 = vmul.f32 %v1688, %v1710
        %v1722 = vmul.f32 %v1689, %v1720
        %v1723 = vperm.slane %v1679, 0
        %v1724 = vmul.f32 %v1721, %v1723
        %v1725 = vmul.f32 %v1722, %v1723
        %v1726 = vperm.slane %v1680, 0
        %v1727 = vadd.f32 %v1724, %v1726
        %v1728 = vadd.f32 %v1725, %v1726
        %v1729 = vld [vmem:[%s1] sm:$0xf]
        %v1730 = vld [vmem:[%s1 + $0x4] sm:$0xf]
        %v1731 = vld [vmem:[%s1 + $0x8] sm:$0x1]
        %v1732 = vld [vmem:[#allocation4] sm:$0xff]
        %v1733 = vld [vmem:[#allocation4 + $0x8] sm:$0xf]
        %v1734 = vld [vmem:[#allocation4 + $0xc] sm:$0xff]
        %v1735 = vld [vmem:[#allocation4 + $0x14] sm:$0xf]
        %v1736 = vld [vmem:[#allocation4 + $0x18] sm:$0xff]
        %v1737 = vld [vmem:[#allocation4 + $0x20] sm:$0xf]
        %v1738 = vld [vmem:[#allocation4 + $0x24] sm:$0xff]
        %v1739 = vld [vmem:[#allocation4 + $0x2c] sm:$0xf]
        %v1740 = vld [vmem:[#allocation4 + $0x30] sm:$0xff]
        %v1741 = vld [vmem:[#allocation4 + $0x38] sm:$0xf]
        %v1742 = vld [vmem:[#allocation4 + $0x3c] sm:$0xff]
        %v1743 = vld [vmem:[#allocation4 + $0x44] sm:$0xf]
        %v1744 = vld [vmem:[#allocation4 + $0x48] sm:$0xff]
        %v1745 = vld [vmem:[#allocation4 + $0x50] sm:$0xf]
        %v1746 = vld [vmem:[#allocation4 + $0x54] sm:$0xff]
        %v1747 = vld [vmem:[#allocation4 + $0x5c] sm:$0xf]
        %v1748 = vld [vmem:[#allocation4 + $0x60] sm:$0xff]
        %v1749 = vld [vmem:[#allocation4 + $0x68] sm:$0xf]
        %v1750 = vld [vmem:[#allocation4 + $0x6c] sm:$0xff]
        %v1751 = vld [vmem:[#allocation4 + $0x74] sm:$0xf]
        %v1752 = vld [vmem:[#allocation4 + $0x78] sm:$0xff]
        %v1753 = vld [vmem:[#allocation4 + $0x80] sm:$0xf]
        %v1754 = vld [vmem:[#allocation4 + $0x84] sm:$0xff]
        %v1755 = vld [vmem:[#allocation4 + $0x8c] sm:$0xf]
        %v1756 = vld [vmem:[#allocation4 + $0x90] sm:$0xff]
        %v1757 = vld [vmem:[#allocation4 + $0x98] sm:$0xf]
        %v1758 = vld [vmem:[#allocation4 + $0x9c] sm:$0xff]
        %v1759 = vld [vmem:[#allocation4 + $0xa4] sm:$0xf]
        %v1760 = vld [vmem:[#allocation4 + $0xa8] sm:$0xff]
        %v1761 = vld [vmem:[#allocation4 + $0xb0] sm:$0xf]
        %v1762 = vld [vmem:[#allocation4 + $0xb4] sm:$0xff]
        %v1763 = vld [vmem:[#allocation4 + $0xbc] sm:$0xf]
        %v1764 = vpack.c.bf16 %v1728, %v1727
        %v1797 = vunpack.c.l.b16 %v1732
        %v1798 = vunpack.c.h.b16 %v1732
        %v1799 = vunpack.c.l.b16 %v1733
        %v1800 = vunpack.c.l.b16 %v1734
        %v1801 = vunpack.c.h.b16 %v1734
        %v1802 = vunpack.c.l.b16 %v1735
        %v1803 = vunpack.c.l.b16 %v1736
        %v1804 = vunpack.c.h.b16 %v1736
        %v1805 = vunpack.c.l.b16 %v1737
        %v1806 = vunpack.c.l.b16 %v1738
        %v1807 = vunpack.c.h.b16 %v1738
        %v1808 = vunpack.c.l.b16 %v1739
        %v1809 = vunpack.c.l.b16 %v1740
        %v1810 = vunpack.c.h.b16 %v1740
        %v1811 = vunpack.c.l.b16 %v1741
        %v1812 = vunpack.c.l.b16 %v1742
        %v1813 = vunpack.c.h.b16 %v1742
        %v1814 = vunpack.c.l.b16 %v1743
        %v1815 = vunpack.c.l.b16 %v1744
        %v1816 = vunpack.c.h.b16 %v1744
        %v1817 = vunpack.c.l.b16 %v1745
        %v1818 = vunpack.c.l.b16 %v1746
        %v1819 = vunpack.c.h.b16 %v1746
        %v1820 = vunpack.c.l.b16 %v1747
        %v1821 = vunpack.c.l.b16 %v1748
        %v1822 = vunpack.c.h.b16 %v1748
        %v1823 = vunpack.c.l.b16 %v1749
        %v1824 = vunpack.c.l.b16 %v1750
        %v1825 = vunpack.c.h.b16 %v1750
        %v1826 = vunpack.c.l.b16 %v1751
        %v1827 = vunpack.c.l.b16 %v1752
        %v1828 = vunpack.c.h.b16 %v1752
        %v1829 = vunpack.c.l.b16 %v1753
        %v1830 = vunpack.c.l.b16 %v1754
        %v1831 = vunpack.c.h.b16 %v1754
        %v1832 = vunpack.c.l.b16 %v1755
        %v1833 = vunpack.c.l.b16 %v1756
        %v1834 = vunpack.c.h.b16 %v1756
        %v1835 = vunpack.c.l.b16 %v1757
        %v1836 = vunpack.c.l.b16 %v1758
        %v1837 = vunpack.c.h.b16 %v1758
        %v1838 = vunpack.c.l.b16 %v1759
        %v1839 = vunpack.c.l.b16 %v1760
        %v1840 = vunpack.c.h.b16 %v1760
        %v1841 = vunpack.c.l.b16 %v1761
        %v1842 = vunpack.c.l.b16 %v1762
        %v1843 = vunpack.c.h.b16 %v1762
        %v1844 = vunpack.c.l.b16 %v1763
        %v1845 = vpack.c.b16 %v1800, %v1797
        %v1846 = vpack.c.b16 %v1801, %v1798
        %v1847 = vpack.c.b16 %v1802, %v1799
        %v1848 = vpack.c.b16 %v1806, %v1803
        %v1849 = vpack.c.b16 %v1807, %v1804
        %v1850 = vpack.c.b16 %v1808, %v1805
        %v1851 = vpack.c.b16 %v1812, %v1809
        %v1852 = vpack.c.b16 %v1813, %v1810
        %v1853 = vpack.c.b16 %v1814, %v1811
        %v1854 = vpack.c.b16 %v1818, %v1815
        %v1855 = vpack.c.b16 %v1819, %v1816
        %v1856 = vpack.c.b16 %v1820, %v1817
        %v1857 = vpack.c.b16 %v1824, %v1821
        %v1858 = vpack.c.b16 %v1825, %v1822
        %v1859 = vpack.c.b16 %v1826, %v1823
        %v1860 = vpack.c.b16 %v1830, %v1827
        %v1861 = vpack.c.b16 %v1831, %v1828
        %v1862 = vpack.c.b16 %v1832, %v1829
        %v1863 = vpack.c.b16 %v1836, %v1833
        %v1864 = vpack.c.b16 %v1837, %v1834
        %v1865 = vpack.c.b16 %v1838, %v1835
        %v1866 = vpack.c.b16 %v1842, %v1839
        %v1867 = vpack.c.b16 %v1843, %v1840
        %v1868 = vpack.c.b16 %v1844, %v1841
        %1893 = vmatpush.bf16.msra.mxu0 %v1866
        %1894 = vmatpush.bf16.msra.mxu0 %v1863
        %1895 = vmatpush.bf16.msra.mxu0 %v1860
        %1896 = vmatpush.bf16.msra.mxu0 %v1857
        %1897 = vmatpush.bf16.msra.mxu0 %v1854
        %1898 = vmatpush.bf16.msra.mxu0 %v1851
        %1899 = vmatpush.bf16.msra.mxu0 %v1848
        %1900 = vmatpush.bf16.msra.mxu0 %v1845
        %1901 = vmatmul.bf16.gmra.mxu0 %v1764
        %v1902 = vpop.f32.mrf.mxu0
        %v1903 = vadd.f32 0.0, %v1902
        %v1904 = vpop.f32.mrf.mxu0
        %v1905 = vadd.f32 0.0, %v1904
        %1906 = vdwg.mxu0
        %1907 = vmatpush.bf16.msra.mxu0 %v1867
        %1908 = vmatpush.bf16.msra.mxu0 %v1864
        %1909 = vmatpush.bf16.msra.mxu0 %v1861
        %1910 = vmatpush.bf16.msra.mxu0 %v1858
        %1911 = vmatpush.bf16.msra.mxu0 %v1855
        %1912 = vmatpush.bf16.msra.mxu0 %v1852
        %1913 = vmatpush.bf16.msra.mxu0 %v1849
        %1914 = vmatpush.bf16.msra.mxu0 %v1846
        %1915 = vmatmul.bf16.gmra.mxu0 %v1764
        %v1916 = vpop.f32.mrf.mxu0
        %v1917 = vadd.f32 0.0, %v1916
        %v1918 = vpop.f32.mrf.mxu0
        %v1919 = vadd.f32 0.0, %v1918
        %1920 = vdwg.mxu0
        %1921 = vmatpush.bf16.msra.mxu0 %v1868
        %1922 = vmatpush.bf16.msra.mxu0 %v1865
        %1923 = vmatpush.bf16.msra.mxu0 %v1862
        %1924 = vmatpush.bf16.msra.mxu0 %v1859
        %1925 = vmatpush.bf16.msra.mxu0 %v1856
        %1926 = vmatpush.bf16.msra.mxu0 %v1853
        %1927 = vmatpush.bf16.msra.mxu0 %v1850
        %1928 = vmatpush.bf16.msra.mxu0 %v1847
        %1929 = vmatmul.bf16.gmra.mxu0 %v1764
        %v1930 = vpop.f32.mrf.mxu0
        %v1931 = vadd.f32 0.0, %v1930
        %v1932 = vpop.f32.mrf.mxu0
        %v1933 = vadd.f32 0.0, %v1932
        %1934 = vdwg.mxu0
        %v1935 = vlaneseq
        %v1936 = vshrl.u32 %v1935, 7
        %v1937 = vadd.s32 %v1936, 8
        %v1938 = vsub.s32 8, %v1936
        %v1939 = vsub.s32 8, %v1937
        %v1940 = vand.u32 %v1938, 1
        %v1941 = vand.u32 %v1939, 1
        %vm1942 = vcmp.eq.s32.totalorder %v1940, 1
        %vm1943 = vcmp.eq.s32.totalorder %v1941, 1
        %v1944 = vshra.s32 %v1938, 1
        %v1945 = vshra.s32 %v1939, 1
        %v1946 = vand.u32 %v1944, 1
        %v1947 = vand.u32 %v1945, 1
        %vm1948 = vcmp.eq.s32.totalorder %v1946, 1
        %vm1949 = vcmp.eq.s32.totalorder %v1947, 1
        %v1950 = vshra.s32 %v1938, 2
        %v1951 = vshra.s32 %v1939, 2
        %v1952 = vand.u32 %v1950, 1
        %v1953 = vand.u32 %v1951, 1
        %vm1954 = vcmp.eq.s32.totalorder %v1952, 1
        %vm1955 = vcmp.eq.s32.totalorder %v1953, 1
        %v1956 = vshra.s32 %v1938, 3
        %v1957 = vshra.s32 %v1939, 3
        %v1958 = vand.u32 %v1956, 1
        %v1959 = vand.u32 %v1957, 1
        %vm1960 = vcmp.eq.s32.totalorder %v1958, 1
        %vm1961 = vcmp.eq.s32.totalorder %v1959, 1
        %v1962 = vmul.f32 %v1903, 0.17677669
        %v1963 = vmul.f32 %v1905, 0.17677669
        %v1964 = vpack.c.bf16 %v1963, %v1962
        %v1965 = vpack.c.bf16 %v1919, %v1917
        %v1966 = vpack.c.bf16 %v1933, %v1931
        %v1970 = vunpack.c.l.b16 %v1729
        %v1971 = vunpack.c.l.b16 %v1730
        %v1972 = vunpack.c.l.b16 %v1731
        %v1973 = vpack.c.b16 %v1971, %v1970
        %v1974 = vpack.c.b16 %v1972, %v1972
        %vm1975 = vcmask 261120
        %v1977 = vsel %vm1975, %v1964, 0
        %v1980 = vsel %vm1975, %v1973, 0
        %v1983 = vsel %vm1975, %v1974, 0
        %1985 = vmatpush.bf16.xpose.msra.mxu0 0
        %1986 = vmatpush.bf16.xpose.msra.mxu0 0
        %1987 = vmatpush.bf16.xpose.msra.mxu0 0
        %1988 = vmatpush.bf16.xpose.msra.mxu0 0
        %1989 = vmatpush.bf16.xpose.msra.mxu0 0
        %1990 = vmatpush.bf16.xpose.msra.mxu0 0
        %1991 = vmatpush.bf16.xpose.msra.mxu0 %v1983
        %1992 = vmatpush.bf16.xpose.msra.mxu0 %v1980
        %1993 = vmatmul.bf16.gmra.mxu0 %v1977
        %v1994 = vpop.f32.mrf.mxu0
        %v1995 = vadd.f32 0.0, %v1994
        %v1996 = vpop.f32.mrf.mxu0
        %v1997 = vadd.f32 0.0, %v1996
        %1998 = vdwg.mxu0
        %2001 = vrot.lane.b32.xlu0 %v1995, 127
        %v2002 = vpop.permute.xlu0 %2001
        %2003 = vrot.lane.b32.xlu0 %v1997, 127
        %v2004 = vpop.permute.xlu0 %2003
        %2007 = vrot.lane.b32.xlu0 %v1995, 16
        %v2008 = vpop.permute.xlu0 %2007
        %2009 = vrot.lane.b32.xlu0 %v1997, 16
        %v2010 = vpop.permute.xlu0 %2009
        %vm2013 = vcmask 130048
        %v2014 = vsel %vm2013, %v2002, %v2008
        %v2015 = vsel %vm2013, %v2004, %v2010
        %v2016 = vsel %vm1942, %v2014, %v1995
        %v2017 = vsel %vm1943, %v2015, %v1997
        %2020 = vrot.lane.b32.xlu0 %v2016, 126
        %v2021 = vpop.permute.xlu0 %2020
        %2022 = vrot.lane.b32.xlu0 %v2017, 126
        %v2023 = vpop.permute.xlu0 %2022
        %2026 = vrot.lane.b32.xlu0 %v2016, 15
        %v2027 = vpop.permute.xlu0 %2026
        %2028 = vrot.lane.b32.xlu0 %v2017, 15
        %v2029 = vpop.permute.xlu0 %2028
        %vm2032 = vcmask 121856
        %v2033 = vsel %vm2032, %v2021, %v2027
        %v2034 = vsel %vm2032, %v2023, %v2029
        %v2035 = vsel %vm1948, %v2033, %v2016
        %v2036 = vsel %vm1949, %v2034, %v2017
        %2039 = vrot.lane.b32.xlu0 %v2035, 124
        %v2040 = vpop.permute.xlu0 %2039
        %2041 = vrot.lane.b32.xlu0 %v2036, 124
        %v2042 = vpop.permute.xlu0 %2041
        %2045 = vrot.lane.b32.xlu0 %v2035, 13
        %v2046 = vpop.permute.xlu0 %2045
        %2047 = vrot.lane.b32.xlu0 %v2036, 13
        %v2048 = vpop.permute.xlu0 %2047
        %vm2051 = vcmask 105472
        %v2052 = vsel %vm2051, %v2040, %v2046
        %v2053 = vsel %vm2051, %v2042, %v2048
        %v2054 = vsel %vm1954, %v2052, %v2035
        %v2055 = vsel %vm1955, %v2053, %v2036
        %2058 = vrot.lane.b32.xlu0 %v2054, 120
        %v2059 = vpop.permute.xlu0 %2058
        %2060 = vrot.lane.b32.xlu0 %v2055, 120
        %v2061 = vpop.permute.xlu0 %2060
        %2064 = vrot.lane.b32.xlu0 %v2054, 9
        %v2065 = vpop.permute.xlu0 %2064
        %2066 = vrot.lane.b32.xlu0 %v2055, 9
        %v2067 = vpop.permute.xlu0 %2066
        %vm2070 = vcmask 72704
        %v2071 = vsel %vm2070, %v2059, %v2065
        %v2072 = vsel %vm2070, %v2061, %v2067
        %v2073 = vsel %vm1960, %v2071, %v2054
        %v2074 = vsel %vm1961, %v2072, %v2055
        %v2076 = vsel %vm1975, %v1965, 0
        %2078 = vmatpush.bf16.xpose.msra.mxu0 0
        %2079 = vmatpush.bf16.xpose.msra.mxu0 0
        %2080 = vmatpush.bf16.xpose.msra.mxu0 0
        %2081 = vmatpush.bf16.xpose.msra.mxu0 0
        %2082 = vmatpush.bf16.xpose.msra.mxu0 0
        %2083 = vmatpush.bf16.xpose.msra.mxu0 0
        %2084 = vmatpush.bf16.xpose.msra.mxu0 0
        %2085 = vmatpush.bf16.xpose.msra.mxu0 %v2076
        %2086 = vmatmul.bf16.gmra.mxu0 %v1977
        %v2087 = vpop.f32.mrf.mxu0
        %v2088 = vadd.f32 %v2073, %v2087
        %v2089 = vpop.f32.mrf.mxu0
        %v2090 = vadd.f32 %v2074, %v2089
        %2091 = vdwg.mxu0
        %v2092 = vsel %vm2070, %v2088, -inf
        %2093 = vmax.xlane.f32.xlu0 %v2092
        %v2094 = vpop.xlane.xlu0 %2093
        %vm2095 = vcmask 65536
        %v2096 = vsel %vm2095, %v2090, -inf
        %2097 = vmax.xlane.f32.xlu0 %v2096
        %v2098 = vpop.xlane.xlu0 %2097
        %v2099 = vsub.f32 %v2088, %v2094
        %v2100 = vsub.f32 %v2090, %v2098
        %v2101 = vmul.f32 %v2099, 1.442695
        %v2102 = vpow.pop %v2101
        %v2103 = vmul.f32 %v2100, 1.442695
        %v2104 = vpow.pop %v2103
        %v2105 = vsel %vm2070, %v2102, 0.0
        %2106 = vadd.xlane.f32.xlu0 %v2105
        %v2107 = vpop.xlane.xlu0 %2106
        %v2108 = vsel %vm2095, %v2104, 0.0
        %2109 = vadd.xlane.f32.xlu0 %v2108
        %v2110 = vpop.xlane.xlu0 %2109
        %v2111 = vrcp.pop %v2107
        %v2112 = vrcp.pop %v2110
        %v2113 = vmul.f32 %v2102, %v2111
        %v2114 = vmul.f32 %v2104, %v2112
        %v2115 = vpack.c.bf16 %v2114, %v2113
        %v2117 = vsel %vm2070, %v2115, 0
        %vm2119 = vcmask 1043456
        %vm2120 = vcmask 1044480
        %v2121 = vsel %vm2119, 4294967295, 65535
        %v2122 = vsel %vm2120, %v2121, 0
        %v2124 = vand.u32 %v1966, %v2122
        %2126 = vmatpush.bf16.msra.mxu0 0
        %2127 = vmatpush.bf16.msra.mxu0 0
        %2128 = vmatpush.bf16.msra.mxu0 0
        %2129 = vmatpush.bf16.msra.mxu0 0
        %2130 = vmatpush.bf16.msra.mxu0 0
        %2131 = vmatpush.bf16.msra.mxu0 0
        %2132 = vmatpush.bf16.msra.mxu0 0
        %2133 = vmatpush.bf16.msra.mxu0 %v2124
        %2134 = vmatmul.bf16.gmra.mxu0 %v2117
        %v2135 = vpop.f32.mrf.mxu0
        %v2136 = vadd.f32 0.0, %v2135
        %v2137 = vpop.f32.mrf.mxu0
        %v2138 = vadd.f32 0.0, %v2137
        %2139 = vdwg.mxu0
        %2141 = vrot.lane.b32.xlu0 %v1964, 96
        %v2142 = vpop.permute.xlu0 %2141
        %v2144 = vsel %vm1975, %v2142, 0
        %2146 = vmatpush.bf16.xpose.msra.mxu0 0
        %2147 = vmatpush.bf16.xpose.msra.mxu0 0
        %2148 = vmatpush.bf16.xpose.msra.mxu0 0
        %2149 = vmatpush.bf16.xpose.msra.mxu0 0
        %2150 = vmatpush.bf16.xpose.msra.mxu0 0
        %2151 = vmatpush.bf16.xpose.msra.mxu0 0
        %2152 = vmatpush.bf16.xpose.msra.mxu0 %v1983
        %2153 = vmatpush.bf16.xpose.msra.mxu0 %v1980
        %2154 = vmatmul.bf16.gmra.mxu0 %v2144
        %v2155 = vpop.f32.mrf.mxu0
        %v2156 = vadd.f32 0.0, %v2155
        %v2157 = vpop.f32.mrf.mxu0
        %v2158 = vadd.f32 0.0, %v2157
        %2159 = vdwg.mxu0
        %2162 = vrot.lane.b32.xlu0 %v2156, 127
        %v2163 = vpop.permute.xlu0 %2162
        %2164 = vrot.lane.b32.xlu0 %v2158, 127
        %v2165 = vpop.permute.xlu0 %2164
        %2168 = vrot.lane.b32.xlu0 %v2156, 16
        %v2169 = vpop.permute.xlu0 %2168
        %2170 = vrot.lane.b32.xlu0 %v2158, 16
        %v2171 = vpop.permute.xlu0 %2170
        %v2174 = vsel %vm2013, %v2163, %v2169
        %v2175 = vsel %vm2013, %v2165, %v2171
        %v2176 = vsel %vm1942, %v2174, %v2156
        %v2177 = vsel %vm1943, %v2175, %v2158
        %2180 = vrot.lane.b32.xlu0 %v2176, 126
        %v2181 = vpop.permute.xlu0 %2180
        %2182 = vrot.lane.b32.xlu0 %v2177, 126
        %v2183 = vpop.permute.xlu0 %2182
        %2186 = vrot.lane.b32.xlu0 %v2176, 15
        %v2187 = vpop.permute.xlu0 %2186
        %2188 = vrot.lane.b32.xlu0 %v2177, 15
        %v2189 = vpop.permute.xlu0 %2188
        %v2192 = vsel %vm2032, %v2181, %v2187
        %v2193 = vsel %vm2032, %v2183, %v2189
        %v2194 = vsel %vm1948, %v2192, %v2176
        %v2195 = vsel %vm1949, %v2193, %v2177
        %2198 = vrot.lane.b32.xlu0 %v2194, 124
        %v2199 = vpop.permute.xlu0 %2198
        %2200 = vrot.lane.b32.xlu0 %v2195, 124
        %v2201 = vpop.permute.xlu0 %2200
        %2204 = vrot.lane.b32.xlu0 %v2194, 13
        %v2205 = vpop.permute.xlu0 %2204
        %2206 = vrot.lane.b32.xlu0 %v2195, 13
        %v2207 = vpop.permute.xlu0 %2206
        %v2210 = vsel %vm2051, %v2199, %v2205
        %v2211 = vsel %vm2051, %v2201, %v2207
        %v2212 = vsel %vm1954, %v2210, %v2194
        %v2213 = vsel %vm1955, %v2211, %v2195
        %2216 = vrot.lane.b32.xlu0 %v2212, 120
        %v2217 = vpop.permute.xlu0 %2216
        %2218 = vrot.lane.b32.xlu0 %v2213, 120
        %v2219 = vpop.permute.xlu0 %2218
        %2222 = vrot.lane.b32.xlu0 %v2212, 9
        %v2223 = vpop.permute.xlu0 %2222
        %2224 = vrot.lane.b32.xlu0 %v2213, 9
        %v2225 = vpop.permute.xlu0 %2224
        %v2228 = vsel %vm2070, %v2217, %v2223
        %v2229 = vsel %vm2070, %v2219, %v2225
        %v2230 = vsel %vm1960, %v2228, %v2212
        %v2231 = vsel %vm1961, %v2229, %v2213
        %2233 = vrot.lane.b32.xlu0 %v1965, 96
        %v2234 = vpop.permute.xlu0 %2233
        %v2236 = vsel %vm1975, %v2234, 0
        %2238 = vmatpush.bf16.xpose.msra.mxu0 0
        %2239 = vmatpush.bf16.xpose.msra.mxu0 0
        %2240 = vmatpush.bf16.xpose.msra.mxu0 0
        %2241 = vmatpush.bf16.xpose.msra.mxu0 0
        %2242 = vmatpush.bf16.xpose.msra.mxu0 0
        %2243 = vmatpush.bf16.xpose.msra.mxu0 0
        %2244 = vmatpush.bf16.xpose.msra.mxu0 0
        %2245 = vmatpush.bf16.xpose.msra.mxu0 %v2236
        %2246 = vmatmul.bf16.gmra.mxu0 %v2144
        %v2247 = vpop.f32.mrf.mxu0
        %v2248 = vadd.f32 %v2230, %v2247
        %v2249 = vpop.f32.mrf.mxu0
        %v2250 = vadd.f32 %v2231, %v2249
        %2251 = vdwg.mxu0
        %v2252 = vsel %vm2070, %v2248, -inf
        %2253 = vmax.xlane.f32.xlu0 %v2252
        %v2254 = vpop.xlane.xlu0 %2253
        %v2255 = vsel %vm2095, %v2250, -inf
        %2256 = vmax.xlane.f32.xlu0 %v2255
        %v2257 = vpop.xlane.xlu0 %2256
        %v2258 = vsub.f32 %v2248, %v2254
        %v2259 = vsub.f32 %v2250, %v2257
        %v2260 = vmul.f32 %v2258, 1.442695
        %v2261 = vpow.pop %v2260
        %v2262 = vmul.f32 %v2259, 1.442695
        %v2263 = vpow.pop %v2262
        %v2264 = vsel %vm2070, %v2261, 0.0
        %2265 = vadd.xlane.f32.xlu0 %v2264
        %v2266 = vpop.xlane.xlu0 %2265
        %v2267 = vsel %vm2095, %v2263, 0.0
        %2268 = vadd.xlane.f32.xlu0 %v2267
        %v2269 = vpop.xlane.xlu0 %2268
        %v2270 = vrcp.pop %v2266
        %v2271 = vrcp.pop %v2269
        %v2272 = vmul.f32 %v2261, %v2270
        %v2273 = vmul.f32 %v2263, %v2271
        %v2274 = vpack.c.bf16 %v2273, %v2272
        %2276 = vrot.lane.b32.xlu0 %v1966, 96
        %v2277 = vpop.permute.xlu0 %2276
        %v2279 = vsel %vm2070, %v2274, 0
        %v2282 = vand.u32 %v2277, %v2122
        %2284 = vmatpush.bf16.msra.mxu0 0
        %2285 = vmatpush.bf16.msra.mxu0 0
        %2286 = vmatpush.bf16.msra.mxu0 0
        %2287 = vmatpush.bf16.msra.mxu0 0
        %2288 = vmatpush.bf16.msra.mxu0 0
        %2289 = vmatpush.bf16.msra.mxu0 0
        %2290 = vmatpush.bf16.msra.mxu0 0
        %2291 = vmatpush.bf16.msra.mxu0 %v2282
        %2292 = vmatmul.bf16.gmra.mxu0 %v2279
        %v2293 = vpop.f32.mrf.mxu0
        %v2294 = vadd.f32 0.0, %v2293
        %v2295 = vpop.f32.mrf.mxu0
        %v2296 = vadd.f32 0.0, %v2295
        %2297 = vdwg.mxu0
        %2298 = vrot.lane.b32.xlu0 %v1964, 64
        %v2299 = vpop.permute.xlu0 %2298
        %v2301 = vsel %vm1975, %v2299, 0
        %2303 = vmatpush.bf16.xpose.msra.mxu0 0
        %2304 = vmatpush.bf16.xpose.msra.mxu0 0
        %2305 = vmatpush.bf16.xpose.msra.mxu0 0
        %2306 = vmatpush.bf16.xpose.msra.mxu0 0
        %2307 = vmatpush.bf16.xpose.msra.mxu0 0
        %2308 = vmatpush.bf16.xpose.msra.mxu0 0
        %2309 = vmatpush.bf16.xpose.msra.mxu0 %v1983
        %2310 = vmatpush.bf16.xpose.msra.mxu0 %v1980
        %2311 = vmatmul.bf16.gmra.mxu0 %v2301
        %v2312 = vpop.f32.mrf.mxu0
        %v2313 = vadd.f32 0.0, %v2312
        %v2314 = vpop.f32.mrf.mxu0
        %v2315 = vadd.f32 0.0, %v2314
        %2316 = vdwg.mxu0
        %2319 = vrot.lane.b32.xlu0 %v2313, 127
        %v2320 = vpop.permute.xlu0 %2319
        %2321 = vrot.lane.b32.xlu0 %v2315, 127
        %v2322 = vpop.permute.xlu0 %2321
        %2325 = vrot.lane.b32.xlu0 %v2313, 16
        %v2326 = vpop.permute.xlu0 %2325
        %2327 = vrot.lane.b32.xlu0 %v2315, 16
        %v2328 = vpop.permute.xlu0 %2327
        %v2331 = vsel %vm2013, %v2320, %v2326
        %v2332 = vsel %vm2013, %v2322, %v2328
        %v2333 = vsel %vm1942, %v2331, %v2313
        %v2334 = vsel %vm1943, %v2332, %v2315
        %2337 = vrot.lane.b32.xlu0 %v2333, 126
        %v2338 = vpop.permute.xlu0 %2337
        %2339 = vrot.lane.b32.xlu0 %v2334, 126
        %v2340 = vpop.permute.xlu0 %2339
        %2343 = vrot.lane.b32.xlu0 %v2333, 15
        %v2344 = vpop.permute.xlu0 %2343
        %2345 = vrot.lane.b32.xlu0 %v2334, 15
        %v2346 = vpop.permute.xlu0 %2345
        %v2349 = vsel %vm2032, %v2338, %v2344
        %v2350 = vsel %vm2032, %v2340, %v2346
        %v2351 = vsel %vm1948, %v2349, %v2333
        %v2352 = vsel %vm1949, %v2350, %v2334
        %2355 = vrot.lane.b32.xlu0 %v2351, 124
        %v2356 = vpop.permute.xlu0 %2355
        %2357 = vrot.lane.b32.xlu0 %v2352, 124
        %v2358 = vpop.permute.xlu0 %2357
        %2361 = vrot.lane.b32.xlu0 %v2351, 13
        %v2362 = vpop.permute.xlu0 %2361
        %2363 = vrot.lane.b32.xlu0 %v2352, 13
        %v2364 = vpop.permute.xlu0 %2363
        %v2367 = vsel %vm2051, %v2356, %v2362
        %v2368 = vsel %vm2051, %v2358, %v2364
        %v2369 = vsel %vm1954, %v2367, %v2351
        %v2370 = vsel %vm1955, %v2368, %v2352
        %2373 = vrot.lane.b32.xlu0 %v2369, 120
        %v2374 = vpop.permute.xlu0 %2373
        %2375 = vrot.lane.b32.xlu0 %v2370, 120
        %v2376 = vpop.permute.xlu0 %2375
        %2379 = vrot.lane.b32.xlu0 %v2369, 9
        %v2380 = vpop.permute.xlu0 %2379
        %2381 = vrot.lane.b32.xlu0 %v2370, 9
        %v2382 = vpop.permute.xlu0 %2381
        %v2385 = vsel %vm2070, %v2374, %v2380
        %v2386 = vsel %vm2070, %v2376, %v2382
        %v2387 = vsel %vm1960, %v2385, %v2369
        %v2388 = vsel %vm1961, %v2386, %v2370
        %2389 = vrot.lane.b32.xlu0 %v1965, 64
        %v2390 = vpop.permute.xlu0 %2389
        %v2392 = vsel %vm1975, %v2390, 0
        %2394 = vmatpush.bf16.xpose.msra.mxu0 0
        %2395 = vmatpush.bf16.xpose.msra.mxu0 0
        %2396 = vmatpush.bf16.xpose.msra.mxu0 0
        %2397 = vmatpush.bf16.xpose.msra.mxu0 0
        %2398 = vmatpush.bf16.xpose.msra.mxu0 0
        %2399 = vmatpush.bf16.xpose.msra.mxu0 0
        %2400 = vmatpush.bf16.xpose.msra.mxu0 0
        %2401 = vmatpush.bf16.xpose.msra.mxu0 %v2392
        %2402 = vmatmul.bf16.gmra.mxu0 %v2301
        %v2403 = vpop.f32.mrf.mxu0
        %v2404 = vadd.f32 %v2387, %v2403
        %v2405 = vpop.f32.mrf.mxu0
        %v2406 = vadd.f32 %v2388, %v2405
        %2407 = vdwg.mxu0
        %v2408 = vsel %vm2070, %v2404, -inf
        %2409 = vmax.xlane.f32.xlu0 %v2408
        %v2410 = vpop.xlane.xlu0 %2409
        %v2411 = vsel %vm2095, %v2406, -inf
        %2412 = vmax.xlane.f32.xlu0 %v2411
        %v2413 = vpop.xlane.xlu0 %2412
        %v2414 = vsub.f32 %v2404, %v2410
        %v2415 = vsub.f32 %v2406, %v2413
        %v2416 = vmul.f32 %v2414, 1.442695
        %v2417 = vpow.pop %v2416
        %v2418 = vmul.f32 %v2415, 1.442695
        %v2419 = vpow.pop %v2418
        %v2420 = vsel %vm2070, %v2417, 0.0
        %2421 = vadd.xlane.f32.xlu0 %v2420
        %v2422 = vpop.xlane.xlu0 %2421
        %v2423 = vsel %vm2095, %v2419, 0.0
        %2424 = vadd.xlane.f32.xlu0 %v2423
        %v2425 = vpop.xlane.xlu0 %2424
        %v2426 = vrcp.pop %v2422
        %v2427 = vrcp.pop %v2425
        %v2428 = vmul.f32 %v2417, %v2426
        %v2429 = vmul.f32 %v2419, %v2427
        %v2430 = vpack.c.bf16 %v2429, %v2428
        %2431 = vrot.lane.b32.xlu0 %v1966, 64
        %v2432 = vpop.permute.xlu0 %2431
        %v2434 = vsel %vm2070, %v2430, 0
        %v2437 = vand.u32 %v2432, %v2122
        %2439 = vmatpush.bf16.msra.mxu0 0
        %2440 = vmatpush.bf16.msra.mxu0 0
        %2441 = vmatpush.bf16.msra.mxu0 0
        %2442 = vmatpush.bf16.msra.mxu0 0
        %2443 = vmatpush.bf16.msra.mxu0 0
        %2444 = vmatpush.bf16.msra.mxu0 0
        %2445 = vmatpush.bf16.msra.mxu0 0
        %2446 = vmatpush.bf16.msra.mxu0 %v2437
        %2447 = vmatmul.bf16.gmra.mxu0 %v2434
        %v2448 = vpop.f32.mrf.mxu0
        %v2449 = vadd.f32 0.0, %v2448
        %v2450 = vpop.f32.mrf.mxu0
        %v2451 = vadd.f32 0.0, %v2450
        %2452 = vdwg.mxu0
        %2453 = vrot.lane.b32.xlu0 %v1964, 32
        %v2454 = vpop.permute.xlu0 %2453
        %v2456 = vsel %vm1975, %v2454, 0
        %2458 = vmatpush.bf16.xpose.msra.mxu0 0
        %2459 = vmatpush.bf16.xpose.msra.mxu0 0
        %2460 = vmatpush.bf16.xpose.msra.mxu0 0
        %2461 = vmatpush.bf16.xpose.msra.mxu0 0
        %2462 = vmatpush.bf16.xpose.msra.mxu0 0
        %2463 = vmatpush.bf16.xpose.msra.mxu0 0
        %2464 = vmatpush.bf16.xpose.msra.mxu0 %v1983
        %2465 = vmatpush.bf16.xpose.msra.mxu0 %v1980
        %2466 = vmatmul.bf16.gmra.mxu0 %v2456
        %v2467 = vpop.f32.mrf.mxu0
        %v2468 = vadd.f32 0.0, %v2467
        %v2469 = vpop.f32.mrf.mxu0
        %v2470 = vadd.f32 0.0, %v2469
        %2471 = vdwg.mxu0
        %2474 = vrot.lane.b32.xlu0 %v2468, 127
        %v2475 = vpop.permute.xlu0 %2474
        %2476 = vrot.lane.b32.xlu0 %v2470, 127
        %v2477 = vpop.permute.xlu0 %2476
        %2480 = vrot.lane.b32.xlu0 %v2468, 16
        %v2481 = vpop.permute.xlu0 %2480
        %2482 = vrot.lane.b32.xlu0 %v2470, 16
        %v2483 = vpop.permute.xlu0 %2482
        %v2486 = vsel %vm2013, %v2475, %v2481
        %v2487 = vsel %vm2013, %v2477, %v2483
        %v2488 = vsel %vm1942, %v2486, %v2468
        %v2489 = vsel %vm1943, %v2487, %v2470
        %2492 = vrot.lane.b32.xlu0 %v2488, 126
        %v2493 = vpop.permute.xlu0 %2492
        %2494 = vrot.lane.b32.xlu0 %v2489, 126
        %v2495 = vpop.permute.xlu0 %2494
        %2498 = vrot.lane.b32.xlu0 %v2488, 15
        %v2499 = vpop.permute.xlu0 %2498
        %2500 = vrot.lane.b32.xlu0 %v2489, 15
        %v2501 = vpop.permute.xlu0 %2500
        %v2504 = vsel %vm2032, %v2493, %v2499
        %v2505 = vsel %vm2032, %v2495, %v2501
        %v2506 = vsel %vm1948, %v2504, %v2488
        %v2507 = vsel %vm1949, %v2505, %v2489
        %2510 = vrot.lane.b32.xlu0 %v2506, 124
        %v2511 = vpop.permute.xlu0 %2510
        %2512 = vrot.lane.b32.xlu0 %v2507, 124
        %v2513 = vpop.permute.xlu0 %2512
        %2516 = vrot.lane.b32.xlu0 %v2506, 13
        %v2517 = vpop.permute.xlu0 %2516
        %2518 = vrot.lane.b32.xlu0 %v2507, 13
        %v2519 = vpop.permute.xlu0 %2518
        %v2522 = vsel %vm2051, %v2511, %v2517
        %v2523 = vsel %vm2051, %v2513, %v2519
        %v2524 = vsel %vm1954, %v2522, %v2506
        %v2525 = vsel %vm1955, %v2523, %v2507
        %2528 = vrot.lane.b32.xlu0 %v2524, 120
        %v2529 = vpop.permute.xlu0 %2528
        %2530 = vrot.lane.b32.xlu0 %v2525, 120
        %v2531 = vpop.permute.xlu0 %2530
        %2534 = vrot.lane.b32.xlu0 %v2524, 9
        %v2535 = vpop.permute.xlu0 %2534
        %2536 = vrot.lane.b32.xlu0 %v2525, 9
        %v2537 = vpop.permute.xlu0 %2536
        %v2540 = vsel %vm2070, %v2529, %v2535
        %v2541 = vsel %vm2070, %v2531, %v2537
        %v2542 = vsel %vm1960, %v2540, %v2524
        %v2543 = vsel %vm1961, %v2541, %v2525
        %2544 = vrot.lane.b32.xlu0 %v1965, 32
        %v2545 = vpop.permute.xlu0 %2544
        %v2547 = vsel %vm1975, %v2545, 0
        %2549 = vmatpush.bf16.xpose.msra.mxu0 0
        %2550 = vmatpush.bf16.xpose.msra.mxu0 0
        %2551 = vmatpush.bf16.xpose.msra.mxu0 0
        %2552 = vmatpush.bf16.xpose.msra.mxu0 0
        %2553 = vmatpush.bf16.xpose.msra.mxu0 0
        %2554 = vmatpush.bf16.xpose.msra.mxu0 0
        %2555 = vmatpush.bf16.xpose.msra.mxu0 0
        %2556 = vmatpush.bf16.xpose.msra.mxu0 %v2547
        %2557 = vmatmul.bf16.gmra.mxu0 %v2456
        %v2558 = vpop.f32.mrf.mxu0
        %v2559 = vadd.f32 %v2542, %v2558
        %v2560 = vpop.f32.mrf.mxu0
        %v2561 = vadd.f32 %v2543, %v2560
        %2562 = vdwg.mxu0
        %v2563 = vsel %vm2070, %v2559, -inf
        %2564 = vmax.xlane.f32.xlu0 %v2563
        %v2565 = vpop.xlane.xlu0 %2564
        %v2566 = vsel %vm2095, %v2561, -inf
        %2567 = vmax.xlane.f32.xlu0 %v2566
        %v2568 = vpop.xlane.xlu0 %2567
        %v2569 = vsub.f32 %v2559, %v2565
        %v2570 = vsub.f32 %v2561, %v2568
        %v2571 = vmul.f32 %v2569, 1.442695
        %v2572 = vpow.pop %v2571
        %v2573 = vmul.f32 %v2570, 1.442695
        %v2574 = vpow.pop %v2573
        %v2575 = vsel %vm2070, %v2572, 0.0
        %2576 = vadd.xlane.f32.xlu0 %v2575
        %v2577 = vpop.xlane.xlu0 %2576
        %v2578 = vsel %vm2095, %v2574, 0.0
        %2579 = vadd.xlane.f32.xlu0 %v2578
        %v2580 = vpop.xlane.xlu0 %2579
        %v2581 = vrcp.pop %v2577
        %v2582 = vrcp.pop %v2580
        %v2583 = vmul.f32 %v2572, %v2581
        %v2584 = vmul.f32 %v2574, %v2582
        %v2585 = vpack.c.bf16 %v2584, %v2583
        %2586 = vrot.lane.b32.xlu0 %v1966, 32
        %v2587 = vpop.permute.xlu0 %2586
        %v2589 = vsel %vm2070, %v2585, 0
        %v2592 = vand.u32 %v2587, %v2122
        %2594 = vmatpush.bf16.msra.mxu0 0
        %2595 = vmatpush.bf16.msra.mxu0 0
        %2596 = vmatpush.bf16.msra.mxu0 0
        %2597 = vmatpush.bf16.msra.mxu0 0
        %2598 = vmatpush.bf16.msra.mxu0 0
        %2599 = vmatpush.bf16.msra.mxu0 0
        %2600 = vmatpush.bf16.msra.mxu0 0
        %2601 = vmatpush.bf16.msra.mxu0 %v2592
        %2602 = vmatmul.bf16.gmra.mxu0 %v2589
        %v2603 = vpop.f32.mrf.mxu0
        %v2604 = vadd.f32 0.0, %v2603
        %v2605 = vpop.f32.mrf.mxu0
        %v2606 = vadd.f32 0.0, %v2605
        %2607 = vdwg.mxu0
        %2610 = vrot.lane.b32.xlu0 %v2294, 32
        %v2611 = vpop.permute.xlu0 %2610
        %2612 = vrot.lane.b32.xlu0 %v2296, 32
        %v2613 = vpop.permute.xlu0 %2612
        %2618 = vrot.lane.b32.xlu0 %v2449, 64
        %v2619 = vpop.permute.xlu0 %2618
        %2620 = vrot.lane.b32.xlu0 %v2451, 64
        %v2621 = vpop.permute.xlu0 %2620
        %2626 = vrot.lane.b32.xlu0 %v2604, 96
        %v2627 = vpop.permute.xlu0 %2626
        %2628 = vrot.lane.b32.xlu0 %v2606, 96
        %v2629 = vpop.permute.xlu0 %2628
        %v2632 = vsel %vm1975, %v2136, %v2611
        %v2633 = vsel %vm1975, %v2138, %v2613
        %vm2634 = vcmask 523264
        %v2635 = vsel %vm2634, %v2632, %v2619
        %v2636 = vsel %vm2634, %v2633, %v2621
        %vm2637 = vcmask 785408
        %v2638 = vsel %vm2637, %v2635, %v2627
        %v2639 = vsel %vm2637, %v2636, %v2629
        %v2640 = vld [vmem:[%s9] sm:$0xf]
        %v2641 = vld [vmem:[%s9 + $0x4] sm:$0xf]
        %v2642 = vld [vmem:[%s9 + $0x8] sm:$0xf]
        %v2643 = vld [vmem:[%s9 + $0xc] sm:$0xf]
        %v2644 = vld [vmem:[%s9 + $0x10] sm:$0xf]
        %v2645 = vld [vmem:[%s9 + $0x14] sm:$0xf]
        %v2646 = vld [vmem:[%s9 + $0x18] sm:$0xf]
        %v2647 = vld [vmem:[%s9 + $0x1c] sm:$0xf]
        %v2648 = vld [vmem:[%s9 + $0x20] sm:$0xf]
        %v2649 = vld [vmem:[%s9 + $0x24] sm:$0xf]
        %v2650 = vld [vmem:[%s9 + $0x28] sm:$0xf]
        %v2651 = vld [vmem:[%s9 + $0x2c] sm:$0xf]
        %v2652 = vld [vmem:[%s9 + $0x30] sm:$0xf]
        %v2653 = vld [vmem:[%s9 + $0x34] sm:$0xf]
        %v2654 = vld [vmem:[%s9 + $0x38] sm:$0xf]
        %v2655 = vld [vmem:[%s9 + $0x3c] sm:$0xf]
        %v2656 = vpack.c.bf16 %v2639, %v2638
        %v2673 = vunpack.c.l.b16 %v2640
        %v2674 = vunpack.c.l.b16 %v2641
        %v2675 = vunpack.c.l.b16 %v2642
        %v2676 = vunpack.c.l.b16 %v2643
        %v2677 = vunpack.c.l.b16 %v2644
        %v2678 = vunpack.c.l.b16 %v2645
        %v2679 = vunpack.c.l.b16 %v2646
        %v2680 = vunpack.c.l.b16 %v2647
        %v2681 = vunpack.c.l.b16 %v2648
        %v2682 = vunpack.c.l.b16 %v2649
        %v2683 = vunpack.c.l.b16 %v2650
        %v2684 = vunpack.c.l.b16 %v2651
        %v2685 = vunpack.c.l.b16 %v2652
        %v2686 = vunpack.c.l.b16 %v2653
        %v2687 = vunpack.c.l.b16 %v2654
        %v2688 = vunpack.c.l.b16 %v2655
        %v2689 = vpack.c.b16 %v2674, %v2673
        %v2690 = vpack.c.b16 %v2676, %v2675
        %v2691 = vpack.c.b16 %v2678, %v2677
        %v2692 = vpack.c.b16 %v2680, %v2679
        %v2693 = vpack.c.b16 %v2682, %v2681
        %v2694 = vpack.c.b16 %v2684, %v2683
        %v2695 = vpack.c.b16 %v2686, %v2685
        %v2696 = vpack.c.b16 %v2688, %v2687
        %2705 = vmatpush.bf16.msra.mxu0 %v2696
        %2706 = vmatpush.bf16.msra.mxu0 %v2695
        %2707 = vmatpush.bf16.msra.mxu0 %v2694
        %2708 = vmatpush.bf16.msra.mxu0 %v2693
        %2709 = vmatpush.bf16.msra.mxu0 %v2692
        %2710 = vmatpush.bf16.msra.mxu0 %v2691
        %2711 = vmatpush.bf16.msra.mxu0 %v2690
        %2712 = vmatpush.bf16.msra.mxu0 %v2689
        %2713 = vmatmul.bf16.gmra.mxu0 %v2656
        %v2714 = vpop.f32.mrf.mxu0
        %v2715 = vadd.f32 0.0, %v2714
        %v2716 = vpop.f32.mrf.mxu0
        %v2717 = vadd.f32 0.0, %v2716
        %2718 = vdwg.mxu0
        %v2719 = vadd.f32 %v1677, %v2715
        %v2720 = vadd.f32 %v1678, %v2717
        %v2721 = vld [vmem:[%s10] sm:$0x1]
        %v2723 = vperm.slane %v2721, 0
        %v2725 = vadd.f32 %v2719, %v2723
        %v2726 = vadd.f32 %v2720, %v2723
        %v2727 = vld [vmem:[%s2 + $0x2] sm:$0x1]
        %v2728 = vld [vmem:[#allocation2 + $0x2] sm:$0x1]
        %2729 = vadd.xlane.f32.xlu0 %v2725
        %v2730 = vpop.xlane.xlu0 %2729
        %v2731 = vsel %vm882, %v2726, 0.0
        %2732 = vadd.xlane.f32.xlu0 %v2731
        %v2733 = vpop.xlane.xlu0 %2732
        %v2734 = vmul.f32 %v2730, %v892
        %v2735 = vmul.f32 %v2733, %v892
        %v2736 = vsub.f32 %v2725, %v2734
        %v2737 = vsub.f32 %v2726, %v2735
        %v2738 = vmul.f32 %v2736, %v2736
        %v2739 = vmul.f32 %v2737, %v2737
        %2740 = vadd.xlane.f32.xlu0 %v2738
        %v2741 = vpop.xlane.xlu0 %2740
        %v2742 = vsel %vm882, %v2739, 0.0
        %2743 = vadd.xlane.f32.xlu0 %v2742
        %v2744 = vpop.xlane.xlu0 %2743
        %v2745 = vmul.f32 %v2741, %v892
        %v2746 = vmul.f32 %v2744, %v892
        %v2747 = vadd.f32 %v2745, 1e-05
        %v2748 = vadd.f32 %v2746, 1e-05
        %v2749 = vrsqrt.pop %v2747
        %v2750 = vmul.f32 %v2749, %v2747
        %v2751 = vmul.f32 %v2750, %v2749
        %v2752 = vmul.f32 0.5, %v2751
        %v2753 = vsub.f32 1.5, %v2752
        %v2754 = vmul.f32 %v2749, %v2753
        %vm2755 = vweird.f32 %v2747
        %vm2756 = vweird.f32 %v2749
        %vm2757 = vmor %vm2755, %vm2756
        %v2758 = vsel %vm2757, %v2749, %v2754
        %v2759 = vrsqrt.pop %v2748
        %v2760 = vmul.f32 %v2759, %v2748
        %v2761 = vmul.f32 %v2760, %v2759
        %v2762 = vmul.f32 0.5, %v2761
        %v2763 = vsub.f32 1.5, %v2762
        %v2764 = vmul.f32 %v2759, %v2763
        %vm2765 = vweird.f32 %v2748
        %vm2766 = vweird.f32 %v2759
        %vm2767 = vmor %vm2765, %vm2766
        %v2768 = vsel %vm2767, %v2759, %v2764
        %v2769 = vmul.f32 %v2736, %v2758
        %v2770 = vmul.f32 %v2737, %v2768
        %v2771 = vperm.slane %v2727, 0
        %v2772 = vmul.f32 %v2769, %v2771
        %v2773 = vmul.f32 %v2770, %v2771
        %v2774 = vperm.slane %v2728, 0
        %v2775 = vadd.f32 %v2772, %v2774
        %v2776 = vadd.f32 %v2773, %v2774
        %v2777 = vld [vmem:[%s11] sm:$0xff]
        %v2778 = vld [vmem:[%s11 + $0x8] sm:$0xff]
        %v2779 = vld [vmem:[%s11 + $0x10] sm:$0xff]
        %v2780 = vld [vmem:[%s11 + $0x18] sm:$0xff]
        %v2781 = vld [vmem:[%s11 + $0x20] sm:$0xff]
        %v2782 = vld [vmem:[%s11 + $0x28] sm:$0xff]
        %v2783 = vld [vmem:[%s11 + $0x30] sm:$0xff]
        %v2784 = vld [vmem:[%s11 + $0x38] sm:$0xff]
        %v2785 = vld [vmem:[%s11 + $0x40] sm:$0xff]
        %v2786 = vld [vmem:[%s11 + $0x48] sm:$0xff]
        %v2787 = vld [vmem:[%s11 + $0x50] sm:$0xff]
        %v2788 = vld [vmem:[%s11 + $0x58] sm:$0xff]
        %v2789 = vld [vmem:[%s11 + $0x60] sm:$0xff]
        %v2790 = vld [vmem:[%s11 + $0x68] sm:$0xff]
        %v2791 = vld [vmem:[%s11 + $0x70] sm:$0xff]
        %v2792 = vld [vmem:[%s11 + $0x78] sm:$0xff]
        %v2793 = vpack.c.bf16 %v2776, %v2775
        %v2794 = vld [vmem:[%s12] sm:$0x3]
        %v2796 = vperm.slane %v2794, 0
        %v2797 = vperm.slane %v2794, 1
        %v2816 = vunpack.c.l.b16 %v2777
        %v2817 = vunpack.c.h.b16 %v2777
        %v2818 = vunpack.c.l.b16 %v2778
        %v2819 = vunpack.c.h.b16 %v2778
        %v2820 = vunpack.c.l.b16 %v2779
        %v2821 = vunpack.c.h.b16 %v2779
        %v2822 = vunpack.c.l.b16 %v2780
        %v2823 = vunpack.c.h.b16 %v2780
        %v2824 = vunpack.c.l.b16 %v2781
        %v2825 = vunpack.c.h.b16 %v2781
        %v2826 = vunpack.c.l.b16 %v2782
        %v2827 = vunpack.c.h.b16 %v2782
        %v2828 = vunpack.c.l.b16 %v2783
        %v2829 = vunpack.c.h.b16 %v2783
        %v2830 = vunpack.c.l.b16 %v2784
        %v2831 = vunpack.c.h.b16 %v2784
        %v2832 = vunpack.c.l.b16 %v2785
        %v2833 = vunpack.c.h.b16 %v2785
        %v2834 = vunpack.c.l.b16 %v2786
        %v2835 = vunpack.c.h.b16 %v2786
        %v2836 = vunpack.c.l.b16 %v2787
        %v2837 = vunpack.c.h.b16 %v2787
        %v2838 = vunpack.c.l.b16 %v2788
        %v2839 = vunpack.c.h.b16 %v2788
        %v2840 = vunpack.c.l.b16 %v2789
        %v2841 = vunpack.c.h.b16 %v2789
        %v2842 = vunpack.c.l.b16 %v2790
        %v2843 = vunpack.c.h.b16 %v2790
        %v2844 = vunpack.c.l.b16 %v2791
        %v2845 = vunpack.c.h.b16 %v2791
        %v2846 = vunpack.c.l.b16 %v2792
        %v2847 = vunpack.c.h.b16 %v2792
        %v2848 = vpack.c.b16 %v2818, %v2816
        %v2849 = vpack.c.b16 %v2819, %v2817
        %v2850 = vpack.c.b16 %v2822, %v2820
        %v2851 = vpack.c.b16 %v2823, %v2821
        %v2852 = vpack.c.b16 %v2826, %v2824
        %v2853 = vpack.c.b16 %v2827, %v2825
        %v2854 = vpack.c.b16 %v2830, %v2828
        %v2855 = vpack.c.b16 %v2831, %v2829
        %v2856 = vpack.c.b16 %v2834, %v2832
        %v2857 = vpack.c.b16 %v2835, %v2833
        %v2858 = vpack.c.b16 %v2838, %v2836
        %v2859 = vpack.c.b16 %v2839, %v2837
        %v2860 = vpack.c.b16 %v2842, %v2840
        %v2861 = vpack.c.b16 %v2843, %v2841
        %v2862 = vpack.c.b16 %v2846, %v2844
        %v2863 = vpack.c.b16 %v2847, %v2845
        %2880 = vmatpush.bf16.msra.mxu0 %v2862
        %2881 = vmatpush.bf16.msra.mxu0 %v2860
        %2882 = vmatpush.bf16.msra.mxu0 %v2858
        %2883 = vmatpush.bf16.msra.mxu0 %v2856
        %2884 = vmatpush.bf16.msra.mxu0 %v2854
        %2885 = vmatpush.bf16.msra.mxu0 %v2852
        %2886 = vmatpush.bf16.msra.mxu0 %v2850
        %2887 = vmatpush.bf16.msra.mxu0 %v2848
        %2888 = vmatmul.bf16.gmra.mxu0 %v2793
        %v2889 = vpop.f32.mrf.mxu0
        %v2890 = vadd.f32 %v2796, %v2889
        %v2891 = vpop.f32.mrf.mxu0
        %v2892 = vadd.f32 %v2796, %v2891
        %2893 = vdwg.mxu0
        %2894 = vmatpush.bf16.msra.mxu0 %v2863
        %2895 = vmatpush.bf16.msra.mxu0 %v2861
        %2896 = vmatpush.bf16.msra.mxu0 %v2859
        %2897 = vmatpush.bf16.msra.mxu0 %v2857
        %2898 = vmatpush.bf16.msra.mxu0 %v2855
        %2899 = vmatpush.bf16.msra.mxu0 %v2853
        %2900 = vmatpush.bf16.msra.mxu0 %v2851
        %2901 = vmatpush.bf16.msra.mxu0 %v2849
        %2902 = vmatmul.bf16.gmra.mxu0 %v2793
        %v2903 = vpop.f32.mrf.mxu0
        %v2904 = vadd.f32 %v2797, %v2903
        %v2905 = vpop.f32.mrf.mxu0
        %v2906 = vadd.f32 %v2797, %v2905
        %2907 = vdwg.mxu0
        %v2908 = vld [vmem:[#allocation6] sm:$0xff]
        %v2909 = vld [vmem:[#allocation6 + $0x8] sm:$0xff]
        %v2910 = vld [vmem:[#allocation6 + $0x10] sm:$0xff]
        %v2911 = vld [vmem:[#allocation6 + $0x18] sm:$0xff]
        %v2912 = vld [vmem:[#allocation6 + $0x20] sm:$0xff]
        %v2913 = vld [vmem:[#allocation6 + $0x28] sm:$0xff]
        %v2914 = vld [vmem:[#allocation6 + $0x30] sm:$0xff]
        %v2915 = vld [vmem:[#allocation6 + $0x38] sm:$0xff]
        %v2916 = vld [vmem:[#allocation6 + $0x40] sm:$0xff]
        %v2917 = vld [vmem:[#allocation6 + $0x48] sm:$0xff]
        %v2918 = vld [vmem:[#allocation6 + $0x50] sm:$0xff]
        %v2919 = vld [vmem:[#allocation6 + $0x58] sm:$0xff]
        %v2920 = vld [vmem:[#allocation6 + $0x60] sm:$0xff]
        %v2921 = vld [vmem:[#allocation6 + $0x68] sm:$0xff]
        %v2922 = vld [vmem:[#allocation6 + $0x70] sm:$0xff]
        %v2923 = vld [vmem:[#allocation6 + $0x78] sm:$0xff]
        %v2924 = vld [vmem:[%s14] sm:$0x3]
        %v2926 = vperm.slane %v2924, 0
        %v2927 = vperm.slane %v2924, 1
        %v2946 = vunpack.c.l.b16 %v2908
        %v2947 = vunpack.c.h.b16 %v2908
        %v2948 = vunpack.c.l.b16 %v2909
        %v2949 = vunpack.c.h.b16 %v2909
        %v2950 = vunpack.c.l.b16 %v2910
        %v2951 = vunpack.c.h.b16 %v2910
        %v2952 = vunpack.c.l.b16 %v2911
        %v2953 = vunpack.c.h.b16 %v2911
        %v2954 = vunpack.c.l.b16 %v2912
        %v2955 = vunpack.c.h.b16 %v2912
        %v2956 = vunpack.c.l.b16 %v2913
        %v2957 = vunpack.c.h.b16 %v2913
        %v2958 = vunpack.c.l.b16 %v2914
        %v2959 = vunpack.c.h.b16 %v2914
        %v2960 = vunpack.c.l.b16 %v2915
        %v2961 = vunpack.c.h.b16 %v2915
        %v2962 = vunpack.c.l.b16 %v2916
        %v2963 = vunpack.c.h.b16 %v2916
        %v2964 = vunpack.c.l.b16 %v2917
        %v2965 = vunpack.c.h.b16 %v2917
        %v2966 = vunpack.c.l.b16 %v2918
        %v2967 = vunpack.c.h.b16 %v2918
        %v2968 = vunpack.c.l.b16 %v2919
        %v2969 = vunpack.c.h.b16 %v2919
        %v2970 = vunpack.c.l.b16 %v2920
        %v2971 = vunpack.c.h.b16 %v2920
        %v2972 = vunpack.c.l.b16 %v2921
        %v2973 = vunpack.c.h.b16 %v2921
        %v2974 = vunpack.c.l.b16 %v2922
        %v2975 = vunpack.c.h.b16 %v2922
        %v2976 = vunpack.c.l.b16 %v2923
        %v2977 = vunpack.c.h.b16 %v2923
        %v2978 = vpack.c.b16 %v2948, %v2946
        %v2979 = vpack.c.b16 %v2949, %v2947
        %v2980 = vpack.c.b16 %v2952, %v2950
        %v2981 = vpack.c.b16 %v2953, %v2951
        %v2982 = vpack.c.b16 %v2956, %v2954
        %v2983 = vpack.c.b16 %v2957, %v2955
        %v2984 = vpack.c.b16 %v2960, %v2958
        %v2985 = vpack.c.b16 %v2961, %v2959
        %v2986 = vpack.c.b16 %v2964, %v2962
        %v2987 = vpack.c.b16 %v2965, %v2963
        %v2988 = vpack.c.b16 %v2968, %v2966
        %v2989 = vpack.c.b16 %v2969, %v2967
        %v2990 = vpack.c.b16 %v2972, %v2970
        %v2991 = vpack.c.b16 %v2973, %v2971
        %v2992 = vpack.c.b16 %v2976, %v2974
        %v2993 = vpack.c.b16 %v2977, %v2975
        %3010 = vmatpush.bf16.msra.mxu0 %v2992
        %3011 = vmatpush.bf16.msra.mxu0 %v2990
        %3012 = vmatpush.bf16.msra.mxu0 %v2988
        %3013 = vmatpush.bf16.msra.mxu0 %v2986
        %3014 = vmatpush.bf16.msra.mxu0 %v2984
        %3015 = vmatpush.bf16.msra.mxu0 %v2982
        %3016 = vmatpush.bf16.msra.mxu0 %v2980
        %3017 = vmatpush.bf16.msra.mxu0 %v2978
        %3018 = vmatmul.bf16.gmra.mxu0 %v2793
        %v3019 = vpop.f32.mrf.mxu0
        %v3020 = vadd.f32 %v2926, %v3019
        %v3021 = vpop.f32.mrf.mxu0
        %v3022 = vadd.f32 %v2926, %v3021
        %3023 = vdwg.mxu0
        %3024 = vmatpush.bf16.msra.mxu0 %v2993
        %3025 = vmatpush.bf16.msra.mxu0 %v2991
        %3026 = vmatpush.bf16.msra.mxu0 %v2989
        %3027 = vmatpush.bf16.msra.mxu0 %v2987
        %3028 = vmatpush.bf16.msra.mxu0 %v2985
        %3029 = vmatpush.bf16.msra.mxu0 %v2983
        %3030 = vmatpush.bf16.msra.mxu0 %v2981
        %3031 = vmatpush.bf16.msra.mxu0 %v2979
        %3032 = vmatmul.bf16.gmra.mxu0 %v2793
        %v3033 = vpop.f32.mrf.mxu0
        %v3034 = vadd.f32 %v2927, %v3033
        %v3035 = vpop.f32.mrf.mxu0
        %v3036 = vadd.f32 %v2927, %v3035
        %3037 = vdwg.mxu0
        %v3038 = vsub.f32 0.0, %v3020
        %v3039 = vsub.f32 0.0, %v3034
        %v3040 = vsub.f32 0.0, %v3022
        %v3041 = vsub.f32 0.0, %v3036
        %v3042 = vmul.f32 %v3038, 1.442695
        %v3043 = vpow.pop %v3042
        %v3044 = vmul.f32 %v3039, 1.442695
        %v3045 = vpow.pop %v3044
        %v3046 = vmul.f32 %v3040, 1.442695
        %v3047 = vpow.pop %v3046
        %v3048 = vmul.f32 %v3041, 1.442695
        %v3049 = vpow.pop %v3048
        %v3050 = vadd.f32 %v3043, 1.0
        %v3051 = vadd.f32 %v3045, 1.0
        %v3052 = vadd.f32 %v3047, 1.0
        %v3053 = vadd.f32 %v3049, 1.0
        %v3054 = vrcp.pop %v3050
        %v3055 = vmul.f32 %v3050, %v3054
        %v3056 = vsub.f32 1.0, %v3055
        %v3057 = vmul.f32 %v3054, %v3056
        %v3058 = vadd.f32 %v3054, %v3057
        %vm3059 = vweird.f32 %v3050
        %vm3060 = vweird.f32 %v3054
        %vm3061 = vmor %vm3059, %vm3060
        %v3062 = vsel %vm3061, %v3054, %v3058
        %v3063 = vand.u32 2147483647, %v3050
        %vm3064 = vcmp.eq.f32.partialorder %v3063, 8.507059e+37
        %v3065 = vand.u32 %v3050, 2147483648
        %v3066 = vor.u32 1.1754944e-38, %v3065
        %v3067 = vsel %vm3064, %v3066, %v3062
        %v3068 = vmul.f32 1.0, %v3067
        %v3069 = vrcp.pop %v3051
        %v3070 = vmul.f32 %v3051, %v3069
        %v3071 = vsub.f32 1.0, %v3070
        %v3072 = vmul.f32 %v3069, %v3071
        %v3073 = vadd.f32 %v3069, %v3072
        %vm3074 = vweird.f32 %v3051
        %vm3075 = vweird.f32 %v3069
        %vm3076 = vmor %vm3074, %vm3075
        %v3077 = vsel %vm3076, %v3069, %v3073
        %v3078 = vand.u32 2147483647, %v3051
        %vm3079 = vcmp.eq.f32.partialorder %v3078, 8.507059e+37
        %v3080 = vand.u32 %v3051, 2147483648
        %v3081 = vor.u32 1.1754944e-38, %v3080
        %v3082 = vsel %vm3079, %v3081, %v3077
        %v3083 = vmul.f32 1.0, %v3082
        %v3084 = vrcp.pop %v3052
        %v3085 = vmul.f32 %v3052, %v3084
        %v3086 = vsub.f32 1.0, %v3085
        %v3087 = vmul.f32 %v3084, %v3086
        %v3088 = vadd.f32 %v3084, %v3087
        %vm3089 = vweird.f32 %v3052
        %vm3090 = vweird.f32 %v3084
        %vm3091 = vmor %vm3089, %vm3090
        %v3092 = vsel %vm3091, %v3084, %v3088
        %v3093 = vand.u32 2147483647, %v3052
        %vm3094 = vcmp.eq.f32.partialorder %v3093, 8.507059e+37
        %v3095 = vand.u32 %v3052, 2147483648
        %v3096 = vor.u32 1.1754944e-38, %v3095
        %v3097 = vsel %vm3094, %v3096, %v3092
        %v3098 = vmul.f32 1.0, %v3097
        %v3099 = vrcp.pop %v3053
        %v3100 = vmul.f32 %v3053, %v3099
        %v3101 = vsub.f32 1.0, %v3100
        %v3102 = vmul.f32 %v3099, %v3101
        %v3103 = vadd.f32 %v3099, %v3102
        %vm3104 = vweird.f32 %v3053
        %vm3105 = vweird.f32 %v3099
        %vm3106 = vmor %vm3104, %vm3105
        %v3107 = vsel %vm3106, %v3099, %v3103
        %v3108 = vand.u32 2147483647, %v3053
        %vm3109 = vcmp.eq.f32.partialorder %v3108, 8.507059e+37
        %v3110 = vand.u32 %v3053, 2147483648
        %v3111 = vor.u32 1.1754944e-38, %v3110
        %v3112 = vsel %vm3109, %v3111, %v3107
        %v3113 = vmul.f32 1.0, %v3112
        %v3114 = vmul.f32 %v2890, %v3068
        %v3115 = vmul.f32 %v2904, %v3083
        %v3116 = vmul.f32 %v2892, %v3098
        %v3117 = vmul.f32 %v2906, %v3113
        %v3118 = vld [vmem:[%s15] sm:$0xff]
        %v3119 = vld [vmem:[%s15 + $0x8] sm:$0xff]
        %v3120 = vld [vmem:[%s15 + $0x10] sm:$0xff]
        %v3121 = vld [vmem:[%s15 + $0x18] sm:$0xff]
        %v3122 = vsel %vm882, %v3116, 0.0
        %v3123 = vsel %vm882, %v3117, 0.0
        %v3124 = vperm.slane %v3118, 0
        %v3125 = vperm.slane %v3119, 0
        %v3126 = vmul.f32 %v3124, 0.0
        %v3127 = vmul.f32 %v3125, 0.0
        %v3128 = vmul.f32 %v3114, %v3124
        %v3129 = vmul.f32 %v3115, %v3125
        %v3130 = vperm.slane %v3118, 1
        %v3131 = vperm.slane %v3119, 1
        %v3132 = vmul.f32 %v3130, 0.0
        %v3133 = vmul.f32 %v3131, 0.0
        %v3134 = vmul.f32 %v3114, %v3130
        %v3135 = vmul.f32 %v3115, %v3131
        %vm3140 = vcmask 1046528
        %v3141 = vrot.slane %v3132, 1
        %v3142 = vrot.slane %v3134, 1
        %v3143 = vsel %vm3140, %v3141, %v3142
        %v3144 = vrot.slane %v3133, 1
        %v3145 = vrot.slane %v3135, 1
        %v3146 = vsel %vm3140, %v3144, %v3145
        %v3151 = vadd.f32 %v3126, %v3143
        %v3152 = vadd.f32 %v3127, %v3146
        %v3153 = vadd.f32 %v3128, %v3142
        %v3154 = vadd.f32 %v3129, %v3145
        %v3155 = vperm.slane %v3118, 2
        %v3156 = vperm.slane %v3119, 2
        %v3157 = vmul.f32 %v3155, 0.0
        %v3158 = vmul.f32 %v3156, 0.0
        %v3159 = vmul.f32 %v3114, %v3155
        %v3160 = vmul.f32 %v3115, %v3156
        %vm3165 = vcmask 1045504
        %v3166 = vrot.slane %v3157, 2
        %v3167 = vrot.slane %v3159, 2
        %v3168 = vsel %vm3165, %v3166, %v3167
        %v3169 = vrot.slane %v3158, 2
        %v3170 = vrot.slane %v3160, 2
        %v3171 = vsel %vm3165, %v3169, %v3170
        %v3176 = vadd.f32 %v3151, %v3168
        %v3177 = vadd.f32 %v3152, %v3171
        %v3178 = vadd.f32 %v3153, %v3167
        %v3179 = vadd.f32 %v3154, %v3170
        %v3180 = vperm.slane %v3118, 3
        %v3181 = vperm.slane %v3119, 3
        %v3182 = vmul.f32 %v3180, 0.0
        %v3183 = vmul.f32 %v3181, 0.0
        %v3184 = vmul.f32 %v3114, %v3180
        %v3185 = vmul.f32 %v3115, %v3181
        %v3190 = vrot.slane %v3182, 3
        %v3191 = vrot.slane %v3184, 3
        %v3192 = vsel %vm2120, %v3190, %v3191
        %v3193 = vrot.slane %v3183, 3
        %v3194 = vrot.slane %v3185, 3
        %v3195 = vsel %vm2120, %v3193, %v3194
        %v3200 = vadd.f32 %v3176, %v3192
        %v3201 = vadd.f32 %v3177, %v3195
        %v3202 = vadd.f32 %v3178, %v3191
        %v3203 = vadd.f32 %v3179, %v3194
        %v3204 = vperm.slane %v3118, 4
        %v3205 = vperm.slane %v3119, 4
        %v3206 = vmul.f32 %v3204, 0.0
        %v3207 = vmul.f32 %v3205, 0.0
        %v3208 = vmul.f32 %v3114, %v3204
        %v3209 = vmul.f32 %v3115, %v3205
        %v3214 = vrot.slane %v3206, 4
        %v3215 = vrot.slane %v3208, 4
        %v3216 = vsel %vm2119, %v3214, %v3215
        %v3217 = vrot.slane %v3207, 4
        %v3218 = vrot.slane %v3209, 4
        %v3219 = vsel %vm2119, %v3217, %v3218
        %v3224 = vadd.f32 %v3200, %v3216
        %v3225 = vadd.f32 %v3201, %v3219
        %v3226 = vadd.f32 %v3202, %v3215
        %v3227 = vadd.f32 %v3203, %v3218
        %v3228 = vperm.slane %v3118, 5
        %v3229 = vperm.slane %v3119, 5
        %v3230 = vmul.f32 %v3228, 0.0
        %v3231 = vmul.f32 %v3229, 0.0
        %v3232 = vmul.f32 %v3114, %v3228
        %v3233 = vmul.f32 %v3115, %v3229
        %vm3238 = vcmask 1042432
        %v3239 = vrot.slane %v3230, 5
        %v3240 = vrot.slane %v3232, 5
        %v3241 = vsel %vm3238, %v3239, %v3240
        %v3242 = vrot.slane %v3231, 5
        %v3243 = vrot.slane %v3233, 5
        %v3244 = vsel %vm3238, %v3242, %v3243
        %v3249 = vadd.f32 %v3224, %v3241
        %v3250 = vadd.f32 %v3225, %v3244
        %v3251 = vadd.f32 %v3226, %v3240
        %v3252 = vadd.f32 %v3227, %v3243
        %v3253 = vperm.slane %v3118, 6
        %v3254 = vperm.slane %v3119, 6
        %v3255 = vmul.f32 %v3253, 0.0
        %v3256 = vmul.f32 %v3254, 0.0
        %v3257 = vmul.f32 %v3114, %v3253
        %v3258 = vmul.f32 %v3115, %v3254
        %vm3263 = vcmask 1041408
        %v3264 = vrot.slane %v3255, 6
        %v3265 = vrot.slane %v3257, 6
        %v3266 = vsel %vm3263, %v3264, %v3265
        %v3267 = vrot.slane %v3256, 6
        %v3268 = vrot.slane %v3258, 6
        %v3269 = vsel %vm3263, %v3267, %v3268
        %v3274 = vadd.f32 %v3249, %v3266
        %v3275 = vadd.f32 %v3250, %v3269
        %v3276 = vadd.f32 %v3251, %v3265
        %v3277 = vadd.f32 %v3252, %v3268
        %v3278 = vperm.slane %v3118, 7
        %v3279 = vperm.slane %v3119, 7
        %v3280 = vmul.f32 %v3278, 0.0
        %v3281 = vmul.f32 %v3279, 0.0
        %v3282 = vmul.f32 %v3114, %v3278
        %v3283 = vmul.f32 %v3115, %v3279
        %v3288 = vrot.slane %v3280, 7
        %v3289 = vrot.slane %v3282, 7
        %v3290 = vsel %vm882, %v3288, %v3289
        %v3291 = vrot.slane %v3281, 7
        %v3292 = vrot.slane %v3283, 7
        %v3293 = vsel %vm882, %v3291, %v3292
        %v3298 = vadd.f32 %v3274, %v3290
        %v3299 = vadd.f32 %v3275, %v3293
        %v3300 = vadd.f32 %v3276, %v3289
        %v3301 = vadd.f32 %v3277, %v3292
        %v3302 = vperm.slane %v3120, 0
        %v3303 = vperm.slane %v3121, 0
        %v3304 = vmul.f32 %v3114, %v3302
        %v3305 = vmul.f32 %v3115, %v3303
        %v3306 = vmul.f32 %v3122, %v3302
        %v3307 = vmul.f32 %v3123, %v3303
        %v3308 = vadd.f32 %v3298, %v3304
        %v3309 = vadd.f32 %v3299, %v3305
        %v3310 = vadd.f32 %v3300, %v3306
        %v3311 = vadd.f32 %v3301, %v3307
        %v3312 = vperm.slane %v3120, 1
        %v3313 = vperm.slane %v3121, 1
        %v3314 = vmul.f32 %v3114, %v3312
        %v3315 = vmul.f32 %v3115, %v3313
        %v3316 = vmul.f32 %v3122, %v3312
        %v3317 = vmul.f32 %v3123, %v3313
        %v3322 = vrot.slane %v3314, 1
        %v3323 = vrot.slane %v3316, 1
        %v3324 = vsel %vm3140, %v3322, %v3323
        %v3325 = vrot.slane %v3315, 1
        %v3326 = vrot.slane %v3317, 1
        %v3327 = vsel %vm3140, %v3325, %v3326
        %v3332 = vadd.f32 %v3308, %v3324
        %v3333 = vadd.f32 %v3309, %v3327
        %v3334 = vadd.f32 %v3310, %v3323
        %v3335 = vadd.f32 %v3311, %v3326
        %v3336 = vperm.slane %v3120, 2
        %v3337 = vperm.slane %v3121, 2
        %v3338 = vmul.f32 %v3114, %v3336
        %v3339 = vmul.f32 %v3115, %v3337
        %v3340 = vmul.f32 %v3122, %v3336
        %v3341 = vmul.f32 %v3123, %v3337
        %v3346 = vrot.slane %v3338, 2
        %v3347 = vrot.slane %v3340, 2
        %v3348 = vsel %vm3165, %v3346, %v3347
        %v3349 = vrot.slane %v3339, 2
        %v3350 = vrot.slane %v3341, 2
        %v3351 = vsel %vm3165, %v3349, %v3350
        %v3356 = vadd.f32 %v3332, %v3348
        %v3357 = vadd.f32 %v3333, %v3351
        %v3358 = vadd.f32 %v3334, %v3347
        %v3359 = vadd.f32 %v3335, %v3350
        %v3360 = vperm.slane %v3120, 3
        %v3361 = vperm.slane %v3121, 3
        %v3362 = vmul.f32 %v3114, %v3360
        %v3363 = vmul.f32 %v3115, %v3361
        %v3364 = vmul.f32 %v3122, %v3360
        %v3365 = vmul.f32 %v3123, %v3361
        %v3370 = vrot.slane %v3362, 3
        %v3371 = vrot.slane %v3364, 3
        %v3372 = vsel %vm2120, %v3370, %v3371
        %v3373 = vrot.slane %v3363, 3
        %v3374 = vrot.slane %v3365, 3
        %v3375 = vsel %vm2120, %v3373, %v3374
        %v3380 = vadd.f32 %v3356, %v3372
        %v3381 = vadd.f32 %v3357, %v3375
        %v3382 = vadd.f32 %v3358, %v3371
        %v3383 = vadd.f32 %v3359, %v3374
        %v3384 = vperm.slane %v3120, 4
        %v3385 = vperm.slane %v3121, 4
        %v3386 = vmul.f32 %v3114, %v3384
        %v3387 = vmul.f32 %v3115, %v3385
        %v3388 = vmul.f32 %v3122, %v3384
        %v3389 = vmul.f32 %v3123, %v3385
        %v3394 = vrot.slane %v3386, 4
        %v3395 = vrot.slane %v3388, 4
        %v3396 = vsel %vm2119, %v3394, %v3395
        %v3397 = vrot.slane %v3387, 4
        %v3398 = vrot.slane %v3389, 4
        %v3399 = vsel %vm2119, %v3397, %v3398
        %v3404 = vadd.f32 %v3380, %v3396
        %v3405 = vadd.f32 %v3381, %v3399
        %v3406 = vadd.f32 %v3382, %v3395
        %v3407 = vadd.f32 %v3383, %v3398
        %v3408 = vperm.slane %v3120, 5
        %v3409 = vperm.slane %v3121, 5
        %v3410 = vmul.f32 %v3114, %v3408
        %v3411 = vmul.f32 %v3115, %v3409
        %v3412 = vmul.f32 %v3122, %v3408
        %v3413 = vmul.f32 %v3123, %v3409
        %v3418 = vrot.slane %v3410, 5
        %v3419 = vrot.slane %v3412, 5
        %v3420 = vsel %vm3238, %v3418, %v3419
        %v3421 = vrot.slane %v3411, 5
        %v3422 = vrot.slane %v3413, 5
        %v3423 = vsel %vm3238, %v3421, %v3422
        %v3428 = vadd.f32 %v3404, %v3420
        %v3429 = vadd.f32 %v3405, %v3423
        %v3430 = vadd.f32 %v3406, %v3419
        %v3431 = vadd.f32 %v3407, %v3422
        %v3432 = vperm.slane %v3120, 6
        %v3433 = vperm.slane %v3121, 6
        %v3434 = vmul.f32 %v3114, %v3432
        %v3435 = vmul.f32 %v3115, %v3433
        %v3436 = vmul.f32 %v3122, %v3432
        %v3437 = vmul.f32 %v3123, %v3433
        %v3442 = vrot.slane %v3434, 6
        %v3443 = vrot.slane %v3436, 6
        %v3444 = vsel %vm3263, %v3442, %v3443
        %v3445 = vrot.slane %v3435, 6
        %v3446 = vrot.slane %v3437, 6
        %v3447 = vsel %vm3263, %v3445, %v3446
        %v3452 = vadd.f32 %v3428, %v3444
        %v3453 = vadd.f32 %v3429, %v3447
        %v3454 = vadd.f32 %v3430, %v3443
        %v3455 = vadd.f32 %v3431, %v3446
        %v3456 = vperm.slane %v3120, 7
        %v3457 = vperm.slane %v3121, 7
        %v3458 = vmul.f32 %v3114, %v3456
        %v3459 = vmul.f32 %v3115, %v3457
        %v3460 = vmul.f32 %v3122, %v3456
        %v3461 = vmul.f32 %v3123, %v3457
        %v3466 = vrot.slane %v3458, 7
        %v3467 = vrot.slane %v3460, 7
        %v3468 = vsel %vm882, %v3466, %v3467
        %v3469 = vrot.slane %v3459, 7
        %v3470 = vrot.slane %v3461, 7
        %v3471 = vsel %vm882, %v3469, %v3470
        %v3476 = vadd.f32 %v3452, %v3468
        %v3477 = vadd.f32 %v3453, %v3471
        %v3478 = vadd.f32 %v3454, %v3467
        %v3479 = vadd.f32 %v3455, %v3470
        %v3480 = vld [vmem:[%s16] sm:$0x3]
        %v3482 = vperm.slane %v3480, 0
        %v3483 = vperm.slane %v3480, 1
        %v3486 = vadd.f32 %v3476, %v3482
        %v3487 = vadd.f32 %v3477, %v3483
        %v3488 = vadd.f32 %v3478, %v3482
        %v3489 = vadd.f32 %v3479, %v3483
        %v3490 = vld [vmem:[%s17] sm:$0x3]
        %v3492 = vperm.slane %v3490, 0
        %v3493 = vperm.slane %v3490, 1
        %v3496 = vmul.f32 %v3486, %v3492
        %v3497 = vmul.f32 %v3487, %v3493
        %v3498 = vmul.f32 %v3488, %v3492
        %v3499 = vmul.f32 %v3489, %v3493
        %v3500 = vld [vmem:[%s18] sm:$0x3]
        %v3502 = vperm.slane %v3500, 0
        %v3503 = vperm.slane %v3500, 1
        %v3506 = vadd.f32 %v3496, %v3502
        %v3507 = vadd.f32 %v3497, %v3503
        %v3508 = vadd.f32 %v3498, %v3502
        %v3509 = vadd.f32 %v3499, %v3503
        %v3510 = vsub.f32 0.0, %v3506
        %v3511 = vsub.f32 0.0, %v3507
        %v3512 = vsub.f32 0.0, %v3508
        %v3513 = vsub.f32 0.0, %v3509
        %v3514 = vmul.f32 %v3510, 1.442695
        %v3515 = vpow.pop %v3514
        %v3516 = vmul.f32 %v3511, 1.442695
        %v3517 = vpow.pop %v3516
        %v3518 = vmul.f32 %v3512, 1.442695
        %v3519 = vpow.pop %v3518
        %v3520 = vmul.f32 %v3513, 1.442695
        %v3521 = vpow.pop %v3520
        %v3522 = vadd.f32 %v3515, 1.0
        %v3523 = vadd.f32 %v3517, 1.0
        %v3524 = vadd.f32 %v3519, 1.0
        %v3525 = vadd.f32 %v3521, 1.0
        %v3526 = vrcp.pop %v3522
        %v3527 = vmul.f32 %v3522, %v3526
        %v3528 = vsub.f32 1.0, %v3527
        %v3529 = vmul.f32 %v3526, %v3528
        %v3530 = vadd.f32 %v3526, %v3529
        %vm3531 = vweird.f32 %v3522
        %vm3532 = vweird.f32 %v3526
        %vm3533 = vmor %vm3531, %vm3532
        %v3534 = vsel %vm3533, %v3526, %v3530
        %v3535 = vand.u32 2147483647, %v3522
        %vm3536 = vcmp.eq.f32.partialorder %v3535, 8.507059e+37
        %v3537 = vand.u32 %v3522, 2147483648
        %v3538 = vor.u32 1.1754944e-38, %v3537
        %v3539 = vsel %vm3536, %v3538, %v3534
        %v3540 = vmul.f32 1.0, %v3539
        %v3541 = vrcp.pop %v3523
        %v3542 = vmul.f32 %v3523, %v3541
        %v3543 = vsub.f32 1.0, %v3542
        %v3544 = vmul.f32 %v3541, %v3543
        %v3545 = vadd.f32 %v3541, %v3544
        %vm3546 = vweird.f32 %v3523
        %vm3547 = vweird.f32 %v3541
        %vm3548 = vmor %vm3546, %vm3547
        %v3549 = vsel %vm3548, %v3541, %v3545
        %v3550 = vand.u32 2147483647, %v3523
        %vm3551 = vcmp.eq.f32.partialorder %v3550, 8.507059e+37
        %v3552 = vand.u32 %v3523, 2147483648
        %v3553 = vor.u32 1.1754944e-38, %v3552
        %v3554 = vsel %vm3551, %v3553, %v3549
        %v3555 = vmul.f32 1.0, %v3554
        %v3556 = vrcp.pop %v3524
        %v3557 = vmul.f32 %v3524, %v3556
        %v3558 = vsub.f32 1.0, %v3557
        %v3559 = vmul.f32 %v3556, %v3558
        %v3560 = vadd.f32 %v3556, %v3559
        %vm3561 = vweird.f32 %v3524
        %vm3562 = vweird.f32 %v3556
        %vm3563 = vmor %vm3561, %vm3562
        %v3564 = vsel %vm3563, %v3556, %v3560
        %v3565 = vand.u32 2147483647, %v3524
        %vm3566 = vcmp.eq.f32.partialorder %v3565, 8.507059e+37
        %v3567 = vand.u32 %v3524, 2147483648
        %v3568 = vor.u32 1.1754944e-38, %v3567
        %v3569 = vsel %vm3566, %v3568, %v3564
        %v3570 = vmul.f32 1.0, %v3569
        %v3571 = vrcp.pop %v3525
        %v3572 = vmul.f32 %v3525, %v3571
        %v3573 = vsub.f32 1.0, %v3572
        %v3574 = vmul.f32 %v3571, %v3573
        %v3575 = vadd.f32 %v3571, %v3574
        %vm3576 = vweird.f32 %v3525
        %vm3577 = vweird.f32 %v3571
        %vm3578 = vmor %vm3576, %vm3577
        %v3579 = vsel %vm3578, %v3571, %v3575
        %v3580 = vand.u32 2147483647, %v3525
        %vm3581 = vcmp.eq.f32.partialorder %v3580, 8.507059e+37
        %v3582 = vand.u32 %v3525, 2147483648
        %v3583 = vor.u32 1.1754944e-38, %v3582
        %v3584 = vsel %vm3581, %v3583, %v3579
        %v3585 = vmul.f32 1.0, %v3584
        %v3586 = vmul.f32 %v3506, %v3540
        %v3587 = vmul.f32 %v3507, %v3555
        %v3588 = vmul.f32 %v3508, %v3570
        %v3589 = vmul.f32 %v3509, %v3585
        %v3590 = vld [vmem:[#allocation7] sm:$0xf]
        %v3591 = vld [vmem:[#allocation7 + $0x4] sm:$0xf]
        %v3592 = vld [vmem:[#allocation7 + $0x8] sm:$0xf]
        %v3593 = vld [vmem:[#allocation7 + $0xc] sm:$0xf]
        %v3594 = vld [vmem:[#allocation7 + $0x10] sm:$0xf]
        %v3595 = vld [vmem:[#allocation7 + $0x14] sm:$0xf]
        %v3596 = vld [vmem:[#allocation7 + $0x18] sm:$0xf]
        %v3597 = vld [vmem:[#allocation7 + $0x1c] sm:$0xf]
        %v3598 = vld [vmem:[#allocation7 + $0x20] sm:$0xf]
        %v3599 = vld [vmem:[#allocation7 + $0x24] sm:$0xf]
        %v3600 = vld [vmem:[#allocation7 + $0x28] sm:$0xf]
        %v3601 = vld [vmem:[#allocation7 + $0x2c] sm:$0xf]
        %v3602 = vld [vmem:[#allocation7 + $0x30] sm:$0xf]
        %v3603 = vld [vmem:[#allocation7 + $0x34] sm:$0xf]
        %v3604 = vld [vmem:[#allocation7 + $0x38] sm:$0xf]
        %v3605 = vld [vmem:[#allocation7 + $0x3c] sm:$0xf]
        %v3606 = vld [vmem:[#allocation7 + $0x40] sm:$0xf]
        %v3607 = vld [vmem:[#allocation7 + $0x44] sm:$0xf]
        %v3608 = vld [vmem:[#allocation7 + $0x48] sm:$0xf]
        %v3609 = vld [vmem:[#allocation7 + $0x4c] sm:$0xf]
        %v3610 = vld [vmem:[#allocation7 + $0x50] sm:$0xf]
        %v3611 = vld [vmem:[#allocation7 + $0x54] sm:$0xf]
        %v3612 = vld [vmem:[#allocation7 + $0x58] sm:$0xf]
        %v3613 = vld [vmem:[#allocation7 + $0x5c] sm:$0xf]
        %v3614 = vld [vmem:[#allocation7 + $0x60] sm:$0xf]
        %v3615 = vld [vmem:[#allocation7 + $0x64] sm:$0xf]
        %v3616 = vld [vmem:[#allocation7 + $0x68] sm:$0xf]
        %v3617 = vld [vmem:[#allocation7 + $0x6c] sm:$0xf]
        %v3618 = vld [vmem:[#allocation7 + $0x70] sm:$0xf]
        %v3619 = vld [vmem:[#allocation7 + $0x74] sm:$0xf]
        %v3620 = vld [vmem:[#allocation7 + $0x78] sm:$0xf]
        %v3621 = vld [vmem:[#allocation7 + $0x7c] sm:$0xf]
        %v3622 = vpack.c.bf16 %v3588, %v3586
        %v3623 = vpack.c.bf16 %v3589, %v3587
        %v3656 = vunpack.c.l.b16 %v3590
        %v3657 = vunpack.c.l.b16 %v3591
        %v3658 = vunpack.c.l.b16 %v3592
        %v3659 = vunpack.c.l.b16 %v3593
        %v3660 = vunpack.c.l.b16 %v3594
        %v3661 = vunpack.c.l.b16 %v3595
        %v3662 = vunpack.c.l.b16 %v3596
        %v3663 = vunpack.c.l.b16 %v3597
        %v3664 = vunpack.c.l.b16 %v3598
        %v3665 = vunpack.c.l.b16 %v3599
        %v3666 = vunpack.c.l.b16 %v3600
        %v3667 = vunpack.c.l.b16 %v3601
        %v3668 = vunpack.c.l.b16 %v3602
        %v3669 = vunpack.c.l.b16 %v3603
        %v3670 = vunpack.c.l.b16 %v3604
        %v3671 = vunpack.c.l.b16 %v3605
        %v3672 = vunpack.c.l.b16 %v3606
        %v3673 = vunpack.c.l.b16 %v3607
        %v3674 = vunpack.c.l.b16 %v3608
        %v3675 = vunpack.c.l.b16 %v3609
        %v3676 = vunpack.c.l.b16 %v3610
        %v3677 = vunpack.c.l.b16 %v3611
        %v3678 = vunpack.c.l.b16 %v3612
        %v3679 = vunpack.c.l.b16 %v3613
        %v3680 = vunpack.c.l.b16 %v3614
        %v3681 = vunpack.c.l.b16 %v3615
        %v3682 = vunpack.c.l.b16 %v3616
        %v3683 = vunpack.c.l.b16 %v3617
        %v3684 = vunpack.c.l.b16 %v3618
        %v3685 = vunpack.c.l.b16 %v3619
        %v3686 = vunpack.c.l.b16 %v3620
        %v3687 = vunpack.c.l.b16 %v3621
        %v3688 = vpack.c.b16 %v3657, %v3656
        %v3689 = vpack.c.b16 %v3659, %v3658
        %v3690 = vpack.c.b16 %v3661, %v3660
        %v3691 = vpack.c.b16 %v3663, %v3662
        %v3692 = vpack.c.b16 %v3665, %v3664
        %v3693 = vpack.c.b16 %v3667, %v3666
        %v3694 = vpack.c.b16 %v3669, %v3668
        %v3695 = vpack.c.b16 %v3671, %v3670
        %v3696 = vpack.c.b16 %v3673, %v3672
        %v3697 = vpack.c.b16 %v3675, %v3674
        %v3698 = vpack.c.b16 %v3677, %v3676
        %v3699 = vpack.c.b16 %v3679, %v3678
        %v3700 = vpack.c.b16 %v3681, %v3680
        %v3701 = vpack.c.b16 %v3683, %v3682
        %v3702 = vpack.c.b16 %v3685, %v3684
        %v3703 = vpack.c.b16 %v3687, %v3686
        %3720 = vmatpush.bf16.msra.mxu0 %v3695
        %3721 = vmatpush.bf16.msra.mxu0 %v3694
        %3722 = vmatpush.bf16.msra.mxu0 %v3693
        %3723 = vmatpush.bf16.msra.mxu0 %v3692
        %3724 = vmatpush.bf16.msra.mxu0 %v3691
        %3725 = vmatpush.bf16.msra.mxu0 %v3690
        %3726 = vmatpush.bf16.msra.mxu0 %v3689
        %3727 = vmatpush.bf16.msra.mxu0 %v3688
        %3728 = vmatmul.bf16.gmra.mxu0 %v3622
        %v3729 = vpop.f32.mrf.mxu0
        %v3730 = vadd.f32 0.0, %v3729
        %v3731 = vpop.f32.mrf.mxu0
        %v3732 = vadd.f32 0.0, %v3731
        %3733 = vdwg.mxu0
        %3734 = vmatpush.bf16.msra.mxu0 %v3703
        %3735 = vmatpush.bf16.msra.mxu0 %v3702
        %3736 = vmatpush.bf16.msra.mxu0 %v3701
        %3737 = vmatpush.bf16.msra.mxu0 %v3700
        %3738 = vmatpush.bf16.msra.mxu0 %v3699
        %3739 = vmatpush.bf16.msra.mxu0 %v3698
        %3740 = vmatpush.bf16.msra.mxu0 %v3697
        %3741 = vmatpush.bf16.msra.mxu0 %v3696
        %3742 = vmatmul.bf16.gmra.mxu0 %v3623
        %v3743 = vpop.f32.mrf.mxu0
        %v3744 = vadd.f32 %v3730, %v3743
        %v3745 = vpop.f32.mrf.mxu0
        %v3746 = vadd.f32 %v3732, %v3745
        %3747 = vdwg.mxu0
        %v3748 = vadd.f32 %v2725, %v3744
        %v3749 = vadd.f32 %v2726, %v3746
        %v3750 = vld [vmem:[%s20] sm:$0x1]
        %v3752 = vperm.slane %v3750, 0
        %v3754 = vadd.f32 %v3748, %v3752
        %v3755 = vadd.f32 %v3749, %v3752
        %v3756 = vld [vmem:[%s2 + $0x3] sm:$0x1]
        %v3757 = vld [vmem:[#allocation2 + $0x3] sm:$0x1]
        %3758 = vadd.xlane.f32.xlu0 %v3754
        %v3759 = vpop.xlane.xlu0 %3758
        %v3760 = vsel %vm882, %v3755, 0.0
        %3761 = vadd.xlane.f32.xlu0 %v3760
        %v3762 = vpop.xlane.xlu0 %3761
        %v3763 = vmul.f32 %v3759, %v892
        %v3764 = vmul.f32 %v3762, %v892
        %v3765 = vsub.f32 %v3754, %v3763
        %v3766 = vsub.f32 %v3755, %v3764
        %v3767 = vmul.f32 %v3765, %v3765
        %v3768 = vmul.f32 %v3766, %v3766
        %3769 = vadd.xlane.f32.xlu0 %v3767
        %v3770 = vpop.xlane.xlu0 %3769
        %v3771 = vsel %vm882, %v3768, 0.0
        %3772 = vadd.xlane.f32.xlu0 %v3771
        %v3773 = vpop.xlane.xlu0 %3772
        %v3774 = vmul.f32 %v3770, %v892
        %v3775 = vmul.f32 %v3773, %v892
        %v3776 = vadd.f32 %v3774, 1e-05
        %v3777 = vadd.f32 %v3775, 1e-05
        %v3778 = vrsqrt.pop %v3776
        %v3779 = vmul.f32 %v3778, %v3776
        %v3780 = vmul.f32 %v3779, %v3778
        %v3781 = vmul.f32 0.5, %v3780
        %v3782 = vsub.f32 1.5, %v3781
        %v3783 = vmul.f32 %v3778, %v3782
        %vm3784 = vweird.f32 %v3776
        %vm3785 = vweird.f32 %v3778
        %vm3786 = vmor %vm3784, %vm3785
        %v3787 = vsel %vm3786, %v3778, %v3783
        %v3788 = vrsqrt.pop %v3777
        %v3789 = vmul.f32 %v3788, %v3777
        %v3790 = vmul.f32 %v3789, %v3788
        %v3791 = vmul.f32 0.5, %v3790
        %v3792 = vsub.f32 1.5, %v3791
        %v3793 = vmul.f32 %v3788, %v3792
        %vm3794 = vweird.f32 %v3777
        %vm3795 = vweird.f32 %v3788
        %vm3796 = vmor %vm3794, %vm3795
        %v3797 = vsel %vm3796, %v3788, %v3793
        %v3798 = vmul.f32 %v3765, %v3787
        %v3799 = vmul.f32 %v3766, %v3797
        %v3800 = vperm.slane %v3756, 0
        %v3801 = vmul.f32 %v3798, %v3800
        %v3802 = vmul.f32 %v3799, %v3800
        %v3803 = vperm.slane %v3757, 0
        %v3804 = vadd.f32 %v3801, %v3803
        %v3805 = vadd.f32 %v3802, %v3803
        %v3806 = vld [vmem:[%s21] sm:$0xff]
        %v3807 = vld [vmem:[%s21 + $0x8] sm:$0xff]
        %v3808 = vld [vmem:[%s21 + $0x10] sm:$0xff]
        %v3809 = vld [vmem:[%s21 + $0x18] sm:$0xff]
        %v3810 = vld [vmem:[%s21 + $0x20] sm:$0xff]
        %v3811 = vld [vmem:[%s21 + $0x28] sm:$0xff]
        %v3812 = vld [vmem:[%s21 + $0x30] sm:$0xff]
        %v3813 = vld [vmem:[%s21 + $0x38] sm:$0xff]
        %v3814 = vld [vmem:[%s21 + $0x40] sm:$0xff]
        %v3815 = vld [vmem:[%s21 + $0x48] sm:$0xff]
        %v3816 = vld [vmem:[%s21 + $0x50] sm:$0xff]
        %v3817 = vld [vmem:[%s21 + $0x58] sm:$0xff]
        %v3818 = vld [vmem:[%s21 + $0x60] sm:$0xff]
        %v3819 = vld [vmem:[%s21 + $0x68] sm:$0xff]
        %v3820 = vld [vmem:[%s21 + $0x70] sm:$0xff]
        %v3821 = vld [vmem:[%s21 + $0x78] sm:$0xff]
        %v3822 = vld [vmem:[%s21 + $0x80] sm:$0xff]
        %v3823 = vld [vmem:[%s21 + $0x88] sm:$0xff]
        %v3824 = vld [vmem:[%s21 + $0x90] sm:$0xff]
        %v3825 = vld [vmem:[%s21 + $0x98] sm:$0xff]
        %v3826 = vld [vmem:[%s21 + $0xa0] sm:$0xff]
        %v3827 = vld [vmem:[%s21 + $0xa8] sm:$0xff]
        %v3828 = vld [vmem:[%s21 + $0xb0] sm:$0xff]
        %v3829 = vld [vmem:[%s21 + $0xb8] sm:$0xff]
        %v3830 = vld [vmem:[%s21 + $0xc0] sm:$0xff]
        %v3831 = vld [vmem:[%s21 + $0xc8] sm:$0xff]
        %v3832 = vld [vmem:[%s21 + $0xd0] sm:$0xff]
        %v3833 = vld [vmem:[%s21 + $0xd8] sm:$0xff]
        %v3834 = vld [vmem:[%s21 + $0xe0] sm:$0xff]
        %v3835 = vld [vmem:[%s21 + $0xe8] sm:$0xff]
        %v3836 = vld [vmem:[%s21 + $0xf0] sm:$0xff]
        %v3837 = vld [vmem:[%s21 + $0xf8] sm:$0xff]
        %v3838 = vpack.c.bf16 %v3805, %v3804
        %v3839 = vld [vmem:[#allocation9] sm:$0xf]
        %v3841 = vperm.slane %v3839, 0
        %v3842 = vperm.slane %v3839, 1
        %v3843 = vperm.slane %v3839, 2
        %v3844 = vperm.slane %v3839, 3
        %v3881 = vunpack.c.l.b16 %v3806
        %v3882 = vunpack.c.h.b16 %v3806
        %v3883 = vunpack.c.l.b16 %v3807
        %v3884 = vunpack.c.h.b16 %v3807
        %v3885 = vunpack.c.l.b16 %v3808
        %v3886 = vunpack.c.h.b16 %v3808
        %v3887 = vunpack.c.l.b16 %v3809
        %v3888 = vunpack.c.h.b16 %v3809
        %v3889 = vunpack.c.l.b16 %v3810
        %v3890 = vunpack.c.h.b16 %v3810
        %v3891 = vunpack.c.l.b16 %v3811
        %v3892 = vunpack.c.h.b16 %v3811
        %v3893 = vunpack.c.l.b16 %v3812
        %v3894 = vunpack.c.h.b16 %v3812
        %v3895 = vunpack.c.l.b16 %v3813
        %v3896 = vunpack.c.h.b16 %v3813
        %v3897 = vunpack.c.l.b16 %v3814
        %v3898 = vunpack.c.h.b16 %v3814
        %v3899 = vunpack.c.l.b16 %v3815
        %v3900 = vunpack.c.h.b16 %v3815
        %v3901 = vunpack.c.l.b16 %v3816
        %v3902 = vunpack.c.h.b16 %v3816
        %v3903 = vunpack.c.l.b16 %v3817
        %v3904 = vunpack.c.h.b16 %v3817
        %v3905 = vunpack.c.l.b16 %v3818
        %v3906 = vunpack.c.h.b16 %v3818
        %v3907 = vunpack.c.l.b16 %v3819
        %v3908 = vunpack.c.h.b16 %v3819
        %v3909 = vunpack.c.l.b16 %v3820
        %v3910 = vunpack.c.h.b16 %v3820
        %v3911 = vunpack.c.l.b16 %v3821
        %v3912 = vunpack.c.h.b16 %v3821
        %v3913 = vunpack.c.l.b16 %v3822
        %v3914 = vunpack.c.h.b16 %v3822
        %v3915 = vunpack.c.l.b16 %v3823
        %v3916 = vunpack.c.h.b16 %v3823
        %v3917 = vunpack.c.l.b16 %v3824
        %v3918 = vunpack.c.h.b16 %v3824
        %v3919 = vunpack.c.l.b16 %v3825
        %v3920 = vunpack.c.h.b16 %v3825
        %v3921 = vunpack.c.l.b16 %v3826
        %v3922 = vunpack.c.h.b16 %v3826
        %v3923 = vunpack.c.l.b16 %v3827
        %v3924 = vunpack.c.h.b16 %v3827
        %v3925 = vunpack.c.l.b16 %v3828
        %v3926 = vunpack.c.h.b16 %v3828
        %v3927 = vunpack.c.l.b16 %v3829
        %v3928 = vunpack.c.h.b16 %v3829
        %v3929 = vunpack.c.l.b16 %v3830
        %v3930 = vunpack.c.h.b16 %v3830
        %v3931 = vunpack.c.l.b16 %v3831
        %v3932 = vunpack.c.h.b16 %v3831
        %v3933 = vunpack.c.l.b16 %v3832
        %v3934 = vunpack.c.h.b16 %v3832
        %v3935 = vunpack.c.l.b16 %v3833
        %v3936 = vunpack.c.h.b16 %v3833
        %v3937 = vunpack.c.l.b16 %v3834
        %v3938 = vunpack.c.h.b16 %v3834
        %v3939 = vunpack.c.l.b16 %v3835
        %v3940 = vunpack.c.h.b16 %v3835
        %v3941 = vunpack.c.l.b16 %v3836
        %v3942 = vunpack.c.h.b16 %v3836
        %v3943 = vunpack.c.l.b16 %v3837
        %v3944 = vunpack.c.h.b16 %v3837
        %v3945 = vpack.c.b16 %v3885, %v3881
        %v3946 = vpack.c.b16 %v3886, %v3882
        %v3947 = vpack.c.b16 %v3887, %v3883
        %v3948 = vpack.c.b16 %v3888, %v3884
        %v3949 = vpack.c.b16 %v3893, %v3889
        %v3950 = vpack.c.b16 %v3894, %v3890
        %v3951 = vpack.c.b16 %v3895, %v3891
        %v3952 = vpack.c.b16 %v3896, %v3892
        %v3953 = vpack.c.b16 %v3901, %v3897
        %v3954 = vpack.c.b16 %v3902, %v3898
        %v3955 = vpack.c.b16 %v3903, %v3899
        %v3956 = vpack.c.b16 %v3904, %v3900
        %v3957 = vpack.c.b16 %v3909, %v3905
        %v3958 = vpack.c.b16 %v3910, %v3906
        %v3959 = vpack.c.b16 %v3911, %v3907
        %v3960 = vpack.c.b16 %v3912, %v3908
        %v3961 = vpack.c.b16 %v3917, %v3913
        %v3962 = vpack.c.b16 %v3918, %v3914
        %v3963 = vpack.c.b16 %v3919, %v3915
        %v3964 = vpack.c.b16 %v3920, %v3916
        %v3965 = vpack.c.b16 %v3925, %v3921
        %v3966 = vpack.c.b16 %v3926, %v3922
        %v3967 = vpack.c.b16 %v3927, %v3923
        %v3968 = vpack.c.b16 %v3928, %v3924
        %v3969 = vpack.c.b16 %v3933, %v3929
        %v3970 = vpack.c.b16 %v3934, %v3930
        %v3971 = vpack.c.b16 %v3935, %v3931
        %v3972 = vpack.c.b16 %v3936, %v3932
        %v3973 = vpack.c.b16 %v3941, %v3937
        %v3974 = vpack.c.b16 %v3942, %v3938
        %v3975 = vpack.c.b16 %v3943, %v3939
        %v3976 = vpack.c.b16 %v3944, %v3940
        %4009 = vmatpush.bf16.msra.mxu0 %v3973
        %4010 = vmatpush.bf16.msra.mxu0 %v3969
        %4011 = vmatpush.bf16.msra.mxu0 %v3965
        %4012 = vmatpush.bf16.msra.mxu0 %v3961
        %4013 = vmatpush.bf16.msra.mxu0 %v3957
        %4014 = vmatpush.bf16.msra.mxu0 %v3953
        %4015 = vmatpush.bf16.msra.mxu0 %v3949
        %4016 = vmatpush.bf16.msra.mxu0 %v3945
        %4017 = vmatmul.bf16.gmra.mxu0 %v3838
        %v4018 = vpop.f32.mrf.mxu0
        %v4019 = vadd.f32 %v3841, %v4018
        %v4020 = vpop.f32.mrf.mxu0
        %v4021 = vadd.f32 %v3841, %v4020
        %4022 = vdwg.mxu0
        %4023 = vmatpush.bf16.msra.mxu0 %v3974
        %4024 = vmatpush.bf16.msra.mxu0 %v3970
        %4025 = vmatpush.bf16.msra.mxu0 %v3966
        %4026 = vmatpush.bf16.msra.mxu0 %v3962
        %4027 = vmatpush.bf16.msra.mxu0 %v3958
        %4028 = vmatpush.bf16.msra.mxu0 %v3954
        %4029 = vmatpush.bf16.msra.mxu0 %v3950
        %4030 = vmatpush.bf16.msra.mxu0 %v3946
        %4031 = vmatmul.bf16.gmra.mxu0 %v3838
        %v4032 = vpop.f32.mrf.mxu0
        %v4033 = vadd.f32 %v3842, %v4032
        %v4034 = vpop.f32.mrf.mxu0
        %v4035 = vadd.f32 %v3842, %v4034
        %4036 = vdwg.mxu0
        %4037 = vmatpush.bf16.msra.mxu0 %v3975
        %4038 = vmatpush.bf16.msra.mxu0 %v3971
        %4039 = vmatpush.bf16.msra.mxu0 %v3967
        %4040 = vmatpush.bf16.msra.mxu0 %v3963
        %4041 = vmatpush.bf16.msra.mxu0 %v3959
        %4042 = vmatpush.bf16.msra.mxu0 %v3955
        %4043 = vmatpush.bf16.msra.mxu0 %v3951
        %4044 = vmatpush.bf16.msra.mxu0 %v3947
        %4045 = vmatmul.bf16.gmra.mxu0 %v3838
        %v4046 = vpop.f32.mrf.mxu0
        %v4047 = vadd.f32 %v3843, %v4046
        %v4048 = vpop.f32.mrf.mxu0
        %v4049 = vadd.f32 %v3843, %v4048
        %4050 = vdwg.mxu0
        %4051 = vmatpush.bf16.msra.mxu0 %v3976
        %4052 = vmatpush.bf16.msra.mxu0 %v3972
        %4053 = vmatpush.bf16.msra.mxu0 %v3968
        %4054 = vmatpush.bf16.msra.mxu0 %v3964
        %4055 = vmatpush.bf16.msra.mxu0 %v3960
        %4056 = vmatpush.bf16.msra.mxu0 %v3956
        %4057 = vmatpush.bf16.msra.mxu0 %v3952
        %4058 = vmatpush.bf16.msra.mxu0 %v3948
        %4059 = vmatmul.bf16.gmra.mxu0 %v3838
        %v4060 = vpop.f32.mrf.mxu0
        %v4061 = vadd.f32 %v3844, %v4060
        %v4062 = vpop.f32.mrf.mxu0
        %v4063 = vadd.f32 %v3844, %v4062
        %4064 = vdwg.mxu0
        %v4065 = vsub.f32 0.0, %v4019
        %v4066 = vsub.f32 0.0, %v4033
        %v4067 = vsub.f32 0.0, %v4047
        %v4068 = vsub.f32 0.0, %v4061
        %v4069 = vsub.f32 0.0, %v4021
        %v4070 = vsub.f32 0.0, %v4035
        %v4071 = vsub.f32 0.0, %v4049
        %v4072 = vsub.f32 0.0, %v4063
        %v4073 = vmul.f32 %v4065, 1.442695
        %v4074 = vpow.pop %v4073
        %v4075 = vmul.f32 %v4066, 1.442695
        %v4076 = vpow.pop %v4075
        %v4077 = vmul.f32 %v4067, 1.442695
        %v4078 = vpow.pop %v4077
        %v4079 = vmul.f32 %v4068, 1.442695
        %v4080 = vpow.pop %v4079
        %v4081 = vmul.f32 %v4069, 1.442695
        %v4082 = vpow.pop %v4081
        %v4083 = vmul.f32 %v4070, 1.442695
        %v4084 = vpow.pop %v4083
        %v4085 = vmul.f32 %v4071, 1.442695
        %v4086 = vpow.pop %v4085
        %v4087 = vmul.f32 %v4072, 1.442695
        %v4088 = vpow.pop %v4087
        %v4089 = vadd.f32 %v4074, 1.0
        %v4090 = vadd.f32 %v4076, 1.0
        %v4091 = vadd.f32 %v4078, 1.0
        %v4092 = vadd.f32 %v4080, 1.0
        %v4093 = vadd.f32 %v4082, 1.0
        %v4094 = vadd.f32 %v4084, 1.0
        %v4095 = vadd.f32 %v4086, 1.0
        %v4096 = vadd.f32 %v4088, 1.0
        %v4097 = vrcp.pop %v4089
        %v4098 = vmul.f32 %v4089, %v4097
        %v4099 = vsub.f32 1.0, %v4098
        %v4100 = vmul.f32 %v4097, %v4099
        %v4101 = vadd.f32 %v4097, %v4100
        %vm4102 = vweird.f32 %v4089
        %vm4103 = vweird.f32 %v4097
        %vm4104 = vmor %vm4102, %vm4103
        %v4105 = vsel %vm4104, %v4097, %v4101
        %v4106 = vand.u32 2147483647, %v4089
        %vm4107 = vcmp.eq.f32.partialorder %v4106, 8.507059e+37
        %v4108 = vand.u32 %v4089, 2147483648
        %v4109 = vor.u32 1.1754944e-38, %v4108
        %v4110 = vsel %vm4107, %v4109, %v4105
        %v4111 = vmul.f32 1.0, %v4110
        %v4112 = vrcp.pop %v4090
        %v4113 = vmul.f32 %v4090, %v4112
        %v4114 = vsub.f32 1.0, %v4113
        %v4115 = vmul.f32 %v4112, %v4114
        %v4116 = vadd.f32 %v4112, %v4115
        %vm4117 = vweird.f32 %v4090
        %vm4118 = vweird.f32 %v4112
        %vm4119 = vmor %vm4117, %vm4118
        %v4120 = vsel %vm4119, %v4112, %v4116
        %v4121 = vand.u32 2147483647, %v4090
        %vm4122 = vcmp.eq.f32.partialorder %v4121, 8.507059e+37
        %v4123 = vand.u32 %v4090, 2147483648
        %v4124 = vor.u32 1.1754944e-38, %v4123
        %v4125 = vsel %vm4122, %v4124, %v4120
        %v4126 = vmul.f32 1.0, %v4125
        %v4127 = vrcp.pop %v4091
        %v4128 = vmul.f32 %v4091, %v4127
        %v4129 = vsub.f32 1.0, %v4128
        %v4130 = vmul.f32 %v4127, %v4129
        %v4131 = vadd.f32 %v4127, %v4130
        %vm4132 = vweird.f32 %v4091
        %vm4133 = vweird.f32 %v4127
        %vm4134 = vmor %vm4132, %vm4133
        %v4135 = vsel %vm4134, %v4127, %v4131
        %v4136 = vand.u32 2147483647, %v4091
        %vm4137 = vcmp.eq.f32.partialorder %v4136, 8.507059e+37
        %v4138 = vand.u32 %v4091, 2147483648
        %v4139 = vor.u32 1.1754944e-38, %v4138
        %v4140 = vsel %vm4137, %v4139, %v4135
        %v4141 = vmul.f32 1.0, %v4140
        %v4142 = vrcp.pop %v4092
        %v4143 = vmul.f32 %v4092, %v4142
        %v4144 = vsub.f32 1.0, %v4143
        %v4145 = vmul.f32 %v4142, %v4144
        %v4146 = vadd.f32 %v4142, %v4145
        %vm4147 = vweird.f32 %v4092
        %vm4148 = vweird.f32 %v4142
        %vm4149 = vmor %vm4147, %vm4148
        %v4150 = vsel %vm4149, %v4142, %v4146
        %v4151 = vand.u32 2147483647, %v4092
        %vm4152 = vcmp.eq.f32.partialorder %v4151, 8.507059e+37
        %v4153 = vand.u32 %v4092, 2147483648
        %v4154 = vor.u32 1.1754944e-38, %v4153
        %v4155 = vsel %vm4152, %v4154, %v4150
        %v4156 = vmul.f32 1.0, %v4155
        %v4157 = vrcp.pop %v4093
        %v4158 = vmul.f32 %v4093, %v4157
        %v4159 = vsub.f32 1.0, %v4158
        %v4160 = vmul.f32 %v4157, %v4159
        %v4161 = vadd.f32 %v4157, %v4160
        %vm4162 = vweird.f32 %v4093
        %vm4163 = vweird.f32 %v4157
        %vm4164 = vmor %vm4162, %vm4163
        %v4165 = vsel %vm4164, %v4157, %v4161
        %v4166 = vand.u32 2147483647, %v4093
        %vm4167 = vcmp.eq.f32.partialorder %v4166, 8.507059e+37
        %v4168 = vand.u32 %v4093, 2147483648
        %v4169 = vor.u32 1.1754944e-38, %v4168
        %v4170 = vsel %vm4167, %v4169, %v4165
        %v4171 = vmul.f32 1.0, %v4170
        %v4172 = vrcp.pop %v4094
        %v4173 = vmul.f32 %v4094, %v4172
        %v4174 = vsub.f32 1.0, %v4173
        %v4175 = vmul.f32 %v4172, %v4174
        %v4176 = vadd.f32 %v4172, %v4175
        %vm4177 = vweird.f32 %v4094
        %vm4178 = vweird.f32 %v4172
        %vm4179 = vmor %vm4177, %vm4178
        %v4180 = vsel %vm4179, %v4172, %v4176
        %v4181 = vand.u32 2147483647, %v4094
        %vm4182 = vcmp.eq.f32.partialorder %v4181, 8.507059e+37
        %v4183 = vand.u32 %v4094, 2147483648
        %v4184 = vor.u32 1.1754944e-38, %v4183
        %v4185 = vsel %vm4182, %v4184, %v4180
        %v4186 = vmul.f32 1.0, %v4185
        %v4187 = vrcp.pop %v4095
        %v4188 = vmul.f32 %v4095, %v4187
        %v4189 = vsub.f32 1.0, %v4188
        %v4190 = vmul.f32 %v4187, %v4189
        %v4191 = vadd.f32 %v4187, %v4190
        %vm4192 = vweird.f32 %v4095
        %vm4193 = vweird.f32 %v4187
        %vm4194 = vmor %vm4192, %vm4193
        %v4195 = vsel %vm4194, %v4187, %v4191
        %v4196 = vand.u32 2147483647, %v4095
        %vm4197 = vcmp.eq.f32.partialorder %v4196, 8.507059e+37
        %v4198 = vand.u32 %v4095, 2147483648
        %v4199 = vor.u32 1.1754944e-38, %v4198
        %v4200 = vsel %vm4197, %v4199, %v4195
        %v4201 = vmul.f32 1.0, %v4200
        %v4202 = vrcp.pop %v4096
        %v4203 = vmul.f32 %v4096, %v4202
        %v4204 = vsub.f32 1.0, %v4203
        %v4205 = vmul.f32 %v4202, %v4204
        %v4206 = vadd.f32 %v4202, %v4205
        %vm4207 = vweird.f32 %v4096
        %vm4208 = vweird.f32 %v4202
        %vm4209 = vmor %vm4207, %vm4208
        %v4210 = vsel %vm4209, %v4202, %v4206
        %v4211 = vand.u32 2147483647, %v4096
        %vm4212 = vcmp.eq.f32.partialorder %v4211, 8.507059e+37
        %v4213 = vand.u32 %v4096, 2147483648
        %v4214 = vor.u32 1.1754944e-38, %v4213
        %v4215 = vsel %vm4212, %v4214, %v4210
        %v4216 = vmul.f32 1.0, %v4215
        %v4217 = vmul.f32 %v4019, %v4111
        %v4218 = vmul.f32 %v4033, %v4126
        %v4219 = vmul.f32 %v4047, %v4141
        %v4220 = vmul.f32 %v4061, %v4156
        %v4221 = vmul.f32 %v4021, %v4171
        %v4222 = vmul.f32 %v4035, %v4186
        %v4223 = vmul.f32 %v4049, %v4201
        %v4224 = vmul.f32 %v4063, %v4216
        %v4225 = vld [vmem:[#allocation10] sm:$0xf]
        %v4226 = vld [vmem:[#allocation10 + $0x4] sm:$0xf]
        %v4227 = vld [vmem:[#allocation10 + $0x8] sm:$0xf]
        %v4228 = vld [vmem:[#allocation10 + $0xc] sm:$0xf]
        %v4229 = vld [vmem:[#allocation10 + $0x10] sm:$0xf]
        %v4230 = vld [vmem:[#allocation10 + $0x14] sm:$0xf]
        %v4231 = vld [vmem:[#allocation10 + $0x18] sm:$0xf]
        %v4232 = vld [vmem:[#allocation10 + $0x1c] sm:$0xf]
        %v4233 = vld [vmem:[#allocation10 + $0x20] sm:$0xf]
        %v4234 = vld [vmem:[#allocation10 + $0x24] sm:$0xf]
        %v4235 = vld [vmem:[#allocation10 + $0x28] sm:$0xf]
        %v4236 = vld [vmem:[#allocation10 + $0x2c] sm:$0xf]
        %v4237 = vld [vmem:[#allocation10 + $0x30] sm:$0xf]
        %v4238 = vld [vmem:[#allocation10 + $0x34] sm:$0xf]
        %v4239 = vld [vmem:[#allocation10 + $0x38] sm:$0xf]
        %v4240 = vld [vmem:[#allocation10 + $0x3c] sm:$0xf]
        %v4241 = vld [vmem:[#allocation10 + $0x40] sm:$0xf]
        %v4242 = vld [vmem:[#allocation10 + $0x44] sm:$0xf]
        %v4243 = vld [vmem:[#allocation10 + $0x48] sm:$0xf]
        %v4244 = vld [vmem:[#allocation10 + $0x4c] sm:$0xf]
        %v4245 = vld [vmem:[#allocation10 + $0x50] sm:$0xf]
        %v4246 = vld [vmem:[#allocation10 + $0x54] sm:$0xf]
        %v4247 = vld [vmem:[#allocation10 + $0x58] sm:$0xf]
        %v4248 = vld [vmem:[#allocation10 + $0x5c] sm:$0xf]
        %v4249 = vld [vmem:[#allocation10 + $0x60] sm:$0xf]
        %v4250 = vld [vmem:[#allocation10 + $0x64] sm:$0xf]
        %v4251 = vld [vmem:[#allocation10 + $0x68] sm:$0xf]
        %v4252 = vld [vmem:[#allocation10 + $0x6c] sm:$0xf]
        %v4253 = vld [vmem:[#allocation10 + $0x70] sm:$0xf]
        %v4254 = vld [vmem:[#allocation10 + $0x74] sm:$0xf]
        %v4255 = vld [vmem:[#allocation10 + $0x78] sm:$0xf]
        %v4256 = vld [vmem:[#allocation10 + $0x7c] sm:$0xf]
        %v4257 = vld [vmem:[#allocation10 + $0x80] sm:$0xf]
        %v4258 = vld [vmem:[#allocation10 + $0x84] sm:$0xf]
        %v4259 = vld [vmem:[#allocation10 + $0x88] sm:$0xf]
        %v4260 = vld [vmem:[#allocation10 + $0x8c] sm:$0xf]
        %v4261 = vld [vmem:[#allocation10 + $0x90] sm:$0xf]
        %v4262 = vld [vmem:[#allocation10 + $0x94] sm:$0xf]
        %v4263 = vld [vmem:[#allocation10 + $0x98] sm:$0xf]
        %v4264 = vld [vmem:[#allocation10 + $0x9c] sm:$0xf]
        %v4265 = vld [vmem:[#allocation10 + $0xa0] sm:$0xf]
        %v4266 = vld [vmem:[#allocation10 + $0xa4] sm:$0xf]
        %v4267 = vld [vmem:[#allocation10 + $0xa8] sm:$0xf]
        %v4268 = vld [vmem:[#allocation10 + $0xac] sm:$0xf]
        %v4269 = vld [vmem:[#allocation10 + $0xb0] sm:$0xf]
        %v4270 = vld [vmem:[#allocation10 + $0xb4] sm:$0xf]
        %v4271 = vld [vmem:[#allocation10 + $0xb8] sm:$0xf]
        %v4272 = vld [vmem:[#allocation10 + $0xbc] sm:$0xf]
        %v4273 = vld [vmem:[#allocation10 + $0xc0] sm:$0xf]
        %v4274 = vld [vmem:[#allocation10 + $0xc4] sm:$0xf]
        %v4275 = vld [vmem:[#allocation10 + $0xc8] sm:$0xf]
        %v4276 = vld [vmem:[#allocation10 + $0xcc] sm:$0xf]
        %v4277 = vld [vmem:[#allocation10 + $0xd0] sm:$0xf]
        %v4278 = vld [vmem:[#allocation10 + $0xd4] sm:$0xf]
        %v4279 = vld [vmem:[#allocation10 + $0xd8] sm:$0xf]
        %v4280 = vld [vmem:[#allocation10 + $0xdc] sm:$0xf]
        %v4281 = vld [vmem:[#allocation10 + $0xe0] sm:$0xf]
        %v4282 = vld [vmem:[#allocation10 + $0xe4] sm:$0xf]
        %v4283 = vld [vmem:[#allocation10 + $0xe8] sm:$0xf]
        %v4284 = vld [vmem:[#allocation10 + $0xec] sm:$0xf]
        %v4285 = vld [vmem:[#allocation10 + $0xf0] sm:$0xf]
        %v4286 = vld [vmem:[#allocation10 + $0xf4] sm:$0xf]
        %v4287 = vld [vmem:[#allocation10 + $0xf8] sm:$0xf]
        %v4288 = vld [vmem:[#allocation10 + $0xfc] sm:$0xf]
        %v4289 = vpack.c.bf16 %v4221, %v4217
        %v4290 = vpack.c.bf16 %v4222, %v4218
        %v4291 = vpack.c.bf16 %v4223, %v4219
        %v4292 = vpack.c.bf16 %v4224, %v4220
        %v4293 = vld [vmem:[#allocation12] sm:$0x1]
        %v4295 = vperm.slane %v4293, 0
        %v4361 = vunpack.c.l.b16 %v4225
        %v4362 = vunpack.c.l.b16 %v4226
        %v4363 = vunpack.c.l.b16 %v4227
        %v4364 = vunpack.c.l.b16 %v4228
        %v4365 = vunpack.c.l.b16 %v4229
        %v4366 = vunpack.c.l.b16 %v4230
        %v4367 = vunpack.c.l.b16 %v4231
        %v4368 = vunpack.c.l.b16 %v4232
        %v4369 = vunpack.c.l.b16 %v4233
        %v4370 = vunpack.c.l.b16 %v4234
        %v4371 = vunpack.c.l.b16 %v4235
        %v4372 = vunpack.c.l.b16 %v4236
        %v4373 = vunpack.c.l.b16 %v4237
        %v4374 = vunpack.c.l.b16 %v4238
        %v4375 = vunpack.c.l.b16 %v4239
        %v4376 = vunpack.c.l.b16 %v4240
        %v4377 = vunpack.c.l.b16 %v4241
        %v4378 = vunpack.c.l.b16 %v4242
        %v4379 = vunpack.c.l.b16 %v4243
        %v4380 = vunpack.c.l.b16 %v4244
        %v4381 = vunpack.c.l.b16 %v4245
        %v4382 = vunpack.c.l.b16 %v4246
        %v4383 = vunpack.c.l.b16 %v4247
        %v4384 = vunpack.c.l.b16 %v4248
        %v4385 = vunpack.c.l.b16 %v4249
        %v4386 = vunpack.c.l.b16 %v4250
        %v4387 = vunpack.c.l.b16 %v4251
        %v4388 = vunpack.c.l.b16 %v4252
        %v4389 = vunpack.c.l.b16 %v4253
        %v4390 = vunpack.c.l.b16 %v4254
        %v4391 = vunpack.c.l.b16 %v4255
        %v4392 = vunpack.c.l.b16 %v4256
        %v4393 = vunpack.c.l.b16 %v4257
        %v4394 = vunpack.c.l.b16 %v4258
        %v4395 = vunpack.c.l.b16 %v4259
        %v4396 = vunpack.c.l.b16 %v4260
        %v4397 = vunpack.c.l.b16 %v4261
        %v4398 = vunpack.c.l.b16 %v4262
        %v4399 = vunpack.c.l.b16 %v4263
        %v4400 = vunpack.c.l.b16 %v4264
        %v4401 = vunpack.c.l.b16 %v4265
        %v4402 = vunpack.c.l.b16 %v4266
        %v4403 = vunpack.c.l.b16 %v4267
        %v4404 = vunpack.c.l.b16 %v4268
        %v4405 = vunpack.c.l.b16 %v4269
        %v4406 = vunpack.c.l.b16 %v4270
        %v4407 = vunpack.c.l.b16 %v4271
        %v4408 = vunpack.c.l.b16 %v4272
        %v4409 = vunpack.c.l.b16 %v4273
        %v4410 = vunpack.c.l.b16 %v4274
        %v4411 = vunpack.c.l.b16 %v4275
        %v4412 = vunpack.c.l.b16 %v4276
        %v4413 = vunpack.c.l.b16 %v4277
        %v4414 = vunpack.c.l.b16 %v4278
        %v4415 = vunpack.c.l.b16 %v4279
        %v4416 = vunpack.c.l.b16 %v4280
        %v4417 = vunpack.c.l.b16 %v4281
        %v4418 = vunpack.c.l.b16 %v4282
        %v4419 = vunpack.c.l.b16 %v4283
        %v4420 = vunpack.c.l.b16 %v4284
        %v4421 = vunpack.c.l.b16 %v4285
        %v4422 = vunpack.c.l.b16 %v4286
        %v4423 = vunpack.c.l.b16 %v4287
        %v4424 = vunpack.c.l.b16 %v4288
        %v4425 = vpack.c.b16 %v4362, %v4361
        %v4426 = vpack.c.b16 %v4364, %v4363
        %v4427 = vpack.c.b16 %v4366, %v4365
        %v4428 = vpack.c.b16 %v4368, %v4367
        %v4429 = vpack.c.b16 %v4370, %v4369
        %v4430 = vpack.c.b16 %v4372, %v4371
        %v4431 = vpack.c.b16 %v4374, %v4373
        %v4432 = vpack.c.b16 %v4376, %v4375
        %v4433 = vpack.c.b16 %v4378, %v4377
        %v4434 = vpack.c.b16 %v4380, %v4379
        %v4435 = vpack.c.b16 %v4382, %v4381
        %v4436 = vpack.c.b16 %v4384, %v4383
        %v4437 = vpack.c.b16 %v4386, %v4385
        %v4438 = vpack.c.b16 %v4388, %v4387
        %v4439 = vpack.c.b16 %v4390, %v4389
        %v4440 = vpack.c.b16 %v4392, %v4391
        %v4441 = vpack.c.b16 %v4394, %v4393
        %v4442 = vpack.c.b16 %v4396, %v4395
        %v4443 = vpack.c.b16 %v4398, %v4397
        %v4444 = vpack.c.b16 %v4400, %v4399
        %v4445 = vpack.c.b16 %v4402, %v4401
        %v4446 = vpack.c.b16 %v4404, %v4403
        %v4447 = vpack.c.b16 %v4406, %v4405
        %v4448 = vpack.c.b16 %v4408, %v4407
        %v4449 = vpack.c.b16 %v4410, %v4409
        %v4450 = vpack.c.b16 %v4412, %v4411
        %v4451 = vpack.c.b16 %v4414, %v4413
        %v4452 = vpack.c.b16 %v4416, %v4415
        %v4453 = vpack.c.b16 %v4418, %v4417
        %v4454 = vpack.c.b16 %v4420, %v4419
        %v4455 = vpack.c.b16 %v4422, %v4421
        %v4456 = vpack.c.b16 %v4424, %v4423
        %4489 = vmatpush.bf16.msra.mxu0 %v4432
        %4490 = vmatpush.bf16.msra.mxu0 %v4431
        %4491 = vmatpush.bf16.msra.mxu0 %v4430
        %4492 = vmatpush.bf16.msra.mxu0 %v4429
        %4493 = vmatpush.bf16.msra.mxu0 %v4428
        %4494 = vmatpush.bf16.msra.mxu0 %v4427
        %4495 = vmatpush.bf16.msra.mxu0 %v4426
        %4496 = vmatpush.bf16.msra.mxu0 %v4425
        %4497 = vmatmul.bf16.gmra.mxu0 %v4289
        %v4498 = vpop.f32.mrf.mxu0
        %v4499 = vadd.f32 %v4295, %v4498
        %v4500 = vpop.f32.mrf.mxu0
        %v4501 = vadd.f32 %v4295, %v4500
        %4502 = vdwg.mxu0
        %4503 = vmatpush.bf16.msra.mxu0 %v4440
        %4504 = vmatpush.bf16.msra.mxu0 %v4439
        %4505 = vmatpush.bf16.msra.mxu0 %v4438
        %4506 = vmatpush.bf16.msra.mxu0 %v4437
        %4507 = vmatpush.bf16.msra.mxu0 %v4436
        %4508 = vmatpush.bf16.msra.mxu0 %v4435
        %4509 = vmatpush.bf16.msra.mxu0 %v4434
        %4510 = vmatpush.bf16.msra.mxu0 %v4433
        %4511 = vmatmul.bf16.gmra.mxu0 %v4290
        %v4512 = vpop.f32.mrf.mxu0
        %v4513 = vadd.f32 %v4499, %v4512
        %v4514 = vpop.f32.mrf.mxu0
        %v4515 = vadd.f32 %v4501, %v4514
        %4516 = vdwg.mxu0
        %4517 = vmatpush.bf16.msra.mxu0 %v4448
        %4518 = vmatpush.bf16.msra.mxu0 %v4447
        %4519 = vmatpush.bf16.msra.mxu0 %v4446
        %4520 = vmatpush.bf16.msra.mxu0 %v4445
        %4521 = vmatpush.bf16.msra.mxu0 %v4444
        %4522 = vmatpush.bf16.msra.mxu0 %v4443
        %4523 = vmatpush.bf16.msra.mxu0 %v4442
        %4524 = vmatpush.bf16.msra.mxu0 %v4441
        %4525 = vmatmul.bf16.gmra.mxu0 %v4291
        %v4526 = vpop.f32.mrf.mxu0
        %v4527 = vadd.f32 %v4513, %v4526
        %v4528 = vpop.f32.mrf.mxu0
        %v4529 = vadd.f32 %v4515, %v4528
        %4530 = vdwg.mxu0
        %4531 = vmatpush.bf16.msra.mxu0 %v4456
        %4532 = vmatpush.bf16.msra.mxu0 %v4455
        %4533 = vmatpush.bf16.msra.mxu0 %v4454
        %4534 = vmatpush.bf16.msra.mxu0 %v4453
        %4535 = vmatpush.bf16.msra.mxu0 %v4452
        %4536 = vmatpush.bf16.msra.mxu0 %v4451
        %4537 = vmatpush.bf16.msra.mxu0 %v4450
        %4538 = vmatpush.bf16.msra.mxu0 %v4449
        %4539 = vmatmul.bf16.gmra.mxu0 %v4292
        %v4540 = vpop.f32.mrf.mxu0
        %v4541 = vadd.f32 %v4527, %v4540
        %v4542 = vpop.f32.mrf.mxu0
        %v4543 = vadd.f32 %v4529, %v4542
        %4544 = vdwg.mxu0
        %v4545 = vmul.f32 %v4541, 0.5
        %v4546 = vmul.f32 %v4543, 0.5
        %v4547 = vadd.f32 %v3754, %v4545
        %v4548 = vadd.f32 %v3755, %v4546
        %v4549 = vld [vmem:[%s2 + $0x4] sm:$0x1]
        %v4550 = vld [vmem:[#allocation2 + $0x4] sm:$0x1]
        %4551 = vadd.xlane.f32.xlu0 %v4547
        %v4552 = vpop.xlane.xlu0 %4551
        %v4553 = vsel %vm882, %v4548, 0.0
        %4554 = vadd.xlane.f32.xlu0 %v4553
        %v4555 = vpop.xlane.xlu0 %4554
        %v4556 = vmul.f32 %v4552, %v892
        %v4557 = vmul.f32 %v4555, %v892
        %v4558 = vsub.f32 %v4547, %v4556
        %v4559 = vsub.f32 %v4548, %v4557
        %v4560 = vmul.f32 %v4558, %v4558
        %v4561 = vmul.f32 %v4559, %v4559
        %4562 = vadd.xlane.f32.xlu0 %v4560
        %v4563 = vpop.xlane.xlu0 %4562
        %v4564 = vsel %vm882, %v4561, 0.0
        %4565 = vadd.xlane.f32.xlu0 %v4564
        %v4566 = vpop.xlane.xlu0 %4565
        %v4567 = vmul.f32 %v4563, %v892
        %v4568 = vmul.f32 %v4566, %v892
        %v4569 = vadd.f32 %v4567, 1e-05
        %v4570 = vadd.f32 %v4568, 1e-05
        %v4571 = vrsqrt.pop %v4569
        %v4572 = vmul.f32 %v4571, %v4569
        %v4573 = vmul.f32 %v4572, %v4571
        %v4574 = vmul.f32 0.5, %v4573
        %v4575 = vsub.f32 1.5, %v4574
        %v4576 = vmul.f32 %v4571, %v4575
        %vm4577 = vweird.f32 %v4569
        %vm4578 = vweird.f32 %v4571
        %vm4579 = vmor %vm4577, %vm4578
        %v4580 = vsel %vm4579, %v4571, %v4576
        %v4581 = vrsqrt.pop %v4570
        %v4582 = vmul.f32 %v4581, %v4570
        %v4583 = vmul.f32 %v4582, %v4581
        %v4584 = vmul.f32 0.5, %v4583
        %v4585 = vsub.f32 1.5, %v4584
        %v4586 = vmul.f32 %v4581, %v4585
        %vm4587 = vweird.f32 %v4570
        %vm4588 = vweird.f32 %v4581
        %vm4589 = vmor %vm4587, %vm4588
        %v4590 = vsel %vm4589, %v4581, %v4586
        %v4591 = vmul.f32 %v4558, %v4580
        %v4592 = vmul.f32 %v4559, %v4590
        %v4593 = vperm.slane %v4549, 0
        %v4594 = vmul.f32 %v4591, %v4593
        %v4595 = vmul.f32 %v4592, %v4593
        %v4596 = vperm.slane %v4550, 0
        %v4597 = vadd.f32 %v4594, %v4596
        %v4598 = vadd.f32 %v4595, %v4596
        %4599 = vst [vmem:[%s874] sm:$0xff] %v4597
        %4600 = vst [vmem:[%s874 + $0x8] sm:$0x1] %v4598
        %p4601 = scmp.lt.s32.totalorder %s40, 1
        %s4602 = scalar_select %p4601, %s40, 1
        %s4603 = smul.addr %s4602, 2
        %s4604 = smul.addr %s4603, 8
        %s4605 = scalar_lea.vmem %s25, %s4604
        // Predicated region
        $region149: #{my_conformer_forward.1} parent=119 // pred_check
          %p4606 = pneg %p588
        $region150: #{my_conformer_forward.1} parent=119 // pred_check_branch
          %4608 = sbr.rel (%p4606) target = $region152
        $region151: #{my_conformer_forward.1} parent=119 // pred_region
          _
        $region152: #{my_conformer_forward.1} parent=119 // pred_fallthru
          _
      $region120: #{my_conformer_forward.1} parent=5 // pred_fallthru
        _
      %p4609 = scmp.le.s32.totalorder 2, %s35
      // Predicated region
      $region153: #{my_conformer_forward.1} parent=5 // pred_check
        %p4610 = pneg %p4609
      $region154: #{my_conformer_forward.1} parent=5 // pred_check_branch
        %4612 = sbr.rel (%p4610) target = $region156
      $region155: #{my_conformer_forward.1} parent=5 // pred_region
        %s4613 = ssub.s32 %s35, 2
        // Predicated region
        $region157: #{my_conformer_forward.1} parent=155 // pred_check
          %p4614 = pneg %p594
        $region158: #{my_conformer_forward.1} parent=155 // pred_check_branch
          %4616 = sbr.rel (%p4614) target = $region160
        $region159: #{my_conformer_forward.1} parent=155 // pred_region
          %p4617 = scmp.lt.s32.totalorder %s41, 1
          %s4618 = scalar_select %p4617, %s41, 1
          %s4619 = smul.addr %s4618, 2
          %s4620 = smul.addr %s4619, 8
          %s4621 = scalar_lea.vmem %s25, %s4620
        $region160: #{my_conformer_forward.1} parent=155 // pred_fallthru
          _
      $region156: #{my_conformer_forward.1} parent=5 // pred_fallthru
        _
    $region6: #{my_conformer_forward.1} parent=1 // loop_footer
      %s39 = sadd.s32 1, %s35
    $region7: #{my_conformer_forward.1} parent=1 // loop_footer_branch
      %34 = sbr.rel target = $region3
    $region8: #{my_conformer_forward.1} parent=1 // loop_exit
      _
    %4622 = vsyncpa [#allocation3], 1
    %s4623 = scalar_lea.sflag [#allocation3], 1
    %4624 = vsyncpa %s4623, 1
    %4625 = vsyncpa [#allocation5], 1
    %4626 = vsyncpa [#allocation8], 1
    %4627 = vsyncpa [#allocation11], 1

</llo_original>
